<compile_context>
chip_gen: v5e
topology: v5e:2x2
jax: 0.10.0
libtpu: 0.0.40
codegen_flags: <defaults>
</compile_context>

<pallas_src>
import functools
import math

import jax
import jax.numpy as jnp
from jax.experimental import pallas as pl
from jax.experimental.pallas import tpu as pltpu

EPS = 1e-6
NEG_INF = -1e9
VMEM_LIMIT = 32 * 1024 * 1024       # explicit scoped-VMEM ceiling (safe on v5e/v6e/v7x)
TILE_BUDGET = 12 * 1024 * 1024      # per-grid-step working-set budget for tile sizing


# ----------------------------- helpers -------------------------------------

def _round8_down(n):
    return max(8, (n // 8) * 8)


def _pick_row_tile(M, D, Dff, budget=TILE_BUDGET, cap=1024):
    """Largest multiple-of-8 row tile whose per-step working set fits the budget."""
    if M <= 8:
        return M                      # full-extent block is always legal
    per_row = 2 * 2 * D * 4 + Dff * 4 + 2 * (D + Dff)   # x/out dbl-buf + hidden + bf16 casts
    tm = budget // max(per_row, 1)
    tm = min(cap, M, tm)
    return _round8_down(tm)


def _pick_q_tile(T, S, D, budget=TILE_BUDGET, cap=512):
    """Query-row tile for the attention sublayer (multiple of 8, budget-driven)."""
    if T <= 8:
        return T
    fixed = 4 * S * D * 4                                 # kv block + k/v temps (f32)
    per_row = 2 * 2 * D * 4 + 2 * S * 4 + 2 * D          # x/out, scores+bias, scratch
    avail = max(budget - fixed, per_row * 8)
    tq = avail // max(per_row, 1)
    tq = min(cap, T, tq)
    return _round8_down(tq)


def _layernorm_f32(x, gamma, beta):
    """torch-style LayerNorm: a2*(x-mean)/(std+eps)+b2 with unbiased std."""
    d = x.shape[-1]
    mean = jnp.mean(x, axis=-1, keepdims=True)
    var = jnp.sum((x - mean) ** 2, axis=-1, keepdims=True) / (d - 1)
    return gamma * (x - mean) / (jnp.sqrt(var) + EPS) + beta


# ----------------------------- Pallas kernels ------------------------------

def _fused_attn_sublayer_kernel(x_ref, kv_ref, bias_ref, g_ref, be_ref,
                                wq_ref, bq_ref, wkv_ref, bkv_ref,
                                wo_ref, bo_ref, o_ref, o_scratch,
                                *, num_heads, kv_is_query, scale):
    """x + OutProj(MultiHeadAttn(LN(x), kv, kv, mask)); one (batch, q-tile) per step."""
    x = x_ref[...].astype(jnp.float32)                    # (tq, D) residual / query rows
    D = x.shape[-1]
    dk = D // num_heads

    xn = _layernorm_f32(x, g_ref[...], be_ref[...])       # (tq, D)
    if kv_is_query:
        # self-attention: K/V come from LN(x) over *all* T rows of this batch
        kvn = _layernorm_f32(kv_ref[...].astype(jnp.float32), g_ref[...], be_ref[...])
    else:
        # cross-attention: raw encoder memory (no LN), per reference
        kvn = kv_ref[...].astype(jnp.float32)

    # bf16 operands, f32 accumulation (MXU-native). Scale folded into q
    # (scaling the bias too is exact: ((xW+b)/sqrt(dk)) @ k^T == (xW+b)@k^T / sqrt(dk)).
    q = (jnp.dot(xn.astype(jnp.bfloat16), wq_ref[...],
                 preferred_element_type=jnp.float32) + bq_ref[...]) * scale
    kv = jnp.dot(kvn.astype(jnp.bfloat16), wkv_ref[...],
                 preferred_element_type=jnp.float32) + bkv_ref[...]
    q = q.astype(jnp.bfloat16)                             # (tq, D)
    k = kv[:, :D].astype(jnp.bfloat16)                     # (S, D)
    v = kv[:, D:].astype(jnp.bfloat16)                     # (S, D)

    bias = bias_ref[...]                                   # (tq, S) additive mask, f32

    for h in range(num_heads):                             # static head loop
        lo, hi = h * dk, (h + 1) * dk
        # q_h @ k_h^T via dot_general contraction (no materialized transpose)
        s = jax.lax.dot_general(q[:, lo:hi], k[:, lo:hi],
                                (((1,), (1,)), ((), ())),
                                preferred_element_type=jnp.float32)   # (tq, S)
        s = s + bias
        s = s - jnp.max(s, axis=-1, keepdims=True)
        p = jnp.exp(s)
        l = jnp.sum(p, axis=-1, keepdims=True)
        oh = jnp.dot(p.astype(jnp.bfloat16), v[:, lo:hi],
                     preferred_element_type=jnp.float32)              # (tq, dk)
        # exact reciprocal to stay close to the f32 PyTorch reference numerics
        oh = oh * pl.reciprocal(l, approx=False)
        o_scratch[:, lo:hi] = oh.astype(jnp.bfloat16)      # concat heads along lanes

    # single full-contraction output projection (K = D, MXU-friendly)
    attn = jnp.dot(o_scratch[...], wo_ref[...],
                   preferred_element_type=jnp.float32) + bo_ref[...]
    o_ref[...] = (x + attn).astype(o_ref.dtype)


def _fused_ffn_sublayer_kernel(x_ref, g_ref, be_ref, w1_ref, b1_ref,
                               w2_ref, b2_ref, o_ref):
    """x + (relu(LN(x)@W1 + b1) @ W2 + b2); one row tile per step."""
    x = x_ref[...].astype(jnp.float32)                     # (tm, D)
    xn = _layernorm_f32(x, g_ref[...], be_ref[...])
    h = jnp.dot(xn.astype(jnp.bfloat16), w1_ref[...],
                preferred_element_type=jnp.float32) + b1_ref[...]
    h = jnp.maximum(h, 0.0)
    y = x + jnp.dot(h.astype(jnp.bfloat16), w2_ref[...],
                    preferred_element_type=jnp.float32) + b2_ref[...]
    o_ref[...] = y.astype(o_ref.dtype)


def _layernorm_kernel(x_ref, g_ref, b_ref, o_ref):
    x = x_ref[...].astype(jnp.float32)
    o_ref[...] = _layernorm_f32(x, g_ref[...], b_ref[...]).astype(o_ref.dtype)


# ----------------------------- wrappers -------------------------------------

def attention_sublayer(x, kv, bias3, ln_g, ln_b, ap, num_heads, kv_is_query):
    B, T, D = x.shape
    S = kv.shape[1]
    scale = 1.0 / math.sqrt(D // num_heads)
    tq = _pick_q_tile(T, S, D)
    nq = pl.cdiv(T, tq)

    kernel = functools.partial(_fused_attn_sublayer_kernel,
                               num_heads=num_heads,
                               kv_is_query=kv_is_query,
                               scale=scale)
    row = lambda a: a.reshape(1, -1)
    const = lambda r, c: pl.BlockSpec((r, c), lambda b, qi: (0, 0))

    flops = 2 * B * (T * D * D + S * D * 2 * D + 2 * T * S * D + T * D * D)
    bytes_accessed = (2 * B * T * D * 4 + B * S * D * 4 + B * T * S * 4
                      + 4 * D * D * 2)

    return pl.pallas_call(
        kernel,
        out_shape=jax.ShapeDtypeStruct((B, T, D), x.dtype),
        grid=(B, nq),
        in_specs=[
            pl.BlockSpec((None, tq, D), lambda b, qi: (b, qi, 0)),   # x (residual / q rows)
            pl.BlockSpec((None, S, D), lambda b, qi: (b, 0, 0)),     # kv source (full rows)
            pl.BlockSpec((None, tq, S), lambda b, qi: (b, qi, 0)),   # additive mask bias
            const(1, D), const(1, D),                                # LN gamma, beta
            const(D, D), const(1, D),                                # Wq, bq
            const(D, 2 * D), const(1, 2 * D),                        # Wkv (fused), bkv
            const(D, D), const(1, D),                                # Wo, bo
        ],
        out_specs=pl.BlockSpec((None, tq, D), lambda b, qi: (b, qi, 0)),
        scratch_shapes=[pltpu.VMEM((tq, D), jnp.bfloat16)],          # head-concat scratch
        compiler_params=pltpu.CompilerParams(
            dimension_semantics=("parallel", "parallel"),
            vmem_limit_bytes=VMEM_LIMIT),
        cost_estimate=pl.CostEstimate(flops=flops,
                                      transcendentals=B * T * S,
                                      bytes_accessed=bytes_accessed),
    )(x, kv, bias3,
      row(ln_g), row(ln_b),
      ap["wq"], row(ap["bq"]),
      ap["wkv"], row(ap["bkv"]),
      ap["wo"], row(ap["bo"]))


def ffn_sublayer(x, ln_g, ln_b, fp):
    B, T, D = x.shape
    M = B * T
    Dff = fp["w1"].shape[1]
    tm = _pick_row_tile(M, D, Dff)
    flops = 4 * M * D * Dff
    bytes_accessed = 2 * M * D * 4 + 2 * D * Dff * 2
    out = pl.pallas_call(
        _fused_ffn_sublayer_kernel,
        out_shape=jax.ShapeDtypeStruct((M, D), x.dtype),
        grid=(pl.cdiv(M, tm),),
        in_specs=[pl.BlockSpec((tm, D), lambda i: (i, 0)),
                  pl.BlockSpec((1, D), lambda i: (0, 0)),
                  pl.BlockSpec((1, D), lambda i: (0, 0)),
                  pl.BlockSpec((D, Dff), lambda i: (0, 0)),
                  pl.BlockSpec((1, Dff), lambda i: (0, 0)),
                  pl.BlockSpec((Dff, D), lambda i: (0, 0)),
                  pl.BlockSpec((1, D), lambda i: (0, 0))],
        out_specs=pl.BlockSpec((tm, D), lambda i: (i, 0)),
        compiler_params=pltpu.CompilerParams(
            dimension_semantics=("parallel",),
            vmem_limit_bytes=VMEM_LIMIT),
        cost_estimate=pl.CostEstimate(flops=flops, transcendentals=0,
                                      bytes_accessed=bytes_accessed),
    )(x.reshape(M, D), ln_g.reshape(1, D), ln_b.reshape(1, D),
      fp["w1"], fp["b1"].reshape(1, Dff), fp["w2"], fp["b2"].reshape(1, D))
    return out.reshape(B, T, D)


def layernorm(x, gamma, beta):
    B, T, D = x.shape
    M = B * T
    tm = _pick_row_tile(M, D, D)
    out = pl.pallas_call(
        _layernorm_kernel,
        out_shape=jax.ShapeDtypeStruct((M, D), x.dtype),
        grid=(pl.cdiv(M, tm),),
        in_specs=[pl.BlockSpec((tm, D), lambda i: (i, 0)),
                  pl.BlockSpec((1, D), lambda i: (0, 0)),
                  pl.BlockSpec((1, D), lambda i: (0, 0))],
        out_specs=pl.BlockSpec((tm, D), lambda i: (i, 0)),
        compiler_params=pltpu.CompilerParams(
            dimension_semantics=("parallel",),
            vmem_limit_bytes=VMEM_LIMIT),
    )(x.reshape(M, D), gamma.reshape(1, D), beta.reshape(1, D))
    return out.reshape(B, T, D)


# ----------------------------- decoder forward ------------------------------

def _mask_to_bias(mask, B, T, S):
    """(B, 1, T|1, S) {0,1} or bool -> additive (B, T, S) f32 bias (0 / -1e9)."""
    m = mask.reshape(mask.shape[0], mask.shape[-2], mask.shape[-1])
    m = jnp.broadcast_to(m, (B, T, S))
    return jnp.where(m == 0, jnp.float32(NEG_INF), jnp.float32(0.0))


def decoder_layer(p, x, memory, src_bias, tgt_bias, num_heads):
    # sublayer 1: masked self-attention (pre-norm residual, dropout == identity)
    x = attention_sublayer(x, x, tgt_bias, p["ln1_g"], p["ln1_b"],
                           p["self_attn"], num_heads, kv_is_query=True)
    # sublayer 2: cross-attention over (raw) encoder memory
    x = attention_sublayer(x, memory, src_bias, p["ln2_g"], p["ln2_b"],
                           p["src_attn"], num_heads, kv_is_query=False)
    # sublayer 3: position-wise feed-forward
    x = ffn_sublayer(x, p["ln3_g"], p["ln3_b"], p["ffn"])
    return x


def decoder(params, x, memory, src_mask, tgt_mask, *, num_heads):
    B, T, D = x.shape
    S = memory.shape[1]
    tgt_bias = _mask_to_bias(tgt_mask, B, T, T)
    src_bias = _mask_to_bias(src_mask, B, T, S)
    for lp in params["layers"]:
        x = decoder_layer(lp, x, memory, src_bias, tgt_bias, num_heads)
    return layernorm(x, params["norm_g"], params["norm_b"])


# --------------------------- deterministic init ----------------------------

def _init_mha(key, D):
    ks = jax.random.split(key, 4)
    std = 1.0 / math.sqrt(D)
    wq = jax.random.normal(ks[0], (D, D), jnp.float32) * std
    wk = jax.random.normal(ks[1], (D, D), jnp.float32) * std
    wv = jax.random.normal(ks[2], (D, D), jnp.float32) * std
    wo = jax.random.normal(ks[3], (D, D), jnp.float32) * std
    return {
        # matmul operands stored bf16 (MXU-native); accumulation stays f32
        "wq": wq.astype(jnp.bfloat16),
        "wkv": jnp.concatenate([wk, wv], axis=1).astype(jnp.bfloat16),  # fused K|V
        "wo": wo.astype(jnp.bfloat16),
        "bq": jnp.zeros((D,), jnp.float32),
        "bkv": jnp.zeros((2 * D,), jnp.float32),
        "bo": jnp.zeros((D,), jnp.float32),
    }


def init_params(key, N, D, Dff):
    k_self, k_src, k_ffn1, k_ffn2 = jax.random.split(key, 4)
    layer = {
        "self_attn": _init_mha(k_self, D),
        "src_attn": _init_mha(k_src, D),
        "ffn": {
            "w1": (jax.random.normal(k_ffn1, (D, Dff), jnp.float32)
                   / math.sqrt(D)).astype(jnp.bfloat16),
            "b1": jnp.zeros((Dff,), jnp.float32),
            "w2": (jax.random.normal(k_ffn2, (Dff, D), jnp.float32)
                   / math.sqrt(Dff)).astype(jnp.bfloat16),
            "b2": jnp.zeros((D,), jnp.float32),
        },
        "ln1_g": jnp.ones((D,), jnp.float32), "ln1_b": jnp.zeros((D,), jnp.float32),
        "ln2_g": jnp.ones((D,), jnp.float32), "ln2_b": jnp.zeros((D,), jnp.float32),
        "ln3_g": jnp.ones((D,), jnp.float32), "ln3_b": jnp.zeros((D,), jnp.float32),
    }
    # clones() deep-copies one layer -> all N layers start numerically identical
    # (forward-pass-equivalent to sharing the same arrays here).
    return {
        "layers": [layer for _ in range(N)],
        "norm_g": jnp.ones((D,), jnp.float32),
        "norm_b": jnp.zeros((D,), jnp.float32),
    }


# --------------------------------- main ------------------------------------

if __name__ == "__main__":
    B, T, S, D, H, Dff, N = 2, 8, 8, 32, 4, 64, 2

    key = jax.random.PRNGKey(0)
    k_x, k_mem, k_par = jax.random.split(key, 3)

    x = jax.random.normal(k_x, (B, T, D), jnp.float32)
    memory = jax.random.normal(k_mem, (B, S, D), jnp.float32)

    # tgt_mask: causal (B, 1, T, T); src_mask: all-ones (B, 1, T, S), floats {0,1}
    tgt_mask = jnp.broadcast_to(
        jnp.tril(jnp.ones((T, T), jnp.float32))[None, None], (B, 1, T, T))
    src_mask = jnp.ones((B, 1, T, S), jnp.float32)

    params = init_params(k_par, N, D, Dff)

    # num_heads is a static Python int (closed over), never a traced leaf.
    fwd = jax.jit(functools.partial(decoder, num_heads=H))
    out = fwd(params, x, memory, src_mask, tgt_mask)
    jax.block_until_ready(out)
    assert out.shape == (B, T, D)
    print("KERNEL_OK")
</pallas_src>

<mosaic_0001>
module attributes {stable_mosaic.version = 11 : i64} {
  func.func @_fused_attn_sublayer_kernel(%arg0: i32, %arg1: i32, %arg2: memref<1x8x32xf32, #tpu.memory_space<vmem>>, %arg3: memref<1x8x32xf32, #tpu.memory_space<vmem>>, %arg4: memref<1x8x8xf32, #tpu.memory_space<vmem>>, %arg5: memref<1x32xf32, #tpu.memory_space<vmem>>, %arg6: memref<1x32xf32, #tpu.memory_space<vmem>>, %arg7: memref<32x32xbf16, #tpu.memory_space<vmem>>, %arg8: memref<1x32xf32, #tpu.memory_space<vmem>>, %arg9: memref<32x64xbf16, #tpu.memory_space<vmem>>, %arg10: memref<1x64xf32, #tpu.memory_space<vmem>>, %arg11: memref<32x32xbf16, #tpu.memory_space<vmem>>, %arg12: memref<1x32xf32, #tpu.memory_space<vmem>>, %arg13: memref<1x8x32xf32, #tpu.memory_space<vmem>>, %arg14: memref<8x32xbf16, #tpu.memory_space<vmem>>) attributes {dimension_semantics = [#tpu.dimension_semantics<parallel>, #tpu.dimension_semantics<parallel>], iteration_bounds = array<i64: 2, 1>, scalar_prefetch = 0 : i64, scratch_operands = 1 : i64, tpu.core_type = #tpu.core_type<tc>, window_params = [{transform_indices = @transform_0, window_bounds = array<i64: 1, 8, 32>}, {transform_indices = @transform_1, window_bounds = array<i64: 1, 8, 32>}, {transform_indices = @transform_2, window_bounds = array<i64: 1, 8, 8>}, {pipeline_mode = #tpu.pipeline_mode<synchronous>, transform_indices = @transform_3, window_bounds = array<i64: 1, 32>}, {pipeline_mode = #tpu.pipeline_mode<synchronous>, transform_indices = @transform_4, window_bounds = array<i64: 1, 32>}, {pipeline_mode = #tpu.pipeline_mode<synchronous>, transform_indices = @transform_5, window_bounds = array<i64: 32, 32>}, {pipeline_mode = #tpu.pipeline_mode<synchronous>, transform_indices = @transform_6, window_bounds = array<i64: 1, 32>}, {pipeline_mode = #tpu.pipeline_mode<synchronous>, transform_indices = @transform_7, window_bounds = array<i64: 32, 64>}, {pipeline_mode = #tpu.pipeline_mode<synchronous>, transform_indices = @transform_8, window_bounds = array<i64: 1, 64>}, {pipeline_mode = #tpu.pipeline_mode<synchronous>, transform_indices = @transform_9, window_bounds = array<i64: 32, 32>}, {pipeline_mode = #tpu.pipeline_mode<synchronous>, transform_indices = @transform_10, window_bounds = array<i64: 1, 32>}, {transform_indices = @transform_11, window_bounds = array<i64: 1, 8, 32>}]} {
    %c0 = arith.constant 0 : index
    %c0_0 = arith.constant 0 : index
    %c0_1 = arith.constant 0 : index
    %0 = vector.load %arg2[%c0, %c0_0, %c0_1] : memref<1x8x32xf32, #tpu.memory_space<vmem>>, vector<1x8x32xf32>
    %1 = vector.shape_cast %0 : vector<1x8x32xf32> to vector<8x32xf32>
    %c0_2 = arith.constant 0 : index
    %c0_3 = arith.constant 0 : index
    %2 = vector.load %arg5[%c0_2, %c0_3] : memref<1x32xf32, #tpu.memory_space<vmem>>, vector<1x32xf32>
    %c0_4 = arith.constant 0 : index
    %c0_5 = arith.constant 0 : index
    %3 = vector.load %arg6[%c0_4, %c0_5] : memref<1x32xf32, #tpu.memory_space<vmem>>, vector<1x32xf32>
    %cst = arith.constant dense<0.000000e+00> : vector<8xf32>
    %4 = vector.multi_reduction <add>, %1, %cst [1] : vector<8x32xf32> to vector<8xf32>
    %5 = vector.shape_cast %4 : vector<8xf32> to vector<8x1xf32>
    %cst_6 = arith.constant 3.200000e+01 : f32
    %6 = vector.broadcast %cst_6 : f32 to vector<8x1xf32>
    %7 = arith.divf %5, %6 : vector<8x1xf32>
    %8 = vector.broadcast %7 : vector<8x1xf32> to vector<8x32xf32>
    %9 = arith.subf %1, %8 : vector<8x32xf32>
    %10 = arith.mulf %9, %9 : vector<8x32xf32>
    %cst_7 = arith.constant dense<0.000000e+00> : vector<8xf32>
    %11 = vector.multi_reduction <add>, %10, %cst_7 [1] : vector<8x32xf32> to vector<8xf32>
    %12 = vector.shape_cast %11 : vector<8xf32> to vector<8x1xf32>
    %cst_8 = arith.constant 3.100000e+01 : f32
    %13 = vector.broadcast %cst_8 : f32 to vector<8x1xf32>
    %14 = arith.divf %12, %13 : vector<8x1xf32>
    %15 = vector.broadcast %7 : vector<8x1xf32> to vector<8x32xf32>
    %16 = arith.subf %1, %15 : vector<8x32xf32>
    %17 = vector.broadcast %2 : vector<1x32xf32> to vector<8x32xf32>
    %18 = arith.mulf %17, %16 : vector<8x32xf32>
    %19 = math.sqrt %14 : vector<8x1xf32>
    %cst_9 = arith.constant 9.99999997E-7 : f32
    %20 = vector.broadcast %cst_9 : f32 to vector<8x1xf32>
    %21 = arith.addf %19, %20 : vector<8x1xf32>
    %22 = vector.broadcast %21 : vector<8x1xf32> to vector<8x32xf32>
    %23 = arith.divf %18, %22 : vector<8x32xf32>
    %24 = vector.broadcast %3 : vector<1x32xf32> to vector<8x32xf32>
    %25 = arith.addf %23, %24 : vector<8x32xf32>
    %c0_10 = arith.constant 0 : index
    %c0_11 = arith.constant 0 : index
    %c0_12 = arith.constant 0 : index
    %26 = vector.load %arg3[%c0_10, %c0_11, %c0_12] : memref<1x8x32xf32, #tpu.memory_space<vmem>>, vector<1x8x32xf32>
    %27 = vector.shape_cast %26 : vector<1x8x32xf32> to vector<8x32xf32>
    %28 = arith.truncf %25 : vector<8x32xf32> to vector<8x32xbf16>
    %c0_13 = arith.constant 0 : index
    %c0_14 = arith.constant 0 : index
    %29 = vector.load %arg7[%c0_13, %c0_14] : memref<32x32xbf16, #tpu.memory_space<vmem>>, vector<32x32xbf16>
    %cst_15 = arith.constant dense<0.000000e+00> : vector<8x32xf32>
    %30 = tpu.matmul %28, %29, %cst_15 {dimension_numbers = #tpu.dot_dimension_numbers<[1], [0], [0], [1], [0, 0, 1, 1], [], []>} : vector<8x32xbf16>, vector<32x32xbf16>, vector<8x32xf32> -> vector<8x32xf32>
    %c0_16 = arith.constant 0 : index
    %c0_17 = arith.constant 0 : index
    %31 = vector.load %arg8[%c0_16, %c0_17] : memref<1x32xf32, #tpu.memory_space<vmem>>, vector<1x32xf32>
    %32 = vector.broadcast %31 : vector<1x32xf32> to vector<8x32xf32>
    %33 = arith.addf %30, %32 : vector<8x32xf32>
    %cst_18 = arith.constant 0.353553385 : f32
    %34 = vector.broadcast %cst_18 : f32 to vector<8x32xf32>
    %35 = arith.mulf %33, %34 : vector<8x32xf32>
    %36 = arith.truncf %27 : vector<8x32xf32> to vector<8x32xbf16>
    %c0_19 = arith.constant 0 : index
    %c0_20 = arith.constant 0 : index
    %37 = vector.load %arg9[%c0_19, %c0_20] : memref<32x64xbf16, #tpu.memory_space<vmem>>, vector<32x64xbf16>
    %cst_21 = arith.constant dense<0.000000e+00> : vector<8x64xf32>
    %38 = tpu.matmul %36, %37, %cst_21 {dimension_numbers = #tpu.dot_dimension_numbers<[1], [0], [0], [1], [0, 0, 1, 1], [], []>} : vector<8x32xbf16>, vector<32x64xbf16>, vector<8x64xf32> -> vector<8x64xf32>
    %c0_22 = arith.constant 0 : index
    %c0_23 = arith.constant 0 : index
    %39 = vector.load %arg10[%c0_22, %c0_23] : memref<1x64xf32, #tpu.memory_space<vmem>>, vector<1x64xf32>
    %40 = vector.broadcast %39 : vector<1x64xf32> to vector<8x64xf32>
    %41 = arith.addf %38, %40 : vector<8x64xf32>
    %42 = arith.truncf %35 : vector<8x32xf32> to vector<8x32xbf16>
    %43 = vector.extract_strided_slice %41 {offsets = [0, 0], sizes = [8, 32], strides = [1, 1]} : vector<8x64xf32> to vector<8x32xf32>
    %44 = arith.truncf %43 : vector<8x32xf32> to vector<8x32xbf16>
    %45 = vector.extract_strided_slice %41 {offsets = [0, 32], sizes = [8, 32], strides = [1, 1]} : vector<8x64xf32> to vector<8x32xf32>
    %46 = arith.truncf %45 : vector<8x32xf32> to vector<8x32xbf16>
    %c0_24 = arith.constant 0 : index
    %c0_25 = arith.constant 0 : index
    %c0_26 = arith.constant 0 : index
    %47 = vector.load %arg4[%c0_24, %c0_25, %c0_26] : memref<1x8x8xf32, #tpu.memory_space<vmem>>, vector<1x8x8xf32>
    %48 = vector.shape_cast %47 : vector<1x8x8xf32> to vector<8x8xf32>
    %49 = vector.extract_strided_slice %42 {offsets = [0, 0], sizes = [8, 8], strides = [1, 1]} : vector<8x32xbf16> to vector<8x8xbf16>
    %50 = vector.extract_strided_slice %44 {offsets = [0, 0], sizes = [8, 8], strides = [1, 1]} : vector<8x32xbf16> to vector<8x8xbf16>
    %cst_27 = arith.constant dense<0.000000e+00> : vector<8x8xf32>
    %51 = tpu.matmul %49, %50, %cst_27 {dimension_numbers = #tpu.dot_dimension_numbers<[1], [1], [0], [0], [0, 0, 1, 0], [], []>} : vector<8x8xbf16>, vector<8x8xbf16>, vector<8x8xf32> -> vector<8x8xf32>
    %52 = arith.addf %51, %48 : vector<8x8xf32>
    %cst_28 = arith.constant dense<0xFF800000> : vector<8xf32>
    %53 = vector.multi_reduction <maximumf>, %52, %cst_28 [1] : vector<8x8xf32> to vector<8xf32>
    %54 = vector.shape_cast %53 : vector<8xf32> to vector<8x1xf32>
    %55 = vector.broadcast %54 : vector<8x1xf32> to vector<8x8xf32>
    %56 = arith.subf %52, %55 : vector<8x8xf32>
    %57 = math.exp %56 : vector<8x8xf32>
    %cst_29 = arith.constant dense<0.000000e+00> : vector<8xf32>
    %58 = vector.multi_reduction <add>, %57, %cst_29 [1] : vector<8x8xf32> to vector<8xf32>
    %59 = vector.shape_cast %58 : vector<8xf32> to vector<8x1xf32>
    %60 = arith.truncf %57 : vector<8x8xf32> to vector<8x8xbf16>
    %61 = vector.extract_strided_slice %46 {offsets = [0, 0], sizes = [8, 8], strides = [1, 1]} : vector<8x32xbf16> to vector<8x8xbf16>
    %cst_30 = arith.constant dense<0.000000e+00> : vector<8x8xf32>
    %62 = tpu.matmul %60, %61, %cst_30 {dimension_numbers = #tpu.dot_dimension_numbers<[1], [0], [0], [1], [0, 0, 1, 1], [], []>} : vector<8x8xbf16>, vector<8x8xbf16>, vector<8x8xf32> -> vector<8x8xf32>
    %63 = tpu.reciprocal %59 : vector<8x1xf32> -> vector<8x1xf32>
    %64 = vector.broadcast %63 : vector<8x1xf32> to vector<8x8xf32>
    %65 = arith.mulf %62, %64 : vector<8x8xf32>
    %66 = arith.truncf %65 : vector<8x8xf32> to vector<8x8xbf16>
    %c0_31 = arith.constant 0 : index
    %c0_32 = arith.constant 0 : index
    %67 = vector.load %arg14[%c0_31, %c0_32] : memref<8x32xbf16, #tpu.memory_space<vmem>>, vector<8x8xbf16>
    tpu.vector_store %arg14[%c0_31, %c0_32], %66 {strides = array<i32>} : memref<8x32xbf16, #tpu.memory_space<vmem>>, vector<8x8xbf16>,
    %68 = vector.extract_strided_slice %42 {offsets = [0, 8], sizes = [8, 8], strides = [1, 1]} : vector<8x32xbf16> to vector<8x8xbf16>
    %69 = vector.extract_strided_slice %44 {offsets = [0, 8], sizes = [8, 8], strides = [1, 1]} : vector<8x32xbf16> to vector<8x8xbf16>
    %cst_33 = arith.constant dense<0.000000e+00> : vector<8x8xf32>
    %70 = tpu.matmul %68, %69, %cst_33 {dimension_numbers = #tpu.dot_dimension_numbers<[1], [1], [0], [0], [0, 0, 1, 0], [], []>} : vector<8x8xbf16>, vector<8x8xbf16>, vector<8x8xf32> -> vector<8x8xf32>
    %71 = arith.addf %70, %48 : vector<8x8xf32>
    %cst_34 = arith.constant dense<0xFF800000> : vector<8xf32>
    %72 = vector.multi_reduction <maximumf>, %71, %cst_34 [1] : vector<8x8xf32> to vector<8xf32>
    %73 = vector.shape_cast %72 : vector<8xf32> to vector<8x1xf32>
    %74 = vector.broadcast %73 : vector<8x1xf32> to vector<8x8xf32>
    %75 = arith.subf %71, %74 : vector<8x8xf32>
    %76 = math.exp %75 : vector<8x8xf32>
    %cst_35 = arith.constant dense<0.000000e+00> : vector<8xf32>
    %77 = vector.multi_reduction <add>, %76, %cst_35 [1] : vector<8x8xf32> to vector<8xf32>
    %78 = vector.shape_cast %77 : vector<8xf32> to vector<8x1xf32>
    %79 = arith.truncf %76 : vector<8x8xf32> to vector<8x8xbf16>
    %80 = vector.extract_strided_slice %46 {offsets = [0, 8], sizes = [8, 8], strides = [1, 1]} : vector<8x32xbf16> to vector<8x8xbf16>
    %cst_36 = arith.constant dense<0.000000e+00> : vector<8x8xf32>
    %81 = tpu.matmul %79, %80, %cst_36 {dimension_numbers = #tpu.dot_dimension_numbers<[1], [0], [0], [1], [0, 0, 1, 1], [], []>} : vector<8x8xbf16>, vector<8x8xbf16>, vector<8x8xf32> -> vector<8x8xf32>
    %82 = tpu.reciprocal %78 : vector<8x1xf32> -> vector<8x1xf32>
    %83 = vector.broadcast %82 : vector<8x1xf32> to vector<8x8xf32>
    %84 = arith.mulf %81, %83 : vector<8x8xf32>
    %85 = arith.truncf %84 : vector<8x8xf32> to vector<8x8xbf16>
    %c0_37 = arith.constant 0 : index
    %c8 = arith.constant 8 : index
    %86 = vector.load %arg14[%c0_37, %c8] : memref<8x32xbf16, #tpu.memory_space<vmem>>, vector<8x8xbf16>
    tpu.vector_store %arg14[%c0_37, %c8], %85 {strides = array<i32>} : memref<8x32xbf16, #tpu.memory_space<vmem>>, vector<8x8xbf16>,
    %87 = vector.extract_strided_slice %42 {offsets = [0, 16], sizes = [8, 8], strides = [1, 1]} : vector<8x32xbf16> to vector<8x8xbf16>
    %88 = vector.extract_strided_slice %44 {offsets = [0, 16], sizes = [8, 8], strides = [1, 1]} : vector<8x32xbf16> to vector<8x8xbf16>
    %cst_38 = arith.constant dense<0.000000e+00> : vector<8x8xf32>
    %89 = tpu.matmul %87, %88, %cst_38 {dimension_numbers = #tpu.dot_dimension_numbers<[1], [1], [0], [0], [0, 0, 1, 0], [], []>} : vector<8x8xbf16>, vector<8x8xbf16>, vector<8x8xf32> -> vector<8x8xf32>
    %90 = arith.addf %89, %48 : vector<8x8xf32>
    %cst_39 = arith.constant dense<0xFF800000> : vector<8xf32>
    %91 = vector.multi_reduction <maximumf>, %90, %cst_39 [1] : vector<8x8xf32> to vector<8xf32>
    %92 = vector.shape_cast %91 : vector<8xf32> to vector<8x1xf32>
    %93 = vector.broadcast %92 : vector<8x1xf32> to vector<8x8xf32>
    %94 = arith.subf %90, %93 : vector<8x8xf32>
    %95 = math.exp %94 : vector<8x8xf32>
    %cst_40 = arith.constant dense<0.000000e+00> : vector<8xf32>
    %96 = vector.multi_reduction <add>, %95, %cst_40 [1] : vector<8x8xf32> to vector<8xf32>
    %97 = vector.shape_cast %96 : vector<8xf32> to vector<8x1xf32>
    %98 = arith.truncf %95 : vector<8x8xf32> to vector<8x8xbf16>
    %99 = vector.extract_strided_slice %46 {offsets = [0, 16], sizes = [8, 8], strides = [1, 1]} : vector<8x32xbf16> to vector<8x8xbf16>
    %cst_41 = arith.constant dense<0.000000e+00> : vector<8x8xf32>
    %100 = tpu.matmul %98, %99, %cst_41 {dimension_numbers = #tpu.dot_dimension_numbers<[1], [0], [0], [1], [0, 0, 1, 1], [], []>} : vector<8x8xbf16>, vector<8x8xbf16>, vector<8x8xf32> -> vector<8x8xf32>
    %101 = tpu.reciprocal %97 : vector<8x1xf32> -> vector<8x1xf32>
    %102 = vector.broadcast %101 : vector<8x1xf32> to vector<8x8xf32>
    %103 = arith.mulf %100, %102 : vector<8x8xf32>
    %104 = arith.truncf %103 : vector<8x8xf32> to vector<8x8xbf16>
    %c0_42 = arith.constant 0 : index
    %c16 = arith.constant 16 : index
    %105 = vector.load %arg14[%c0_42, %c16] : memref<8x32xbf16, #tpu.memory_space<vmem>>, vector<8x8xbf16>
    tpu.vector_store %arg14[%c0_42, %c16], %104 {strides = array<i32>} : memref<8x32xbf16, #tpu.memory_space<vmem>>, vector<8x8xbf16>,
    %106 = vector.extract_strided_slice %42 {offsets = [0, 24], sizes = [8, 8], strides = [1, 1]} : vector<8x32xbf16> to vector<8x8xbf16>
    %107 = vector.extract_strided_slice %44 {offsets = [0, 24], sizes = [8, 8], strides = [1, 1]} : vector<8x32xbf16> to vector<8x8xbf16>
    %cst_43 = arith.constant dense<0.000000e+00> : vector<8x8xf32>
    %108 = tpu.matmul %106, %107, %cst_43 {dimension_numbers = #tpu.dot_dimension_numbers<[1], [1], [0], [0], [0, 0, 1, 0], [], []>} : vector<8x8xbf16>, vector<8x8xbf16>, vector<8x8xf32> -> vector<8x8xf32>
    %109 = arith.addf %108, %48 : vector<8x8xf32>
    %cst_44 = arith.constant dense<0xFF800000> : vector<8xf32>
    %110 = vector.multi_reduction <maximumf>, %109, %cst_44 [1] : vector<8x8xf32> to vector<8xf32>
    %111 = vector.shape_cast %110 : vector<8xf32> to vector<8x1xf32>
    %112 = vector.broadcast %111 : vector<8x1xf32> to vector<8x8xf32>
    %113 = arith.subf %109, %112 : vector<8x8xf32>
    %114 = math.exp %113 : vector<8x8xf32>
    %cst_45 = arith.constant dense<0.000000e+00> : vector<8xf32>
    %115 = vector.multi_reduction <add>, %114, %cst_45 [1] : vector<8x8xf32> to vector<8xf32>
    %116 = vector.shape_cast %115 : vector<8xf32> to vector<8x1xf32>
    %117 = arith.truncf %114 : vector<8x8xf32> to vector<8x8xbf16>
    %118 = vector.extract_strided_slice %46 {offsets = [0, 24], sizes = [8, 8], strides = [1, 1]} : vector<8x32xbf16> to vector<8x8xbf16>
    %cst_46 = arith.constant dense<0.000000e+00> : vector<8x8xf32>
    %119 = tpu.matmul %117, %118, %cst_46 {dimension_numbers = #tpu.dot_dimension_numbers<[1], [0], [0], [1], [0, 0, 1, 1], [], []>} : vector<8x8xbf16>, vector<8x8xbf16>, vector<8x8xf32> -> vector<8x8xf32>
    %120 = tpu.reciprocal %116 : vector<8x1xf32> -> vector<8x1xf32>
    %121 = vector.broadcast %120 : vector<8x1xf32> to vector<8x8xf32>
    %122 = arith.mulf %119, %121 : vector<8x8xf32>
    %123 = arith.truncf %122 : vector<8x8xf32> to vector<8x8xbf16>
    %c0_47 = arith.constant 0 : index
    %c24 = arith.constant 24 : index
    %124 = vector.load %arg14[%c0_47, %c24] : memref<8x32xbf16, #tpu.memory_space<vmem>>, vector<8x8xbf16>
    tpu.vector_store %arg14[%c0_47, %c24], %123 {strides = array<i32>} : memref<8x32xbf16, #tpu.memory_space<vmem>>, vector<8x8xbf16>,
    %c0_48 = arith.constant 0 : index
    %c0_49 = arith.constant 0 : index
    %125 = vector.load %arg14[%c0_48, %c0_49] : memref<8x32xbf16, #tpu.memory_space<vmem>>, vector<8x32xbf16>
    %c0_50 = arith.constant 0 : index
    %c0_51 = arith.constant 0 : index
    %126 = vector.load %arg11[%c0_50, %c0_51] : memref<32x32xbf16, #tpu.memory_space<vmem>>, vector<32x32xbf16>
    %cst_52 = arith.constant dense<0.000000e+00> : vector<8x32xf32>
    %127 = tpu.matmul %125, %126, %cst_52 {dimension_numbers = #tpu.dot_dimension_numbers<[1], [0], [0], [1], [0, 0, 1, 1], [], []>} : vector<8x32xbf16>, vector<32x32xbf16>, vector<8x32xf32> -> vector<8x32xf32>
    %c0_53 = arith.constant 0 : index
    %c0_54 = arith.constant 0 : index
    %128 = vector.load %arg12[%c0_53, %c0_54] : memref<1x32xf32, #tpu.memory_space<vmem>>, vector<1x32xf32>
    %129 = vector.broadcast %128 : vector<1x32xf32> to vector<8x32xf32>
    %130 = arith.addf %127, %129 : vector<8x32xf32>
    %131 = arith.addf %1, %130 : vector<8x32xf32>
    %c0_55 = arith.constant 0 : index
    %c0_56 = arith.constant 0 : index
    %c0_57 = arith.constant 0 : index
    %132 = vector.load %arg13[%c0_55, %c0_56, %c0_57] : memref<1x8x32xf32, #tpu.memory_space<vmem>>, vector<1x8x32xf32>
    %133 = vector.shape_cast %132 : vector<1x8x32xf32> to vector<8x32xf32>
    %134 = vector.shape_cast %131 : vector<8x32xf32> to vector<1x8x32xf32>
    tpu.vector_store %arg13[%c0_55, %c0_56, %c0_57], %134 {strides = array<i32>} : memref<1x8x32xf32, #tpu.memory_space<vmem>>, vector<1x8x32xf32>,
    return
  }
  func.func @transform_0(%arg0: i32, %arg1: i32) -> (i32, i32, i32) {
    %c0_i32 = arith.constant 0 : i32
    %c0_i32_0 = arith.constant 0 : i32
    return %arg0, %arg1, %c0_i32 : i32, i32, i32
  }
  func.func @transform_1(%arg0: i32, %arg1: i32) -> (i32, i32, i32) {
    %c0_i32 = arith.constant 0 : i32
    %c0_i32_0 = arith.constant 0 : i32
    %c0_i32_1 = arith.constant 0 : i32
    return %arg0, %c0_i32, %c0_i32_0 : i32, i32, i32
  }
  func.func @transform_2(%arg0: i32, %arg1: i32) -> (i32, i32, i32) {
    %c0_i32 = arith.constant 0 : i32
    %c0_i32_0 = arith.constant 0 : i32
    return %arg0, %arg1, %c0_i32 : i32, i32, i32
  }
  func.func @transform_3(%arg0: i32, %arg1: i32) -> (i32, i32) {
    %c0_i32 = arith.constant 0 : i32
    %c0_i32_0 = arith.constant 0 : i32
    %c0_i32_1 = arith.constant 0 : i32
    return %c0_i32, %c0_i32_0 : i32, i32
  }
  func.func @transform_4(%arg0: i32, %arg1: i32) -> (i32, i32) {
    %c0_i32 = arith.constant 0 : i32
    %c0_i32_0 = arith.constant 0 : i32
    %c0_i32_1 = arith.constant 0 : i32
    return %c0_i32, %c0_i32_0 : i32, i32
  }
  func.func @transform_5(%arg0: i32, %arg1: i32) -> (i32, i32) {
    %c0_i32 = arith.constant 0 : i32
    %c0_i32_0 = arith.constant 0 : i32
    %c0_i32_1 = arith.constant 0 : i32
    return %c0_i32, %c0_i32_0 : i32, i32
  }
  func.func @transform_6(%arg0: i32, %arg1: i32) -> (i32, i32) {
    %c0_i32 = arith.constant 0 : i32
    %c0_i32_0 = arith.constant 0 : i32
    %c0_i32_1 = arith.constant 0 : i32
    return %c0_i32, %c0_i32_0 : i32, i32
  }
  func.func @transform_7(%arg0: i32, %arg1: i32) -> (i32, i32) {
    %c0_i32 = arith.constant 0 : i32
    %c0_i32_0 = arith.constant 0 : i32
    %c0_i32_1 = arith.constant 0 : i32
    return %c0_i32, %c0_i32_0 : i32, i32
  }
  func.func @transform_8(%arg0: i32, %arg1: i32) -> (i32, i32) {
    %c0_i32 = arith.constant 0 : i32
    %c0_i32_0 = arith.constant 0 : i32
    %c0_i32_1 = arith.constant 0 : i32
    return %c0_i32, %c0_i32_0 : i32, i32
  }
  func.func @transform_9(%arg0: i32, %arg1: i32) -> (i32, i32) {
    %c0_i32 = arith.constant 0 : i32
    %c0_i32_0 = arith.constant 0 : i32
    %c0_i32_1 = arith.constant 0 : i32
    return %c0_i32, %c0_i32_0 : i32, i32
  }
  func.func @transform_10(%arg0: i32, %arg1: i32) -> (i32, i32) {
    %c0_i32 = arith.constant 0 : i32
    %c0_i32_0 = arith.constant 0 : i32
    %c0_i32_1 = arith.constant 0 : i32
    return %c0_i32, %c0_i32_0 : i32, i32
  }
  func.func @transform_11(%arg0: i32, %arg1: i32) -> (i32, i32, i32) {
    %c0_i32 = arith.constant 0 : i32
    %c0_i32_0 = arith.constant 0 : i32
    return %arg0, %arg1, %c0_i32 : i32, i32, i32
  }
}

module attributes {stable_mosaic.version = 11 : i64} {
  func.func @_fused_attn_sublayer_kernel(%arg0: i32, %arg1: i32, %arg2: memref<1x8x32xf32, #tpu.memory_space<vmem>>, %arg3: memref<1x8x32xf32, #tpu.memory_space<vmem>>, %arg4: memref<1x8x8xf32, #tpu.memory_space<vmem>>, %arg5: memref<1x32xf32, #tpu.memory_space<vmem>>, %arg6: memref<1x32xf32, #tpu.memory_space<vmem>>, %arg7: memref<32x32xbf16, #tpu.memory_space<vmem>>, %arg8: memref<1x32xf32, #tpu.memory_space<vmem>>, %arg9: memref<32x64xbf16, #tpu.memory_space<vmem>>, %arg10: memref<1x64xf32, #tpu.memory_space<vmem>>, %arg11: memref<32x32xbf16, #tpu.memory_space<vmem>>, %arg12: memref<1x32xf32, #tpu.memory_space<vmem>>, %arg13: memref<1x8x32xf32, #tpu.memory_space<vmem>>, %arg14: memref<8x32xbf16, #tpu.memory_space<vmem>>) attributes {dimension_semantics = [#tpu.dimension_semantics<parallel>, #tpu.dimension_semantics<parallel>], iteration_bounds = array<i64: 2, 1>, scalar_prefetch = 0 : i64, scratch_operands = 1 : i64, tpu.core_type = #tpu.core_type<tc>, window_params = [{transform_indices = @transform_0, window_bounds = array<i64: 1, 8, 32>}, {transform_indices = @transform_1, window_bounds = array<i64: 1, 8, 32>}, {transform_indices = @transform_2, window_bounds = array<i64: 1, 8, 8>}, {pipeline_mode = #tpu.pipeline_mode<synchronous>, transform_indices = @transform_3, window_bounds = array<i64: 1, 32>}, {pipeline_mode = #tpu.pipeline_mode<synchronous>, transform_indices = @transform_4, window_bounds = array<i64: 1, 32>}, {pipeline_mode = #tpu.pipeline_mode<synchronous>, transform_indices = @transform_5, window_bounds = array<i64: 32, 32>}, {pipeline_mode = #tpu.pipeline_mode<synchronous>, transform_indices = @transform_6, window_bounds = array<i64: 1, 32>}, {pipeline_mode = #tpu.pipeline_mode<synchronous>, transform_indices = @transform_7, window_bounds = array<i64: 32, 64>}, {pipeline_mode = #tpu.pipeline_mode<synchronous>, transform_indices = @transform_8, window_bounds = array<i64: 1, 64>}, {pipeline_mode = #tpu.pipeline_mode<synchronous>, transform_indices = @transform_9, window_bounds = array<i64: 32, 32>}, {pipeline_mode = #tpu.pipeline_mode<synchronous>, transform_indices = @transform_10, window_bounds = array<i64: 1, 32>}, {transform_indices = @transform_11, window_bounds = array<i64: 1, 8, 32>}]} {
    %c0 = arith.constant 0 : index
    %c0_0 = arith.constant 0 : index
    %c0_1 = arith.constant 0 : index
    %0 = vector.load %arg2[%c0, %c0_0, %c0_1] : memref<1x8x32xf32, #tpu.memory_space<vmem>>, vector<1x8x32xf32>
    %1 = vector.shape_cast %0 : vector<1x8x32xf32> to vector<8x32xf32>
    %c0_2 = arith.constant 0 : index
    %c0_3 = arith.constant 0 : index
    %2 = vector.load %arg5[%c0_2, %c0_3] : memref<1x32xf32, #tpu.memory_space<vmem>>, vector<1x32xf32>
    %c0_4 = arith.constant 0 : index
    %c0_5 = arith.constant 0 : index
    %3 = vector.load %arg6[%c0_4, %c0_5] : memref<1x32xf32, #tpu.memory_space<vmem>>, vector<1x32xf32>
    %cst = arith.constant dense<0.000000e+00> : vector<8xf32>
    %4 = vector.multi_reduction <add>, %1, %cst [1] : vector<8x32xf32> to vector<8xf32>
    %5 = vector.shape_cast %4 : vector<8xf32> to vector<8x1xf32>
    %cst_6 = arith.constant 3.200000e+01 : f32
    %6 = vector.broadcast %cst_6 : f32 to vector<8x1xf32>
    %7 = arith.divf %5, %6 : vector<8x1xf32>
    %8 = vector.broadcast %7 : vector<8x1xf32> to vector<8x32xf32>
    %9 = arith.subf %1, %8 : vector<8x32xf32>
    %10 = arith.mulf %9, %9 : vector<8x32xf32>
    %cst_7 = arith.constant dense<0.000000e+00> : vector<8xf32>
    %11 = vector.multi_reduction <add>, %10, %cst_7 [1] : vector<8x32xf32> to vector<8xf32>
    %12 = vector.shape_cast %11 : vector<8xf32> to vector<8x1xf32>
    %cst_8 = arith.constant 3.100000e+01 : f32
    %13 = vector.broadcast %cst_8 : f32 to vector<8x1xf32>
    %14 = arith.divf %12, %13 : vector<8x1xf32>
    %15 = vector.broadcast %7 : vector<8x1xf32> to vector<8x32xf32>
    %16 = arith.subf %1, %15 : vector<8x32xf32>
    %17 = vector.broadcast %2 : vector<1x32xf32> to vector<8x32xf32>
    %18 = arith.mulf %17, %16 : vector<8x32xf32>
    %19 = math.sqrt %14 : vector<8x1xf32>
    %cst_9 = arith.constant 9.99999997E-7 : f32
    %20 = vector.broadcast %cst_9 : f32 to vector<8x1xf32>
    %21 = arith.addf %19, %20 : vector<8x1xf32>
    %22 = vector.broadcast %21 : vector<8x1xf32> to vector<8x32xf32>
    %23 = arith.divf %18, %22 : vector<8x32xf32>
    %24 = vector.broadcast %3 : vector<1x32xf32> to vector<8x32xf32>
    %25 = arith.addf %23, %24 : vector<8x32xf32>
    %c0_10 = arith.constant 0 : index
    %c0_11 = arith.constant 0 : index
    %c0_12 = arith.constant 0 : index
    %26 = vector.load %arg3[%c0_10, %c0_11, %c0_12] : memref<1x8x32xf32, #tpu.memory_space<vmem>>, vector<1x8x32xf32>
    %27 = vector.shape_cast %26 : vector<1x8x32xf32> to vector<8x32xf32>
    %c0_13 = arith.constant 0 : index
    %c0_14 = arith.constant 0 : index
    %28 = vector.load %arg5[%c0_13, %c0_14] : memref<1x32xf32, #tpu.memory_space<vmem>>, vector<1x32xf32>
    %c0_15 = arith.constant 0 : index
    %c0_16 = arith.constant 0 : index
    %29 = vector.load %arg6[%c0_15, %c0_16] : memref<1x32xf32, #tpu.memory_space<vmem>>, vector<1x32xf32>
    %cst_17 = arith.constant dense<0.000000e+00> : vector<8xf32>
    %30 = vector.multi_reduction <add>, %27, %cst_17 [1] : vector<8x32xf32> to vector<8xf32>
    %31 = vector.shape_cast %30 : vector<8xf32> to vector<8x1xf32>
    %cst_18 = arith.constant 3.200000e+01 : f32
    %32 = vector.broadcast %cst_18 : f32 to vector<8x1xf32>
    %33 = arith.divf %31, %32 : vector<8x1xf32>
    %34 = vector.broadcast %33 : vector<8x1xf32> to vector<8x32xf32>
    %35 = arith.subf %27, %34 : vector<8x32xf32>
    %36 = arith.mulf %35, %35 : vector<8x32xf32>
    %cst_19 = arith.constant dense<0.000000e+00> : vector<8xf32>
    %37 = vector.multi_reduction <add>, %36, %cst_19 [1] : vector<8x32xf32> to vector<8xf32>
    %38 = vector.shape_cast %37 : vector<8xf32> to vector<8x1xf32>
    %cst_20 = arith.constant 3.100000e+01 : f32
    %39 = vector.broadcast %cst_20 : f32 to vector<8x1xf32>
    %40 = arith.divf %38, %39 : vector<8x1xf32>
    %41 = vector.broadcast %33 : vector<8x1xf32> to vector<8x32xf32>
    %42 = arith.subf %27, %41 : vector<8x32xf32>
    %43 = vector.broadcast %28 : vector<1x32xf32> to vector<8x32xf32>
    %44 = arith.mulf %43, %42 : vector<8x32xf32>
    %45 = math.sqrt %40 : vector<8x1xf32>
    %cst_21 = arith.constant 9.99999997E-7 : f32
    %46 = vector.broadcast %cst_21 : f32 to vector<8x1xf32>
    %47 = arith.addf %45, %46 : vector<8x1xf32>
    %48 = vector.broadcast %47 : vector<8x1xf32> to vector<8x32xf32>
    %49 = arith.divf %44, %48 : vector<8x32xf32>
    %50 = vector.broadcast %29 : vector<1x32xf32> to vector<8x32xf32>
    %51 = arith.addf %49, %50 : vector<8x32xf32>
    %52 = arith.truncf %25 : vector<8x32xf32> to vector<8x32xbf16>
    %c0_22 = arith.constant 0 : index
    %c0_23 = arith.constant 0 : index
    %53 = vector.load %arg7[%c0_22, %c0_23] : memref<32x32xbf16, #tpu.memory_space<vmem>>, vector<32x32xbf16>
    %cst_24 = arith.constant dense<0.000000e+00> : vector<8x32xf32>
    %54 = tpu.matmul %52, %53, %cst_24 {dimension_numbers = #tpu.dot_dimension_numbers<[1], [0], [0], [1], [0, 0, 1, 1], [], []>} : vector<8x32xbf16>, vector<32x32xbf16>, vector<8x32xf32> -> vector<8x32xf32>
    %c0_25 = arith.constant 0 : index
    %c0_26 = arith.constant 0 : index
    %55 = vector.load %arg8[%c0_25, %c0_26] : memref<1x32xf32, #tpu.memory_space<vmem>>, vector<1x32xf32>
    %56 = vector.broadcast %55 : vector<1x32xf32> to vector<8x32xf32>
    %57 = arith.addf %54, %56 : vector<8x32xf32>
    %cst_27 = arith.constant 0.353553385 : f32
    %58 = vector.broadcast %cst_27 : f32 to vector<8x32xf32>
    %59 = arith.mulf %57, %58 : vector<8x32xf32>
    %60 = arith.truncf %51 : vector<8x32xf32> to vector<8x32xbf16>
    %c0_28 = arith.constant 0 : index
    %c0_29 = arith.constant 0 : index
    %61 = vector.load %arg9[%c0_28, %c0_29] : memref<32x64xbf16, #tpu.memory_space<vmem>>, vector<32x64xbf16>
    %cst_30 = arith.constant dense<0.000000e+00> : vector<8x64xf32>
    %62 = tpu.matmul %60, %61, %cst_30 {dimension_numbers = #tpu.dot_dimension_numbers<[1], [0], [0], [1], [0, 0, 1, 1], [], []>} : vector<8x32xbf16>, vector<32x64xbf16>, vector<8x64xf32> -> vector<8x64xf32>
    %c0_31 = arith.constant 0 : index
    %c0_32 = arith.constant 0 : index
    %63 = vector.load %arg10[%c0_31, %c0_32] : memref<1x64xf32, #tpu.memory_space<vmem>>, vector<1x64xf32>
    %64 = vector.broadcast %63 : vector<1x64xf32> to vector<8x64xf32>
    %65 = arith.addf %62, %64 : vector<8x64xf32>
    %66 = arith.truncf %59 : vector<8x32xf32> to vector<8x32xbf16>
    %67 = vector.extract_strided_slice %65 {offsets = [0, 0], sizes = [8, 32], strides = [1, 1]} : vector<8x64xf32> to vector<8x32xf32>
    %68 = arith.truncf %67 : vector<8x32xf32> to vector<8x32xbf16>
    %69 = vector.extract_strided_slice %65 {offsets = [0, 32], sizes = [8, 32], strides = [1, 1]} : vector<8x64xf32> to vector<8x32xf32>
    %70 = arith.truncf %69 : vector<8x32xf32> to vector<8x32xbf16>
    %c0_33 = arith.constant 0 : index
    %c0_34 = arith.constant 0 : index
    %c0_35 = arith.constant 0 : index
    %71 = vector.load %arg4[%c0_33, %c0_34, %c0_35] : memref<1x8x8xf32, #tpu.memory_space<vmem>>, vector<1x8x8xf32>
    %72 = vector.shape_cast %71 : vector<1x8x8xf32> to vector<8x8xf32>
    %73 = vector.extract_strided_slice %66 {offsets = [0, 0], sizes = [8, 8], strides = [1, 1]} : vector<8x32xbf16> to vector<8x8xbf16>
    %74 = vector.extract_strided_slice %68 {offsets = [0, 0], sizes = [8, 8], strides = [1, 1]} : vector<8x32xbf16> to vector<8x8xbf16>
    %cst_36 = arith.constant dense<0.000000e+00> : vector<8x8xf32>
    %75 = tpu.matmul %73, %74, %cst_36 {dimension_numbers = #tpu.dot_dimension_numbers<[1], [1], [0], [0], [0, 0, 1, 0], [], []>} : vector<8x8xbf16>, vector<8x8xbf16>, vector<8x8xf32> -> vector<8x8xf32>
    %76 = arith.addf %75, %72 : vector<8x8xf32>
    %cst_37 = arith.constant dense<0xFF800000> : vector<8xf32>
    %77 = vector.multi_reduction <maximumf>, %76, %cst_37 [1] : vector<8x8xf32> to vector<8xf32>
    %78 = vector.shape_cast %77 : vector<8xf32> to vector<8x1xf32>
    %79 = vector.broadcast %78 : vector<8x1xf32> to vector<8x8xf32>
    %80 = arith.subf %76, %79 : vector<8x8xf32>
    %81 = math.exp %80 : vector<8x8xf32>
    %cst_38 = arith.constant dense<0.000000e+00> : vector<8xf32>
    %82 = vector.multi_reduction <add>, %81, %cst_38 [1] : vector<8x8xf32> to vector<8xf32>
    %83 = vector.shape_cast %82 : vector<8xf32> to vector<8x1xf32>
    %84 = arith.truncf %81 : vector<8x8xf32> to vector<8x8xbf16>
    %85 = vector.extract_strided_slice %70 {offsets = [0, 0], sizes = [8, 8], strides = [1, 1]} : vector<8x32xbf16> to vector<8x8xbf16>
    %cst_39 = arith.constant dense<0.000000e+00> : vector<8x8xf32>
    %86 = tpu.matmul %84, %85, %cst_39 {dimension_numbers = #tpu.dot_dimension_numbers<[1], [0], [0], [1], [0, 0, 1, 1], [], []>} : vector<8x8xbf16>, vector<8x8xbf16>, vector<8x8xf32> -> vector<8x8xf32>
    %87 = tpu.reciprocal %83 : vector<8x1xf32> -> vector<8x1xf32>
    %88 = vector.broadcast %87 : vector<8x1xf32> to vector<8x8xf32>
    %89 = arith.mulf %86, %88 : vector<8x8xf32>
    %90 = arith.truncf %89 : vector<8x8xf32> to vector<8x8xbf16>
    %c0_40 = arith.constant 0 : index
    %c0_41 = arith.constant 0 : index
    %91 = vector.load %arg14[%c0_40, %c0_41] : memref<8x32xbf16, #tpu.memory_space<vmem>>, vector<8x8xbf16>
    tpu.vector_store %arg14[%c0_40, %c0_41], %90 {strides = array<i32>} : memref<8x32xbf16, #tpu.memory_space<vmem>>, vector<8x8xbf16>,
    %92 = vector.extract_strided_slice %66 {offsets = [0, 8], sizes = [8, 8], strides = [1, 1]} : vector<8x32xbf16> to vector<8x8xbf16>
    %93 = vector.extract_strided_slice %68 {offsets = [0, 8], sizes = [8, 8], strides = [1, 1]} : vector<8x32xbf16> to vector<8x8xbf16>
    %cst_42 = arith.constant dense<0.000000e+00> : vector<8x8xf32>
    %94 = tpu.matmul %92, %93, %cst_42 {dimension_numbers = #tpu.dot_dimension_numbers<[1], [1], [0], [0], [0, 0, 1, 0], [], []>} : vector<8x8xbf16>, vector<8x8xbf16>, vector<8x8xf32> -> vector<8x8xf32>
    %95 = arith.addf %94, %72 : vector<8x8xf32>
    %cst_43 = arith.constant dense<0xFF800000> : vector<8xf32>
    %96 = vector.multi_reduction <maximumf>, %95, %cst_43 [1] : vector<8x8xf32> to vector<8xf32>
    %97 = vector.shape_cast %96 : vector<8xf32> to vector<8x1xf32>
    %98 = vector.broadcast %97 : vector<8x1xf32> to vector<8x8xf32>
    %99 = arith.subf %95, %98 : vector<8x8xf32>
    %100 = math.exp %99 : vector<8x8xf32>
    %cst_44 = arith.constant dense<0.000000e+00> : vector<8xf32>
    %101 = vector.multi_reduction <add>, %100, %cst_44 [1] : vector<8x8xf32> to vector<8xf32>
    %102 = vector.shape_cast %101 : vector<8xf32> to vector<8x1xf32>
    %103 = arith.truncf %100 : vector<8x8xf32> to vector<8x8xbf16>
    %104 = vector.extract_strided_slice %70 {offsets = [0, 8], sizes = [8, 8], strides = [1, 1]} : vector<8x32xbf16> to vector<8x8xbf16>
    %cst_45 = arith.constant dense<0.000000e+00> : vector<8x8xf32>
    %105 = tpu.matmul %103, %104, %cst_45 {dimension_numbers = #tpu.dot_dimension_numbers<[1], [0], [0], [1], [0, 0, 1, 1], [], []>} : vector<8x8xbf16>, vector<8x8xbf16>, vector<8x8xf32> -> vector<8x8xf32>
    %106 = tpu.reciprocal %102 : vector<8x1xf32> -> vector<8x1xf32>
    %107 = vector.broadcast %106 : vector<8x1xf32> to vector<8x8xf32>
    %108 = arith.mulf %105, %107 : vector<8x8xf32>
    %109 = arith.truncf %108 : vector<8x8xf32> to vector<8x8xbf16>
    %c0_46 = arith.constant 0 : index
    %c8 = arith.constant 8 : index
    %110 = vector.load %arg14[%c0_46, %c8] : memref<8x32xbf16, #tpu.memory_space<vmem>>, vector<8x8xbf16>
    tpu.vector_store %arg14[%c0_46, %c8], %109 {strides = array<i32>} : memref<8x32xbf16, #tpu.memory_space<vmem>>, vector<8x8xbf16>,
    %111 = vector.extract_strided_slice %66 {offsets = [0, 16], sizes = [8, 8], strides = [1, 1]} : vector<8x32xbf16> to vector<8x8xbf16>
    %112 = vector.extract_strided_slice %68 {offsets = [0, 16], sizes = [8, 8], strides = [1, 1]} : vector<8x32xbf16> to vector<8x8xbf16>
    %cst_47 = arith.constant dense<0.000000e+00> : vector<8x8xf32>
    %113 = tpu.matmul %111, %112, %cst_47 {dimension_numbers = #tpu.dot_dimension_numbers<[1], [1], [0], [0], [0, 0, 1, 0], [], []>} : vector<8x8xbf16>, vector<8x8xbf16>, vector<8x8xf32> -> vector<8x8xf32>
    %114 = arith.addf %113, %72 : vector<8x8xf32>
    %cst_48 = arith.constant dense<0xFF800000> : vector<8xf32>
    %115 = vector.multi_reduction <maximumf>, %114, %cst_48 [1] : vector<8x8xf32> to vector<8xf32>
    %116 = vector.shape_cast %115 : vector<8xf32> to vector<8x1xf32>
    %117 = vector.broadcast %116 : vector<8x1xf32> to vector<8x8xf32>
    %118 = arith.subf %114, %117 : vector<8x8xf32>
    %119 = math.exp %118 : vector<8x8xf32>
    %cst_49 = arith.constant dense<0.000000e+00> : vector<8xf32>
    %120 = vector.multi_reduction <add>, %119, %cst_49 [1] : vector<8x8xf32> to vector<8xf32>
    %121 = vector.shape_cast %120 : vector<8xf32> to vector<8x1xf32>
    %122 = arith.truncf %119 : vector<8x8xf32> to vector<8x8xbf16>
    %123 = vector.extract_strided_slice %70 {offsets = [0, 16], sizes = [8, 8], strides = [1, 1]} : vector<8x32xbf16> to vector<8x8xbf16>
    %cst_50 = arith.constant dense<0.000000e+00> : vector<8x8xf32>
    %124 = tpu.matmul %122, %123, %cst_50 {dimension_numbers = #tpu.dot_dimension_numbers<[1], [0], [0], [1], [0, 0, 1, 1], [], []>} : vector<8x8xbf16>, vector<8x8xbf16>, vector<8x8xf32> -> vector<8x8xf32>
    %125 = tpu.reciprocal %121 : vector<8x1xf32> -> vector<8x1xf32>
    %126 = vector.broadcast %125 : vector<8x1xf32> to vector<8x8xf32>
    %127 = arith.mulf %124, %126 : vector<8x8xf32>
    %128 = arith.truncf %127 : vector<8x8xf32> to vector<8x8xbf16>
    %c0_51 = arith.constant 0 : index
    %c16 = arith.constant 16 : index
    %129 = vector.load %arg14[%c0_51, %c16] : memref<8x32xbf16, #tpu.memory_space<vmem>>, vector<8x8xbf16>
    tpu.vector_store %arg14[%c0_51, %c16], %128 {strides = array<i32>} : memref<8x32xbf16, #tpu.memory_space<vmem>>, vector<8x8xbf16>,
    %130 = vector.extract_strided_slice %66 {offsets = [0, 24], sizes = [8, 8], strides = [1, 1]} : vector<8x32xbf16> to vector<8x8xbf16>
    %131 = vector.extract_strided_slice %68 {offsets = [0, 24], sizes = [8, 8], strides = [1, 1]} : vector<8x32xbf16> to vector<8x8xbf16>
    %cst_52 = arith.constant dense<0.000000e+00> : vector<8x8xf32>
    %132 = tpu.matmul %130, %131, %cst_52 {dimension_numbers = #tpu.dot_dimension_numbers<[1], [1], [0], [0], [0, 0, 1, 0], [], []>} : vector<8x8xbf16>, vector<8x8xbf16>, vector<8x8xf32> -> vector<8x8xf32>
    %133 = arith.addf %132, %72 : vector<8x8xf32>
    %cst_53 = arith.constant dense<0xFF800000> : vector<8xf32>
    %134 = vector.multi_reduction <maximumf>, %133, %cst_53 [1] : vector<8x8xf32> to vector<8xf32>
    %135 = vector.shape_cast %134 : vector<8xf32> to vector<8x1xf32>
    %136 = vector.broadcast %135 : vector<8x1xf32> to vector<8x8xf32>
    %137 = arith.subf %133, %136 : vector<8x8xf32>
    %138 = math.exp %137 : vector<8x8xf32>
    %cst_54 = arith.constant dense<0.000000e+00> : vector<8xf32>
    %139 = vector.multi_reduction <add>, %138, %cst_54 [1] : vector<8x8xf32> to vector<8xf32>
    %140 = vector.shape_cast %139 : vector<8xf32> to vector<8x1xf32>
    %141 = arith.truncf %138 : vector<8x8xf32> to vector<8x8xbf16>
    %142 = vector.extract_strided_slice %70 {offsets = [0, 24], sizes = [8, 8], strides = [1, 1]} : vector<8x32xbf16> to vector<8x8xbf16>
    %cst_55 = arith.constant dense<0.000000e+00> : vector<8x8xf32>
    %143 = tpu.matmul %141, %142, %cst_55 {dimension_numbers = #tpu.dot_dimension_numbers<[1], [0], [0], [1], [0, 0, 1, 1], [], []>} : vector<8x8xbf16>, vector<8x8xbf16>, vector<8x8xf32> -> vector<8x8xf32>
    %144 = tpu.reciprocal %140 : vector<8x1xf32> -> vector<8x1xf32>
    %145 = vector.broadcast %144 : vector<8x1xf32> to vector<8x8xf32>
    %146 = arith.mulf %143, %145 : vector<8x8xf32>
    %147 = arith.truncf %146 : vector<8x8xf32> to vector<8x8xbf16>
    %c0_56 = arith.constant 0 : index
    %c24 = arith.constant 24 : index
    %148 = vector.load %arg14[%c0_56, %c24] : memref<8x32xbf16, #tpu.memory_space<vmem>>, vector<8x8xbf16>
    tpu.vector_store %arg14[%c0_56, %c24], %147 {strides = array<i32>} : memref<8x32xbf16, #tpu.memory_space<vmem>>, vector<8x8xbf16>,
    %c0_57 = arith.constant 0 : index
    %c0_58 = arith.constant 0 : index
    %149 = vector.load %arg14[%c0_57, %c0_58] : memref<8x32xbf16, #tpu.memory_space<vmem>>, vector<8x32xbf16>
    %c0_59 = arith.constant 0 : index
    %c0_60 = arith.constant 0 : index
    %150 = vector.load %arg11[%c0_59, %c0_60] : memref<32x32xbf16, #tpu.memory_space<vmem>>, vector<32x32xbf16>
    %cst_61 = arith.constant dense<0.000000e+00> : vector<8x32xf32>
    %151 = tpu.matmul %149, %150, %cst_61 {dimension_numbers = #tpu.dot_dimension_numbers<[1], [0], [0], [1], [0, 0, 1, 1], [], []>} : vector<8x32xbf16>, vector<32x32xbf16>, vector<8x32xf32> -> vector<8x32xf32>
    %c0_62 = arith.constant 0 : index
    %c0_63 = arith.constant 0 : index
    %152 = vector.load %arg12[%c0_62, %c0_63] : memref<1x32xf32, #tpu.memory_space<vmem>>, vector<1x32xf32>
    %153 = vector.broadcast %152 : vector<1x32xf32> to vector<8x32xf32>
    %154 = arith.addf %151, %153 : vector<8x32xf32>
    %155 = arith.addf %1, %154 : vector<8x32xf32>
    %c0_64 = arith.constant 0 : index
    %c0_65 = arith.constant 0 : index
    %c0_66 = arith.constant 0 : index
    %156 = vector.load %arg13[%c0_64, %c0_65, %c0_66] : memref<1x8x32xf32, #tpu.memory_space<vmem>>, vector<1x8x32xf32>
    %157 = vector.shape_cast %156 : vector<1x8x32xf32> to vector<8x32xf32>
    %158 = vector.shape_cast %155 : vector<8x32xf32> to vector<1x8x32xf32>
    tpu.vector_store %arg13[%c0_64, %c0_65, %c0_66], %158 {strides = array<i32>} : memref<1x8x32xf32, #tpu.memory_space<vmem>>, vector<1x8x32xf32>,
    return
  }
  func.func @transform_0(%arg0: i32, %arg1: i32) -> (i32, i32, i32) {
    %c0_i32 = arith.constant 0 : i32
    %c0_i32_0 = arith.constant 0 : i32
    return %arg0, %arg1, %c0_i32 : i32, i32, i32
  }
  func.func @transform_1(%arg0: i32, %arg1: i32) -> (i32, i32, i32) {
    %c0_i32 = arith.constant 0 : i32
    %c0_i32_0 = arith.constant 0 : i32
    %c0_i32_1 = arith.constant 0 : i32
    return %arg0, %c0_i32, %c0_i32_0 : i32, i32, i32
  }
  func.func @transform_2(%arg0: i32, %arg1: i32) -> (i32, i32, i32) {
    %c0_i32 = arith.constant 0 : i32
    %c0_i32_0 = arith.constant 0 : i32
    return %arg0, %arg1, %c0_i32 : i32, i32, i32
  }
  func.func @transform_3(%arg0: i32, %arg1: i32) -> (i32, i32) {
    %c0_i32 = arith.constant 0 : i32
    %c0_i32_0 = arith.constant 0 : i32
    %c0_i32_1 = arith.constant 0 : i32
    return %c0_i32, %c0_i32_0 : i32, i32
  }
  func.func @transform_4(%arg0: i32, %arg1: i32) -> (i32, i32) {
    %c0_i32 = arith.constant 0 : i32
    %c0_i32_0 = arith.constant 0 : i32
    %c0_i32_1 = arith.constant 0 : i32
    return %c0_i32, %c0_i32_0 : i32, i32
  }
  func.func @transform_5(%arg0: i32, %arg1: i32) -> (i32, i32) {
    %c0_i32 = arith.constant 0 : i32
    %c0_i32_0 = arith.constant 0 : i32
    %c0_i32_1 = arith.constant 0 : i32
    return %c0_i32, %c0_i32_0 : i32, i32
  }
  func.func @transform_6(%arg0: i32, %arg1: i32) -> (i32, i32) {
    %c0_i32 = arith.constant 0 : i32
    %c0_i32_0 = arith.constant 0 : i32
    %c0_i32_1 = arith.constant 0 : i32
    return %c0_i32, %c0_i32_0 : i32, i32
  }
  func.func @transform_7(%arg0: i32, %arg1: i32) -> (i32, i32) {
    %c0_i32 = arith.constant 0 : i32
    %c0_i32_0 = arith.constant 0 : i32
    %c0_i32_1 = arith.constant 0 : i32
    return %c0_i32, %c0_i32_0 : i32, i32
  }
  func.func @transform_8(%arg0: i32, %arg1: i32) -> (i32, i32) {
    %c0_i32 = arith.constant 0 : i32
    %c0_i32_0 = arith.constant 0 : i32
    %c0_i32_1 = arith.constant 0 : i32
    return %c0_i32, %c0_i32_0 : i32, i32
  }
  func.func @transform_9(%arg0: i32, %arg1: i32) -> (i32, i32) {
    %c0_i32 = arith.constant 0 : i32
    %c0_i32_0 = arith.constant 0 : i32
    %c0_i32_1 = arith.constant 0 : i32
    return %c0_i32, %c0_i32_0 : i32, i32
  }
  func.func @transform_10(%arg0: i32, %arg1: i32) -> (i32, i32) {
    %c0_i32 = arith.constant 0 : i32
    %c0_i32_0 = arith.constant 0 : i32
    %c0_i32_1 = arith.constant 0 : i32
    return %c0_i32, %c0_i32_0 : i32, i32
  }
  func.func @transform_11(%arg0: i32, %arg1: i32) -> (i32, i32, i32) {
    %c0_i32 = arith.constant 0 : i32
    %c0_i32_0 = arith.constant 0 : i32
    return %arg0, %arg1, %c0_i32 : i32, i32, i32
  }
}

module attributes {stable_mosaic.version = 11 : i64} {
  func.func @_fused_ffn_sublayer_kernel(%arg0: i32, %arg1: memref<16x32xf32, #tpu.memory_space<vmem>>, %arg2: memref<1x32xf32, #tpu.memory_space<vmem>>, %arg3: memref<1x32xf32, #tpu.memory_space<vmem>>, %arg4: memref<32x64xbf16, #tpu.memory_space<vmem>>, %arg5: memref<1x64xf32, #tpu.memory_space<vmem>>, %arg6: memref<64x32xbf16, #tpu.memory_space<vmem>>, %arg7: memref<1x32xf32, #tpu.memory_space<vmem>>, %arg8: memref<16x32xf32, #tpu.memory_space<vmem>>) attributes {dimension_semantics = [#tpu.dimension_semantics<parallel>], iteration_bounds = array<i64: 1>, scalar_prefetch = 0 : i64, scratch_operands = 0 : i64, tpu.core_type = #tpu.core_type<tc>, window_params = [{transform_indices = @transform_0, window_bounds = array<i64: 16, 32>}, {pipeline_mode = #tpu.pipeline_mode<synchronous>, transform_indices = @transform_1, window_bounds = array<i64: 1, 32>}, {pipeline_mode = #tpu.pipeline_mode<synchronous>, transform_indices = @transform_2, window_bounds = array<i64: 1, 32>}, {pipeline_mode = #tpu.pipeline_mode<synchronous>, transform_indices = @transform_3, window_bounds = array<i64: 32, 64>}, {pipeline_mode = #tpu.pipeline_mode<synchronous>, transform_indices = @transform_4, window_bounds = array<i64: 1, 64>}, {pipeline_mode = #tpu.pipeline_mode<synchronous>, transform_indices = @transform_5, window_bounds = array<i64: 64, 32>}, {pipeline_mode = #tpu.pipeline_mode<synchronous>, transform_indices = @transform_6, window_bounds = array<i64: 1, 32>}, {transform_indices = @transform_7, window_bounds = array<i64: 16, 32>}]} {
    %c0 = arith.constant 0 : index
    %c0_0 = arith.constant 0 : index
    %0 = vector.load %arg1[%c0, %c0_0] : memref<16x32xf32, #tpu.memory_space<vmem>>, vector<16x32xf32>
    %c0_1 = arith.constant 0 : index
    %c0_2 = arith.constant 0 : index
    %1 = vector.load %arg2[%c0_1, %c0_2] : memref<1x32xf32, #tpu.memory_space<vmem>>, vector<1x32xf32>
    %c0_3 = arith.constant 0 : index
    %c0_4 = arith.constant 0 : index
    %2 = vector.load %arg3[%c0_3, %c0_4] : memref<1x32xf32, #tpu.memory_space<vmem>>, vector<1x32xf32>
    %cst = arith.constant dense<0.000000e+00> : vector<16xf32>
    %3 = vector.multi_reduction <add>, %0, %cst [1] : vector<16x32xf32> to vector<16xf32>
    %4 = vector.shape_cast %3 : vector<16xf32> to vector<16x1xf32>
    %cst_5 = arith.constant 3.200000e+01 : f32
    %5 = vector.broadcast %cst_5 : f32 to vector<16x1xf32>
    %6 = arith.divf %4, %5 : vector<16x1xf32>
    %7 = vector.broadcast %6 : vector<16x1xf32> to vector<16x32xf32>
    %8 = arith.subf %0, %7 : vector<16x32xf32>
    %9 = arith.mulf %8, %8 : vector<16x32xf32>
    %cst_6 = arith.constant dense<0.000000e+00> : vector<16xf32>
    %10 = vector.multi_reduction <add>, %9, %cst_6 [1] : vector<16x32xf32> to vector<16xf32>
    %11 = vector.shape_cast %10 : vector<16xf32> to vector<16x1xf32>
    %cst_7 = arith.constant 3.100000e+01 : f32
    %12 = vector.broadcast %cst_7 : f32 to vector<16x1xf32>
    %13 = arith.divf %11, %12 : vector<16x1xf32>
    %14 = vector.broadcast %6 : vector<16x1xf32> to vector<16x32xf32>
    %15 = arith.subf %0, %14 : vector<16x32xf32>
    %16 = vector.broadcast %1 : vector<1x32xf32> to vector<16x32xf32>
    %17 = arith.mulf %16, %15 : vector<16x32xf32>
    %18 = math.sqrt %13 : vector<16x1xf32>
    %cst_8 = arith.constant 9.99999997E-7 : f32
    %19 = vector.broadcast %cst_8 : f32 to vector<16x1xf32>
    %20 = arith.addf %18, %19 : vector<16x1xf32>
    %21 = vector.broadcast %20 : vector<16x1xf32> to vector<16x32xf32>
    %22 = arith.divf %17, %21 : vector<16x32xf32>
    %23 = vector.broadcast %2 : vector<1x32xf32> to vector<16x32xf32>
    %24 = arith.addf %22, %23 : vector<16x32xf32>
    %25 = arith.truncf %24 : vector<16x32xf32> to vector<16x32xbf16>
    %c0_9 = arith.constant 0 : index
    %c0_10 = arith.constant 0 : index
    %26 = vector.load %arg4[%c0_9, %c0_10] : memref<32x64xbf16, #tpu.memory_space<vmem>>, vector<32x64xbf16>
    %cst_11 = arith.constant dense<0.000000e+00> : vector<16x64xf32>
    %27 = tpu.matmul %25, %26, %cst_11 {dimension_numbers = #tpu.dot_dimension_numbers<[1], [0], [0], [1], [0, 0, 1, 1], [], []>} : vector<16x32xbf16>, vector<32x64xbf16>, vector<16x64xf32> -> vector<16x64xf32>
    %c0_12 = arith.constant 0 : index
    %c0_13 = arith.constant 0 : index
    %28 = vector.load %arg5[%c0_12, %c0_13] : memref<1x64xf32, #tpu.memory_space<vmem>>, vector<1x64xf32>
    %29 = vector.broadcast %28 : vector<1x64xf32> to vector<16x64xf32>
    %30 = arith.addf %27, %29 : vector<16x64xf32>
    %cst_14 = arith.constant 0.000000e+00 : f32
    %31 = vector.broadcast %cst_14 : f32 to vector<16x64xf32>
    %32 = arith.maximumf %30, %31 : vector<16x64xf32>
    %33 = arith.truncf %32 : vector<16x64xf32> to vector<16x64xbf16>
    %c0_15 = arith.constant 0 : index
    %c0_16 = arith.constant 0 : index
    %34 = vector.load %arg6[%c0_15, %c0_16] : memref<64x32xbf16, #tpu.memory_space<vmem>>, vector<64x32xbf16>
    %cst_17 = arith.constant dense<0.000000e+00> : vector<16x32xf32>
    %35 = tpu.matmul %33, %34, %cst_17 {dimension_numbers = #tpu.dot_dimension_numbers<[1], [0], [0], [1], [0, 0, 1, 1], [], []>} : vector<16x64xbf16>, vector<64x32xbf16>, vector<16x32xf32> -> vector<16x32xf32>
    %36 = arith.addf %0, %35 : vector<16x32xf32>
    %c0_18 = arith.constant 0 : index
    %c0_19 = arith.constant 0 : index
    %37 = vector.load %arg7[%c0_18, %c0_19] : memref<1x32xf32, #tpu.memory_space<vmem>>, vector<1x32xf32>
    %38 = vector.broadcast %37 : vector<1x32xf32> to vector<16x32xf32>
    %39 = arith.addf %36, %38 : vector<16x32xf32>
    %c0_20 = arith.constant 0 : index
    %c0_21 = arith.constant 0 : index
    %40 = vector.load %arg8[%c0_20, %c0_21] : memref<16x32xf32, #tpu.memory_space<vmem>>, vector<16x32xf32>
    tpu.vector_store %arg8[%c0_20, %c0_21], %39 {strides = array<i32>} : memref<16x32xf32, #tpu.memory_space<vmem>>, vector<16x32xf32>,
    return
  }
  func.func @transform_0(%arg0: i32) -> (i32, i32) {
    %c0_i32 = arith.constant 0 : i32
    %c0_i32_0 = arith.constant 0 : i32
    return %arg0, %c0_i32 : i32, i32
  }
  func.func @transform_1(%arg0: i32) -> (i32, i32) {
    %c0_i32 = arith.constant 0 : i32
    %c0_i32_0 = arith.constant 0 : i32
    %c0_i32_1 = arith.constant 0 : i32
    return %c0_i32, %c0_i32_0 : i32, i32
  }
  func.func @transform_2(%arg0: i32) -> (i32, i32) {
    %c0_i32 = arith.constant 0 : i32
    %c0_i32_0 = arith.constant 0 : i32
    %c0_i32_1 = arith.constant 0 : i32
    return %c0_i32, %c0_i32_0 : i32, i32
  }
  func.func @transform_3(%arg0: i32) -> (i32, i32) {
    %c0_i32 = arith.constant 0 : i32
    %c0_i32_0 = arith.constant 0 : i32
    %c0_i32_1 = arith.constant 0 : i32
    return %c0_i32, %c0_i32_0 : i32, i32
  }
  func.func @transform_4(%arg0: i32) -> (i32, i32) {
    %c0_i32 = arith.constant 0 : i32
    %c0_i32_0 = arith.constant 0 : i32
    %c0_i32_1 = arith.constant 0 : i32
    return %c0_i32, %c0_i32_0 : i32, i32
  }
  func.func @transform_5(%arg0: i32) -> (i32, i32) {
    %c0_i32 = arith.constant 0 : i32
    %c0_i32_0 = arith.constant 0 : i32
    %c0_i32_1 = arith.constant 0 : i32
    return %c0_i32, %c0_i32_0 : i32, i32
  }
  func.func @transform_6(%arg0: i32) -> (i32, i32) {
    %c0_i32 = arith.constant 0 : i32
    %c0_i32_0 = arith.constant 0 : i32
    %c0_i32_1 = arith.constant 0 : i32
    return %c0_i32, %c0_i32_0 : i32, i32
  }
  func.func @transform_7(%arg0: i32) -> (i32, i32) {
    %c0_i32 = arith.constant 0 : i32
    %c0_i32_0 = arith.constant 0 : i32
    return %arg0, %c0_i32 : i32, i32
  }
}

module attributes {stable_mosaic.version = 11 : i64} {
  func.func @_fused_attn_sublayer_kernel(%arg0: i32, %arg1: i32, %arg2: memref<1x8x32xf32, #tpu.memory_space<vmem>>, %arg3: memref<1x8x32xf32, #tpu.memory_space<vmem>>, %arg4: memref<1x8x8xf32, #tpu.memory_space<vmem>>, %arg5: memref<1x32xf32, #tpu.memory_space<vmem>>, %arg6: memref<1x32xf32, #tpu.memory_space<vmem>>, %arg7: memref<32x32xbf16, #tpu.memory_space<vmem>>, %arg8: memref<1x32xf32, #tpu.memory_space<vmem>>, %arg9: memref<32x64xbf16, #tpu.memory_space<vmem>>, %arg10: memref<1x64xf32, #tpu.memory_space<vmem>>, %arg11: memref<32x32xbf16, #tpu.memory_space<vmem>>, %arg12: memref<1x32xf32, #tpu.memory_space<vmem>>, %arg13: memref<1x8x32xf32, #tpu.memory_space<vmem>>, %arg14: memref<8x32xbf16, #tpu.memory_space<vmem>>) attributes {dimension_semantics = [#tpu.dimension_semantics<parallel>, #tpu.dimension_semantics<parallel>], iteration_bounds = array<i64: 2, 1>, scalar_prefetch = 0 : i64, scratch_operands = 1 : i64, tpu.core_type = #tpu.core_type<tc>, window_params = [{transform_indices = @transform_0, window_bounds = array<i64: 1, 8, 32>}, {transform_indices = @transform_1, window_bounds = array<i64: 1, 8, 32>}, {transform_indices = @transform_2, window_bounds = array<i64: 1, 8, 8>}, {pipeline_mode = #tpu.pipeline_mode<synchronous>, transform_indices = @transform_3, window_bounds = array<i64: 1, 32>}, {pipeline_mode = #tpu.pipeline_mode<synchronous>, transform_indices = @transform_4, window_bounds = array<i64: 1, 32>}, {pipeline_mode = #tpu.pipeline_mode<synchronous>, transform_indices = @transform_5, window_bounds = array<i64: 32, 32>}, {pipeline_mode = #tpu.pipeline_mode<synchronous>, transform_indices = @transform_6, window_bounds = array<i64: 1, 32>}, {pipeline_mode = #tpu.pipeline_mode<synchronous>, transform_indices = @transform_7, window_bounds = array<i64: 32, 64>}, {pipeline_mode = #tpu.pipeline_mode<synchronous>, transform_indices = @transform_8, window_bounds = array<i64: 1, 64>}, {pipeline_mode = #tpu.pipeline_mode<synchronous>, transform_indices = @transform_9, window_bounds = array<i64: 32, 32>}, {pipeline_mode = #tpu.pipeline_mode<synchronous>, transform_indices = @transform_10, window_bounds = array<i64: 1, 32>}, {transform_indices = @transform_11, window_bounds = array<i64: 1, 8, 32>}]} {
    %c0 = arith.constant 0 : index
    %c0_0 = arith.constant 0 : index
    %c0_1 = arith.constant 0 : index
    %0 = vector.load %arg2[%c0, %c0_0, %c0_1] : memref<1x8x32xf32, #tpu.memory_space<vmem>>, vector<1x8x32xf32>
    %1 = vector.shape_cast %0 : vector<1x8x32xf32> to vector<8x32xf32>
    %c0_2 = arith.constant 0 : index
    %c0_3 = arith.constant 0 : index
    %2 = vector.load %arg5[%c0_2, %c0_3] : memref<1x32xf32, #tpu.memory_space<vmem>>, vector<1x32xf32>
    %c0_4 = arith.constant 0 : index
    %c0_5 = arith.constant 0 : index
    %3 = vector.load %arg6[%c0_4, %c0_5] : memref<1x32xf32, #tpu.memory_space<vmem>>, vector<1x32xf32>
    %cst = arith.constant dense<0.000000e+00> : vector<8xf32>
    %4 = vector.multi_reduction <add>, %1, %cst [1] : vector<8x32xf32> to vector<8xf32>
    %5 = vector.shape_cast %4 : vector<8xf32> to vector<8x1xf32>
    %cst_6 = arith.constant 3.200000e+01 : f32
    %6 = vector.broadcast %cst_6 : f32 to vector<8x1xf32>
    %7 = arith.divf %5, %6 : vector<8x1xf32>
    %8 = vector.broadcast %7 : vector<8x1xf32> to vector<8x32xf32>
    %9 = arith.subf %1, %8 : vector<8x32xf32>
    %10 = arith.mulf %9, %9 : vector<8x32xf32>
    %cst_7 = arith.constant dense<0.000000e+00> : vector<8xf32>
    %11 = vector.multi_reduction <add>, %10, %cst_7 [1] : vector<8x32xf32> to vector<8xf32>
    %12 = vector.shape_cast %11 : vector<8xf32> to vector<8x1xf32>
    %cst_8 = arith.constant 3.100000e+01 : f32
    %13 = vector.broadcast %cst_8 : f32 to vector<8x1xf32>
    %14 = arith.divf %12, %13 : vector<8x1xf32>
    %15 = vector.broadcast %7 : vector<8x1xf32> to vector<8x32xf32>
    %16 = arith.subf %1, %15 : vector<8x32xf32>
    %17 = vector.broadcast %2 : vector<1x32xf32> to vector<8x32xf32>
    %18 = arith.mulf %17, %16 : vector<8x32xf32>
    %19 = math.sqrt %14 : vector<8x1xf32>
    %cst_9 = arith.constant 9.99999997E-7 : f32
    %20 = vector.broadcast %cst_9 : f32 to vector<8x1xf32>
    %21 = arith.addf %19, %20 : vector<8x1xf32>
    %22 = vector.broadcast %21 : vector<8x1xf32> to vector<8x32xf32>
    %23 = arith.divf %18, %22 : vector<8x32xf32>
    %24 = vector.broadcast %3 : vector<1x32xf32> to vector<8x32xf32>
    %25 = arith.addf %23, %24 : vector<8x32xf32>
    %c0_10 = arith.constant 0 : index
    %c0_11 = arith.constant 0 : index
    %c0_12 = arith.constant 0 : index
    %26 = vector.load %arg3[%c0_10, %c0_11, %c0_12] : memref<1x8x32xf32, #tpu.memory_space<vmem>>, vector<1x8x32xf32>
    %27 = vector.shape_cast %26 : vector<1x8x32xf32> to vector<8x32xf32>
    %c0_13 = arith.constant 0 : index
    %c0_14 = arith.constant 0 : index
    %28 = vector.load %arg5[%c0_13, %c0_14] : memref<1x32xf32, #tpu.memory_space<vmem>>, vector<1x32xf32>
    %c0_15 = arith.constant 0 : index
    %c0_16 = arith.constant 0 : index
    %29 = vector.load %arg6[%c0_15, %c0_16] : memref<1x32xf32, #tpu.memory_space<vmem>>, vector<1x32xf32>
    %cst_17 = arith.constant dense<0.000000e+00> : vector<8xf32>
    %30 = vector.multi_reduction <add>, %27, %cst_17 [1] : vector<8x32xf32> to vector<8xf32>
    %31 = vector.shape_cast %30 : vector<8xf32> to vector<8x1xf32>
    %cst_18 = arith.constant 3.200000e+01 : f32
    %32 = vector.broadcast %cst_18 : f32 to vector<8x1xf32>
    %33 = arith.divf %31, %32 : vector<8x1xf32>
    %34 = vector.broadcast %33 : vector<8x1xf32> to vector<8x32xf32>
    %35 = arith.subf %27, %34 : vector<8x32xf32>
    %36 = arith.mulf %35, %35 : vector<8x32xf32>
    %cst_19 = arith.constant dense<0.000000e+00> : vector<8xf32>
    %37 = vector.multi_reduction <add>, %36, %cst_19 [1] : vector<8x32xf32> to vector<8xf32>
    %38 = vector.shape_cast %37 : vector<8xf32> to vector<8x1xf32>
    %cst_20 = arith.constant 3.100000e+01 : f32
    %39 = vector.broadcast %cst_20 : f32 to vector<8x1xf32>
    %40 = arith.divf %38, %39 : vector<8x1xf32>
    %41 = vector.broadcast %33 : vector<8x1xf32> to vector<8x32xf32>
    %42 = arith.subf %27, %41 : vector<8x32xf32>
    %43 = vector.broadcast %28 : vector<1x32xf32> to vector<8x32xf32>
    %44 = arith.mulf %43, %42 : vector<8x32xf32>
    %45 = math.sqrt %40 : vector<8x1xf32>
    %cst_21 = arith.constant 9.99999997E-7 : f32
    %46 = vector.broadcast %cst_21 : f32 to vector<8x1xf32>
    %47 = arith.addf %45, %46 : vector<8x1xf32>
    %48 = vector.broadcast %47 : vector<8x1xf32> to vector<8x32xf32>
    %49 = arith.divf %44, %48 : vector<8x32xf32>
    %50 = vector.broadcast %29 : vector<1x32xf32> to vector<8x32xf32>
    %51 = arith.addf %49, %50 : vector<8x32xf32>
    %52 = arith.truncf %25 : vector<8x32xf32> to vector<8x32xbf16>
    %c0_22 = arith.constant 0 : index
    %c0_23 = arith.constant 0 : index
    %53 = vector.load %arg7[%c0_22, %c0_23] : memref<32x32xbf16, #tpu.memory_space<vmem>>, vector<32x32xbf16>
    %cst_24 = arith.constant dense<0.000000e+00> : vector<8x32xf32>
    %54 = tpu.matmul %52, %53, %cst_24 {dimension_numbers = #tpu.dot_dimension_numbers<[1], [0], [0], [1], [0, 0, 1, 1], [], []>} : vector<8x32xbf16>, vector<32x32xbf16>, vector<8x32xf32> -> vector<8x32xf32>
    %c0_25 = arith.constant 0 : index
    %c0_26 = arith.constant 0 : index
    %55 = vector.load %arg8[%c0_25, %c0_26] : memref<1x32xf32, #tpu.memory_space<vmem>>, vector<1x32xf32>
    %56 = vector.broadcast %55 : vector<1x32xf32> to vector<8x32xf32>
    %57 = arith.addf %54, %56 : vector<8x32xf32>
    %cst_27 = arith.constant 0.353553385 : f32
    %58 = vector.broadcast %cst_27 : f32 to vector<8x32xf32>
    %59 = arith.mulf %57, %58 : vector<8x32xf32>
    %60 = arith.truncf %51 : vector<8x32xf32> to vector<8x32xbf16>
    %c0_28 = arith.constant 0 : index
    %c0_29 = arith.constant 0 : index
    %61 = vector.load %arg9[%c0_28, %c0_29] : memref<32x64xbf16, #tpu.memory_space<vmem>>, vector<32x64xbf16>
    %cst_30 = arith.constant dense<0.000000e+00> : vector<8x64xf32>
    %62 = tpu.matmul %60, %61, %cst_30 {dimension_numbers = #tpu.dot_dimension_numbers<[1], [0], [0], [1], [0, 0, 1, 1], [], []>} : vector<8x32xbf16>, vector<32x64xbf16>, vector<8x64xf32> -> vector<8x64xf32>
    %c0_31 = arith.constant 0 : index
    %c0_32 = arith.constant 0 : index
    %63 = vector.load %arg10[%c0_31, %c0_32] : memref<1x64xf32, #tpu.memory_space<vmem>>, vector<1x64xf32>
    %64 = vector.broadcast %63 : vector<1x64xf32> to vector<8x64xf32>
    %65 = arith.addf %62, %64 : vector<8x64xf32>
    %66 = arith.truncf %59 : vector<8x32xf32> to vector<8x32xbf16>
    %67 = vector.extract_strided_slice %65 {offsets = [0, 0], sizes = [8, 32], strides = [1, 1]} : vector<8x64xf32> to vector<8x32xf32>
    %68 = arith.truncf %67 : vector<8x32xf32> to vector<8x32xbf16>
    %69 = vector.extract_strided_slice %65 {offsets = [0, 32], sizes = [8, 32], strides = [1, 1]} : vector<8x64xf32> to vector<8x32xf32>
    %70 = arith.truncf %69 : vector<8x32xf32> to vector<8x32xbf16>
    %c0_33 = arith.constant 0 : index
    %c0_34 = arith.constant 0 : index
    %c0_35 = arith.constant 0 : index
    %71 = vector.load %arg4[%c0_33, %c0_34, %c0_35] : memref<1x8x8xf32, #tpu.memory_space<vmem>>, vector<1x8x8xf32>
    %72 = vector.shape_cast %71 : vector<1x8x8xf32> to vector<8x8xf32>
    %73 = vector.extract_strided_slice %66 {offsets = [0, 0], sizes = [8, 8], strides = [1, 1]} : vector<8x32xbf16> to vector<8x8xbf16>
    %74 = vector.extract_strided_slice %68 {offsets = [0, 0], sizes = [8, 8], strides = [1, 1]} : vector<8x32xbf16> to vector<8x8xbf16>
    %cst_36 = arith.constant dense<0.000000e+00> : vector<8x8xf32>
    %75 = tpu.matmul %73, %74, %cst_36 {dimension_numbers = #tpu.dot_dimension_numbers<[1], [1], [0], [0], [0, 0, 1, 0], [], []>} : vector<8x8xbf16>, vector<8x8xbf16>, vector<8x8xf32> -> vector<8x8xf32>
    %76 = arith.addf %75, %72 : vector<8x8xf32>
    %cst_37 = arith.constant dense<0xFF800000> : vector<8xf32>
    %77 = vector.multi_reduction <maximumf>, %76, %cst_37 [1] : vector<8x8xf32> to vector<8xf32>
    %78 = vector.shape_cast %77 : vector<8xf32> to vector<8x1xf32>
    %79 = vector.broadcast %78 : vector<8x1xf32> to vector<8x8xf32>
    %80 = arith.subf %76, %79 : vector<8x8xf32>
    %81 = math.exp %80 : vector<8x8xf32>
    %cst_38 = arith.constant dense<0.000000e+00> : vector<8xf32>
    %82 = vector.multi_reduction <add>, %81, %cst_38 [1] : vector<8x8xf32> to vector<8xf32>
    %83 = vector.shape_cast %82 : vector<8xf32> to vector<8x1xf32>
    %84 = arith.truncf %81 : vector<8x8xf32> to vector<8x8xbf16>
    %85 = vector.extract_strided_slice %70 {offsets = [0, 0], sizes = [8, 8], strides = [1, 1]} : vector<8x32xbf16> to vector<8x8xbf16>
    %cst_39 = arith.constant dense<0.000000e+00> : vector<8x8xf32>
    %86 = tpu.matmul %84, %85, %cst_39 {dimension_numbers = #tpu.dot_dimension_numbers<[1], [0], [0], [1], [0, 0, 1, 1], [], []>} : vector<8x8xbf16>, vector<8x8xbf16>, vector<8x8xf32> -> vector<8x8xf32>
    %87 = tpu.reciprocal %83 : vector<8x1xf32> -> vector<8x1xf32>
    %88 = vector.broadcast %87 : vector<8x1xf32> to vector<8x8xf32>
    %89 = arith.mulf %86, %88 : vector<8x8xf32>
    %90 = arith.truncf %89 : vector<8x8xf32> to vector<8x8xbf16>
    %c0_40 = arith.constant 0 : index
    %c0_41 = arith.constant 0 : index
    %91 = vector.load %arg14[%c0_40, %c0_41] : memref<8x32xbf16, #tpu.memory_space<vmem>>, vector<8x8xbf16>
    tpu.vector_store %arg14[%c0_40, %c0_41], %90 {strides = array<i32>} : memref<8x32xbf16, #tpu.memory_space<vmem>>, vector<8x8xbf16>,
    %92 = vector.extract_strided_slice %66 {offsets = [0, 8], sizes = [8, 8], strides = [1, 1]} : vector<8x32xbf16> to vector<8x8xbf16>
    %93 = vector.extract_strided_slice %68 {offsets = [0, 8], sizes = [8, 8], strides = [1, 1]} : vector<8x32xbf16> to vector<8x8xbf16>
    %cst_42 = arith.constant dense<0.000000e+00> : vector<8x8xf32>
    %94 = tpu.matmul %92, %93, %cst_42 {dimension_numbers = #tpu.dot_dimension_numbers<[1], [1], [0], [0], [0, 0, 1, 0], [], []>} : vector<8x8xbf16>, vector<8x8xbf16>, vector<8x8xf32> -> vector<8x8xf32>
    %95 = arith.addf %94, %72 : vector<8x8xf32>
    %cst_43 = arith.constant dense<0xFF800000> : vector<8xf32>
    %96 = vector.multi_reduction <maximumf>, %95, %cst_43 [1] : vector<8x8xf32> to vector<8xf32>
    %97 = vector.shape_cast %96 : vector<8xf32> to vector<8x1xf32>
    %98 = vector.broadcast %97 : vector<8x1xf32> to vector<8x8xf32>
    %99 = arith.subf %95, %98 : vector<8x8xf32>
    %100 = math.exp %99 : vector<8x8xf32>
    %cst_44 = arith.constant dense<0.000000e+00> : vector<8xf32>
    %101 = vector.multi_reduction <add>, %100, %cst_44 [1] : vector<8x8xf32> to vector<8xf32>
    %102 = vector.shape_cast %101 : vector<8xf32> to vector<8x1xf32>
    %103 = arith.truncf %100 : vector<8x8xf32> to vector<8x8xbf16>
    %104 = vector.extract_strided_slice %70 {offsets = [0, 8], sizes = [8, 8], strides = [1, 1]} : vector<8x32xbf16> to vector<8x8xbf16>
    %cst_45 = arith.constant dense<0.000000e+00> : vector<8x8xf32>
    %105 = tpu.matmul %103, %104, %cst_45 {dimension_numbers = #tpu.dot_dimension_numbers<[1], [0], [0], [1], [0, 0, 1, 1], [], []>} : vector<8x8xbf16>, vector<8x8xbf16>, vector<8x8xf32> -> vector<8x8xf32>
    %106 = tpu.reciprocal %102 : vector<8x1xf32> -> vector<8x1xf32>
    %107 = vector.broadcast %106 : vector<8x1xf32> to vector<8x8xf32>
    %108 = arith.mulf %105, %107 : vector<8x8xf32>
    %109 = arith.truncf %108 : vector<8x8xf32> to vector<8x8xbf16>
    %c0_46 = arith.constant 0 : index
    %c8 = arith.constant 8 : index
    %110 = vector.load %arg14[%c0_46, %c8] : memref<8x32xbf16, #tpu.memory_space<vmem>>, vector<8x8xbf16>
    tpu.vector_store %arg14[%c0_46, %c8], %109 {strides = array<i32>} : memref<8x32xbf16, #tpu.memory_space<vmem>>, vector<8x8xbf16>,
    %111 = vector.extract_strided_slice %66 {offsets = [0, 16], sizes = [8, 8], strides = [1, 1]} : vector<8x32xbf16> to vector<8x8xbf16>
    %112 = vector.extract_strided_slice %68 {offsets = [0, 16], sizes = [8, 8], strides = [1, 1]} : vector<8x32xbf16> to vector<8x8xbf16>
    %cst_47 = arith.constant dense<0.000000e+00> : vector<8x8xf32>
    %113 = tpu.matmul %111, %112, %cst_47 {dimension_numbers = #tpu.dot_dimension_numbers<[1], [1], [0], [0], [0, 0, 1, 0], [], []>} : vector<8x8xbf16>, vector<8x8xbf16>, vector<8x8xf32> -> vector<8x8xf32>
    %114 = arith.addf %113, %72 : vector<8x8xf32>
    %cst_48 = arith.constant dense<0xFF800000> : vector<8xf32>
    %115 = vector.multi_reduction <maximumf>, %114, %cst_48 [1] : vector<8x8xf32> to vector<8xf32>
    %116 = vector.shape_cast %115 : vector<8xf32> to vector<8x1xf32>
    %117 = vector.broadcast %116 : vector<8x1xf32> to vector<8x8xf32>
    %118 = arith.subf %114, %117 : vector<8x8xf32>
    %119 = math.exp %118 : vector<8x8xf32>
    %cst_49 = arith.constant dense<0.000000e+00> : vector<8xf32>
    %120 = vector.multi_reduction <add>, %119, %cst_49 [1] : vector<8x8xf32> to vector<8xf32>
    %121 = vector.shape_cast %120 : vector<8xf32> to vector<8x1xf32>
    %122 = arith.truncf %119 : vector<8x8xf32> to vector<8x8xbf16>
    %123 = vector.extract_strided_slice %70 {offsets = [0, 16], sizes = [8, 8], strides = [1, 1]} : vector<8x32xbf16> to vector<8x8xbf16>
    %cst_50 = arith.constant dense<0.000000e+00> : vector<8x8xf32>
    %124 = tpu.matmul %122, %123, %cst_50 {dimension_numbers = #tpu.dot_dimension_numbers<[1], [0], [0], [1], [0, 0, 1, 1], [], []>} : vector<8x8xbf16>, vector<8x8xbf16>, vector<8x8xf32> -> vector<8x8xf32>
    %125 = tpu.reciprocal %121 : vector<8x1xf32> -> vector<8x1xf32>
    %126 = vector.broadcast %125 : vector<8x1xf32> to vector<8x8xf32>
    %127 = arith.mulf %124, %126 : vector<8x8xf32>
    %128 = arith.truncf %127 : vector<8x8xf32> to vector<8x8xbf16>
    %c0_51 = arith.constant 0 : index
    %c16 = arith.constant 16 : index
    %129 = vector.load %arg14[%c0_51, %c16] : memref<8x32xbf16, #tpu.memory_space<vmem>>, vector<8x8xbf16>
    tpu.vector_store %arg14[%c0_51, %c16], %128 {strides = array<i32>} : memref<8x32xbf16, #tpu.memory_space<vmem>>, vector<8x8xbf16>,
    %130 = vector.extract_strided_slice %66 {offsets = [0, 24], sizes = [8, 8], strides = [1, 1]} : vector<8x32xbf16> to vector<8x8xbf16>
    %131 = vector.extract_strided_slice %68 {offsets = [0, 24], sizes = [8, 8], strides = [1, 1]} : vector<8x32xbf16> to vector<8x8xbf16>
    %cst_52 = arith.constant dense<0.000000e+00> : vector<8x8xf32>
    %132 = tpu.matmul %130, %131, %cst_52 {dimension_numbers = #tpu.dot_dimension_numbers<[1], [1], [0], [0], [0, 0, 1, 0], [], []>} : vector<8x8xbf16>, vector<8x8xbf16>, vector<8x8xf32> -> vector<8x8xf32>
    %133 = arith.addf %132, %72 : vector<8x8xf32>
    %cst_53 = arith.constant dense<0xFF800000> : vector<8xf32>
    %134 = vector.multi_reduction <maximumf>, %133, %cst_53 [1] : vector<8x8xf32> to vector<8xf32>
    %135 = vector.shape_cast %134 : vector<8xf32> to vector<8x1xf32>
    %136 = vector.broadcast %135 : vector<8x1xf32> to vector<8x8xf32>
    %137 = arith.subf %133, %136 : vector<8x8xf32>
    %138 = math.exp %137 : vector<8x8xf32>
    %cst_54 = arith.constant dense<0.000000e+00> : vector<8xf32>
    %139 = vector.multi_reduction <add>, %138, %cst_54 [1] : vector<8x8xf32> to vector<8xf32>
    %140 = vector.shape_cast %139 : vector<8xf32> to vector<8x1xf32>
    %141 = arith.truncf %138 : vector<8x8xf32> to vector<8x8xbf16>
    %142 = vector.extract_strided_slice %70 {offsets = [0, 24], sizes = [8, 8], strides = [1, 1]} : vector<8x32xbf16> to vector<8x8xbf16>
    %cst_55 = arith.constant dense<0.000000e+00> : vector<8x8xf32>
    %143 = tpu.matmul %141, %142, %cst_55 {dimension_numbers = #tpu.dot_dimension_numbers<[1], [0], [0], [1], [0, 0, 1, 1], [], []>} : vector<8x8xbf16>, vector<8x8xbf16>, vector<8x8xf32> -> vector<8x8xf32>
    %144 = tpu.reciprocal %140 : vector<8x1xf32> -> vector<8x1xf32>
    %145 = vector.broadcast %144 : vector<8x1xf32> to vector<8x8xf32>
    %146 = arith.mulf %143, %145 : vector<8x8xf32>
    %147 = arith.truncf %146 : vector<8x8xf32> to vector<8x8xbf16>
    %c0_56 = arith.constant 0 : index
    %c24 = arith.constant 24 : index
    %148 = vector.load %arg14[%c0_56, %c24] : memref<8x32xbf16, #tpu.memory_space<vmem>>, vector<8x8xbf16>
    tpu.vector_store %arg14[%c0_56, %c24], %147 {strides = array<i32>} : memref<8x32xbf16, #tpu.memory_space<vmem>>, vector<8x8xbf16>,
    %c0_57 = arith.constant 0 : index
    %c0_58 = arith.constant 0 : index
    %149 = vector.load %arg14[%c0_57, %c0_58] : memref<8x32xbf16, #tpu.memory_space<vmem>>, vector<8x32xbf16>
    %c0_59 = arith.constant 0 : index
    %c0_60 = arith.constant 0 : index
    %150 = vector.load %arg11[%c0_59, %c0_60] : memref<32x32xbf16, #tpu.memory_space<vmem>>, vector<32x32xbf16>
    %cst_61 = arith.constant dense<0.000000e+00> : vector<8x32xf32>
    %151 = tpu.matmul %149, %150, %cst_61 {dimension_numbers = #tpu.dot_dimension_numbers<[1], [0], [0], [1], [0, 0, 1, 1], [], []>} : vector<8x32xbf16>, vector<32x32xbf16>, vector<8x32xf32> -> vector<8x32xf32>
    %c0_62 = arith.constant 0 : index
    %c0_63 = arith.constant 0 : index
    %152 = vector.load %arg12[%c0_62, %c0_63] : memref<1x32xf32, #tpu.memory_space<vmem>>, vector<1x32xf32>
    %153 = vector.broadcast %152 : vector<1x32xf32> to vector<8x32xf32>
    %154 = arith.addf %151, %153 : vector<8x32xf32>
    %155 = arith.addf %1, %154 : vector<8x32xf32>
    %c0_64 = arith.constant 0 : index
    %c0_65 = arith.constant 0 : index
    %c0_66 = arith.constant 0 : index
    %156 = vector.load %arg13[%c0_64, %c0_65, %c0_66] : memref<1x8x32xf32, #tpu.memory_space<vmem>>, vector<1x8x32xf32>
    %157 = vector.shape_cast %156 : vector<1x8x32xf32> to vector<8x32xf32>
    %158 = vector.shape_cast %155 : vector<8x32xf32> to vector<1x8x32xf32>
    tpu.vector_store %arg13[%c0_64, %c0_65, %c0_66], %158 {strides = array<i32>} : memref<1x8x32xf32, #tpu.memory_space<vmem>>, vector<1x8x32xf32>,
    return
  }
  func.func @transform_0(%arg0: i32, %arg1: i32) -> (i32, i32, i32) {
    %c0_i32 = arith.constant 0 : i32
    %c0_i32_0 = arith.constant 0 : i32
    return %arg0, %arg1, %c0_i32 : i32, i32, i32
  }
  func.func @transform_1(%arg0: i32, %arg1: i32) -> (i32, i32, i32) {
    %c0_i32 = arith.constant 0 : i32
    %c0_i32_0 = arith.constant 0 : i32
    %c0_i32_1 = arith.constant 0 : i32
    return %arg0, %c0_i32, %c0_i32_0 : i32, i32, i32
  }
  func.func @transform_2(%arg0: i32, %arg1: i32) -> (i32, i32, i32) {
    %c0_i32 = arith.constant 0 : i32
    %c0_i32_0 = arith.constant 0 : i32
    return %arg0, %arg1, %c0_i32 : i32, i32, i32
  }
  func.func @transform_3(%arg0: i32, %arg1: i32) -> (i32, i32) {
    %c0_i32 = arith.constant 0 : i32
    %c0_i32_0 = arith.constant 0 : i32
    %c0_i32_1 = arith.constant 0 : i32
    return %c0_i32, %c0_i32_0 : i32, i32
  }
  func.func @transform_4(%arg0: i32, %arg1: i32) -> (i32, i32) {
    %c0_i32 = arith.constant 0 : i32
    %c0_i32_0 = arith.constant 0 : i32
    %c0_i32_1 = arith.constant 0 : i32
    return %c0_i32, %c0_i32_0 : i32, i32
  }
  func.func @transform_5(%arg0: i32, %arg1: i32) -> (i32, i32) {
    %c0_i32 = arith.constant 0 : i32
    %c0_i32_0 = arith.constant 0 : i32
    %c0_i32_1 = arith.constant 0 : i32
    return %c0_i32, %c0_i32_0 : i32, i32
  }
  func.func @transform_6(%arg0: i32, %arg1: i32) -> (i32, i32) {
    %c0_i32 = arith.constant 0 : i32
    %c0_i32_0 = arith.constant 0 : i32
    %c0_i32_1 = arith.constant 0 : i32
    return %c0_i32, %c0_i32_0 : i32, i32
  }
  func.func @transform_7(%arg0: i32, %arg1: i32) -> (i32, i32) {
    %c0_i32 = arith.constant 0 : i32
    %c0_i32_0 = arith.constant 0 : i32
    %c0_i32_1 = arith.constant 0 : i32
    return %c0_i32, %c0_i32_0 : i32, i32
  }
  func.func @transform_8(%arg0: i32, %arg1: i32) -> (i32, i32) {
    %c0_i32 = arith.constant 0 : i32
    %c0_i32_0 = arith.constant 0 : i32
    %c0_i32_1 = arith.constant 0 : i32
    return %c0_i32, %c0_i32_0 : i32, i32
  }
  func.func @transform_9(%arg0: i32, %arg1: i32) -> (i32, i32) {
    %c0_i32 = arith.constant 0 : i32
    %c0_i32_0 = arith.constant 0 : i32
    %c0_i32_1 = arith.constant 0 : i32
    return %c0_i32, %c0_i32_0 : i32, i32
  }
  func.func @transform_10(%arg0: i32, %arg1: i32) -> (i32, i32) {
    %c0_i32 = arith.constant 0 : i32
    %c0_i32_0 = arith.constant 0 : i32
    %c0_i32_1 = arith.constant 0 : i32
    return %c0_i32, %c0_i32_0 : i32, i32
  }
  func.func @transform_11(%arg0: i32, %arg1: i32) -> (i32, i32, i32) {
    %c0_i32 = arith.constant 0 : i32
    %c0_i32_0 = arith.constant 0 : i32
    return %arg0, %arg1, %c0_i32 : i32, i32, i32
  }
}

module attributes {stable_mosaic.version = 11 : i64} {
  func.func @_fused_attn_sublayer_kernel(%arg0: i32, %arg1: i32, %arg2: memref<1x8x32xf32, #tpu.memory_space<vmem>>, %arg3: memref<1x8x32xf32, #tpu.memory_space<vmem>>, %arg4: memref<1x8x8xf32, #tpu.memory_space<vmem>>, %arg5: memref<1x32xf32, #tpu.memory_space<vmem>>, %arg6: memref<1x32xf32, #tpu.memory_space<vmem>>, %arg7: memref<32x32xbf16, #tpu.memory_space<vmem>>, %arg8: memref<1x32xf32, #tpu.memory_space<vmem>>, %arg9: memref<32x64xbf16, #tpu.memory_space<vmem>>, %arg10: memref<1x64xf32, #tpu.memory_space<vmem>>, %arg11: memref<32x32xbf16, #tpu.memory_space<vmem>>, %arg12: memref<1x32xf32, #tpu.memory_space<vmem>>, %arg13: memref<1x8x32xf32, #tpu.memory_space<vmem>>, %arg14: memref<8x32xbf16, #tpu.memory_space<vmem>>) attributes {dimension_semantics = [#tpu.dimension_semantics<parallel>, #tpu.dimension_semantics<parallel>], iteration_bounds = array<i64: 2, 1>, scalar_prefetch = 0 : i64, scratch_operands = 1 : i64, tpu.core_type = #tpu.core_type<tc>, window_params = [{transform_indices = @transform_0, window_bounds = array<i64: 1, 8, 32>}, {transform_indices = @transform_1, window_bounds = array<i64: 1, 8, 32>}, {transform_indices = @transform_2, window_bounds = array<i64: 1, 8, 8>}, {pipeline_mode = #tpu.pipeline_mode<synchronous>, transform_indices = @transform_3, window_bounds = array<i64: 1, 32>}, {pipeline_mode = #tpu.pipeline_mode<synchronous>, transform_indices = @transform_4, window_bounds = array<i64: 1, 32>}, {pipeline_mode = #tpu.pipeline_mode<synchronous>, transform_indices = @transform_5, window_bounds = array<i64: 32, 32>}, {pipeline_mode = #tpu.pipeline_mode<synchronous>, transform_indices = @transform_6, window_bounds = array<i64: 1, 32>}, {pipeline_mode = #tpu.pipeline_mode<synchronous>, transform_indices = @transform_7, window_bounds = array<i64: 32, 64>}, {pipeline_mode = #tpu.pipeline_mode<synchronous>, transform_indices = @transform_8, window_bounds = array<i64: 1, 64>}, {pipeline_mode = #tpu.pipeline_mode<synchronous>, transform_indices = @transform_9, window_bounds = array<i64: 32, 32>}, {pipeline_mode = #tpu.pipeline_mode<synchronous>, transform_indices = @transform_10, window_bounds = array<i64: 1, 32>}, {transform_indices = @transform_11, window_bounds = array<i64: 1, 8, 32>}]} {
    %c0 = arith.constant 0 : index
    %c0_0 = arith.constant 0 : index
    %c0_1 = arith.constant 0 : index
    %0 = vector.load %arg2[%c0, %c0_0, %c0_1] : memref<1x8x32xf32, #tpu.memory_space<vmem>>, vector<1x8x32xf32>
    %1 = vector.shape_cast %0 : vector<1x8x32xf32> to vector<8x32xf32>
    %c0_2 = arith.constant 0 : index
    %c0_3 = arith.constant 0 : index
    %2 = vector.load %arg5[%c0_2, %c0_3] : memref<1x32xf32, #tpu.memory_space<vmem>>, vector<1x32xf32>
    %c0_4 = arith.constant 0 : index
    %c0_5 = arith.constant 0 : index
    %3 = vector.load %arg6[%c0_4, %c0_5] : memref<1x32xf32, #tpu.memory_space<vmem>>, vector<1x32xf32>
    %cst = arith.constant dense<0.000000e+00> : vector<8xf32>
    %4 = vector.multi_reduction <add>, %1, %cst [1] : vector<8x32xf32> to vector<8xf32>
    %5 = vector.shape_cast %4 : vector<8xf32> to vector<8x1xf32>
    %cst_6 = arith.constant 3.200000e+01 : f32
    %6 = vector.broadcast %cst_6 : f32 to vector<8x1xf32>
    %7 = arith.divf %5, %6 : vector<8x1xf32>
    %8 = vector.broadcast %7 : vector<8x1xf32> to vector<8x32xf32>
    %9 = arith.subf %1, %8 : vector<8x32xf32>
    %10 = arith.mulf %9, %9 : vector<8x32xf32>
    %cst_7 = arith.constant dense<0.000000e+00> : vector<8xf32>
    %11 = vector.multi_reduction <add>, %10, %cst_7 [1] : vector<8x32xf32> to vector<8xf32>
    %12 = vector.shape_cast %11 : vector<8xf32> to vector<8x1xf32>
    %cst_8 = arith.constant 3.100000e+01 : f32
    %13 = vector.broadcast %cst_8 : f32 to vector<8x1xf32>
    %14 = arith.divf %12, %13 : vector<8x1xf32>
    %15 = vector.broadcast %7 : vector<8x1xf32> to vector<8x32xf32>
    %16 = arith.subf %1, %15 : vector<8x32xf32>
    %17 = vector.broadcast %2 : vector<1x32xf32> to vector<8x32xf32>
    %18 = arith.mulf %17, %16 : vector<8x32xf32>
    %19 = math.sqrt %14 : vector<8x1xf32>
    %cst_9 = arith.constant 9.99999997E-7 : f32
    %20 = vector.broadcast %cst_9 : f32 to vector<8x1xf32>
    %21 = arith.addf %19, %20 : vector<8x1xf32>
    %22 = vector.broadcast %21 : vector<8x1xf32> to vector<8x32xf32>
    %23 = arith.divf %18, %22 : vector<8x32xf32>
    %24 = vector.broadcast %3 : vector<1x32xf32> to vector<8x32xf32>
    %25 = arith.addf %23, %24 : vector<8x32xf32>
    %c0_10 = arith.constant 0 : index
    %c0_11 = arith.constant 0 : index
    %c0_12 = arith.constant 0 : index
    %26 = vector.load %arg3[%c0_10, %c0_11, %c0_12] : memref<1x8x32xf32, #tpu.memory_space<vmem>>, vector<1x8x32xf32>
    %27 = vector.shape_cast %26 : vector<1x8x32xf32> to vector<8x32xf32>
    %28 = arith.truncf %25 : vector<8x32xf32> to vector<8x32xbf16>
    %c0_13 = arith.constant 0 : index
    %c0_14 = arith.constant 0 : index
    %29 = vector.load %arg7[%c0_13, %c0_14] : memref<32x32xbf16, #tpu.memory_space<vmem>>, vector<32x32xbf16>
    %cst_15 = arith.constant dense<0.000000e+00> : vector<8x32xf32>
    %30 = tpu.matmul %28, %29, %cst_15 {dimension_numbers = #tpu.dot_dimension_numbers<[1], [0], [0], [1], [0, 0, 1, 1], [], []>} : vector<8x32xbf16>, vector<32x32xbf16>, vector<8x32xf32> -> vector<8x32xf32>
    %c0_16 = arith.constant 0 : index
    %c0_17 = arith.constant 0 : index
    %31 = vector.load %arg8[%c0_16, %c0_17] : memref<1x32xf32, #tpu.memory_space<vmem>>, vector<1x32xf32>
    %32 = vector.broadcast %31 : vector<1x32xf32> to vector<8x32xf32>
    %33 = arith.addf %30, %32 : vector<8x32xf32>
    %cst_18 = arith.constant 0.353553385 : f32
    %34 = vector.broadcast %cst_18 : f32 to vector<8x32xf32>
    %35 = arith.mulf %33, %34 : vector<8x32xf32>
    %36 = arith.truncf %27 : vector<8x32xf32> to vector<8x32xbf16>
    %c0_19 = arith.constant 0 : index
    %c0_20 = arith.constant 0 : index
    %37 = vector.load %arg9[%c0_19, %c0_20] : memref<32x64xbf16, #tpu.memory_space<vmem>>, vector<32x64xbf16>
    %cst_21 = arith.constant dense<0.000000e+00> : vector<8x64xf32>
    %38 = tpu.matmul %36, %37, %cst_21 {dimension_numbers = #tpu.dot_dimension_numbers<[1], [0], [0], [1], [0, 0, 1, 1], [], []>} : vector<8x32xbf16>, vector<32x64xbf16>, vector<8x64xf32> -> vector<8x64xf32>
    %c0_22 = arith.constant 0 : index
    %c0_23 = arith.constant 0 : index
    %39 = vector.load %arg10[%c0_22, %c0_23] : memref<1x64xf32, #tpu.memory_space<vmem>>, vector<1x64xf32>
    %40 = vector.broadcast %39 : vector<1x64xf32> to vector<8x64xf32>
    %41 = arith.addf %38, %40 : vector<8x64xf32>
    %42 = arith.truncf %35 : vector<8x32xf32> to vector<8x32xbf16>
    %43 = vector.extract_strided_slice %41 {offsets = [0, 0], sizes = [8, 32], strides = [1, 1]} : vector<8x64xf32> to vector<8x32xf32>
    %44 = arith.truncf %43 : vector<8x32xf32> to vector<8x32xbf16>
    %45 = vector.extract_strided_slice %41 {offsets = [0, 32], sizes = [8, 32], strides = [1, 1]} : vector<8x64xf32> to vector<8x32xf32>
    %46 = arith.truncf %45 : vector<8x32xf32> to vector<8x32xbf16>
    %c0_24 = arith.constant 0 : index
    %c0_25 = arith.constant 0 : index
    %c0_26 = arith.constant 0 : index
    %47 = vector.load %arg4[%c0_24, %c0_25, %c0_26] : memref<1x8x8xf32, #tpu.memory_space<vmem>>, vector<1x8x8xf32>
    %48 = vector.shape_cast %47 : vector<1x8x8xf32> to vector<8x8xf32>
    %49 = vector.extract_strided_slice %42 {offsets = [0, 0], sizes = [8, 8], strides = [1, 1]} : vector<8x32xbf16> to vector<8x8xbf16>
    %50 = vector.extract_strided_slice %44 {offsets = [0, 0], sizes = [8, 8], strides = [1, 1]} : vector<8x32xbf16> to vector<8x8xbf16>
    %cst_27 = arith.constant dense<0.000000e+00> : vector<8x8xf32>
    %51 = tpu.matmul %49, %50, %cst_27 {dimension_numbers = #tpu.dot_dimension_numbers<[1], [1], [0], [0], [0, 0, 1, 0], [], []>} : vector<8x8xbf16>, vector<8x8xbf16>, vector<8x8xf32> -> vector<8x8xf32>
    %52 = arith.addf %51, %48 : vector<8x8xf32>
    %cst_28 = arith.constant dense<0xFF800000> : vector<8xf32>
    %53 = vector.multi_reduction <maximumf>, %52, %cst_28 [1] : vector<8x8xf32> to vector<8xf32>
    %54 = vector.shape_cast %53 : vector<8xf32> to vector<8x1xf32>
    %55 = vector.broadcast %54 : vector<8x1xf32> to vector<8x8xf32>
    %56 = arith.subf %52, %55 : vector<8x8xf32>
    %57 = math.exp %56 : vector<8x8xf32>
    %cst_29 = arith.constant dense<0.000000e+00> : vector<8xf32>
    %58 = vector.multi_reduction <add>, %57, %cst_29 [1] : vector<8x8xf32> to vector<8xf32>
    %59 = vector.shape_cast %58 : vector<8xf32> to vector<8x1xf32>
    %60 = arith.truncf %57 : vector<8x8xf32> to vector<8x8xbf16>
    %61 = vector.extract_strided_slice %46 {offsets = [0, 0], sizes = [8, 8], strides = [1, 1]} : vector<8x32xbf16> to vector<8x8xbf16>
    %cst_30 = arith.constant dense<0.000000e+00> : vector<8x8xf32>
    %62 = tpu.matmul %60, %61, %cst_30 {dimension_numbers = #tpu.dot_dimension_numbers<[1], [0], [0], [1], [0, 0, 1, 1], [], []>} : vector<8x8xbf16>, vector<8x8xbf16>, vector<8x8xf32> -> vector<8x8xf32>
    %63 = tpu.reciprocal %59 : vector<8x1xf32> -> vector<8x1xf32>
    %64 = vector.broadcast %63 : vector<8x1xf32> to vector<8x8xf32>
    %65 = arith.mulf %62, %64 : vector<8x8xf32>
    %66 = arith.truncf %65 : vector<8x8xf32> to vector<8x8xbf16>
    %c0_31 = arith.constant 0 : index
    %c0_32 = arith.constant 0 : index
    %67 = vector.load %arg14[%c0_31, %c0_32] : memref<8x32xbf16, #tpu.memory_space<vmem>>, vector<8x8xbf16>
    tpu.vector_store %arg14[%c0_31, %c0_32], %66 {strides = array<i32>} : memref<8x32xbf16, #tpu.memory_space<vmem>>, vector<8x8xbf16>,
    %68 = vector.extract_strided_slice %42 {offsets = [0, 8], sizes = [8, 8], strides = [1, 1]} : vector<8x32xbf16> to vector<8x8xbf16>
    %69 = vector.extract_strided_slice %44 {offsets = [0, 8], sizes = [8, 8], strides = [1, 1]} : vector<8x32xbf16> to vector<8x8xbf16>
    %cst_33 = arith.constant dense<0.000000e+00> : vector<8x8xf32>
    %70 = tpu.matmul %68, %69, %cst_33 {dimension_numbers = #tpu.dot_dimension_numbers<[1], [1], [0], [0], [0, 0, 1, 0], [], []>} : vector<8x8xbf16>, vector<8x8xbf16>, vector<8x8xf32> -> vector<8x8xf32>
    %71 = arith.addf %70, %48 : vector<8x8xf32>
    %cst_34 = arith.constant dense<0xFF800000> : vector<8xf32>
    %72 = vector.multi_reduction <maximumf>, %71, %cst_34 [1] : vector<8x8xf32> to vector<8xf32>
    %73 = vector.shape_cast %72 : vector<8xf32> to vector<8x1xf32>
    %74 = vector.broadcast %73 : vector<8x1xf32> to vector<8x8xf32>
    %75 = arith.subf %71, %74 : vector<8x8xf32>
    %76 = math.exp %75 : vector<8x8xf32>
    %cst_35 = arith.constant dense<0.000000e+00> : vector<8xf32>
    %77 = vector.multi_reduction <add>, %76, %cst_35 [1] : vector<8x8xf32> to vector<8xf32>
    %78 = vector.shape_cast %77 : vector<8xf32> to vector<8x1xf32>
    %79 = arith.truncf %76 : vector<8x8xf32> to vector<8x8xbf16>
    %80 = vector.extract_strided_slice %46 {offsets = [0, 8], sizes = [8, 8], strides = [1, 1]} : vector<8x32xbf16> to vector<8x8xbf16>
    %cst_36 = arith.constant dense<0.000000e+00> : vector<8x8xf32>
    %81 = tpu.matmul %79, %80, %cst_36 {dimension_numbers = #tpu.dot_dimension_numbers<[1], [0], [0], [1], [0, 0, 1, 1], [], []>} : vector<8x8xbf16>, vector<8x8xbf16>, vector<8x8xf32> -> vector<8x8xf32>
    %82 = tpu.reciprocal %78 : vector<8x1xf32> -> vector<8x1xf32>
    %83 = vector.broadcast %82 : vector<8x1xf32> to vector<8x8xf32>
    %84 = arith.mulf %81, %83 : vector<8x8xf32>
    %85 = arith.truncf %84 : vector<8x8xf32> to vector<8x8xbf16>
    %c0_37 = arith.constant 0 : index
    %c8 = arith.constant 8 : index
    %86 = vector.load %arg14[%c0_37, %c8] : memref<8x32xbf16, #tpu.memory_space<vmem>>, vector<8x8xbf16>
    tpu.vector_store %arg14[%c0_37, %c8], %85 {strides = array<i32>} : memref<8x32xbf16, #tpu.memory_space<vmem>>, vector<8x8xbf16>,
    %87 = vector.extract_strided_slice %42 {offsets = [0, 16], sizes = [8, 8], strides = [1, 1]} : vector<8x32xbf16> to vector<8x8xbf16>
    %88 = vector.extract_strided_slice %44 {offsets = [0, 16], sizes = [8, 8], strides = [1, 1]} : vector<8x32xbf16> to vector<8x8xbf16>
    %cst_38 = arith.constant dense<0.000000e+00> : vector<8x8xf32>
    %89 = tpu.matmul %87, %88, %cst_38 {dimension_numbers = #tpu.dot_dimension_numbers<[1], [1], [0], [0], [0, 0, 1, 0], [], []>} : vector<8x8xbf16>, vector<8x8xbf16>, vector<8x8xf32> -> vector<8x8xf32>
    %90 = arith.addf %89, %48 : vector<8x8xf32>
    %cst_39 = arith.constant dense<0xFF800000> : vector<8xf32>
    %91 = vector.multi_reduction <maximumf>, %90, %cst_39 [1] : vector<8x8xf32> to vector<8xf32>
    %92 = vector.shape_cast %91 : vector<8xf32> to vector<8x1xf32>
    %93 = vector.broadcast %92 : vector<8x1xf32> to vector<8x8xf32>
    %94 = arith.subf %90, %93 : vector<8x8xf32>
    %95 = math.exp %94 : vector<8x8xf32>
    %cst_40 = arith.constant dense<0.000000e+00> : vector<8xf32>
    %96 = vector.multi_reduction <add>, %95, %cst_40 [1] : vector<8x8xf32> to vector<8xf32>
    %97 = vector.shape_cast %96 : vector<8xf32> to vector<8x1xf32>
    %98 = arith.truncf %95 : vector<8x8xf32> to vector<8x8xbf16>
    %99 = vector.extract_strided_slice %46 {offsets = [0, 16], sizes = [8, 8], strides = [1, 1]} : vector<8x32xbf16> to vector<8x8xbf16>
    %cst_41 = arith.constant dense<0.000000e+00> : vector<8x8xf32>
    %100 = tpu.matmul %98, %99, %cst_41 {dimension_numbers = #tpu.dot_dimension_numbers<[1], [0], [0], [1], [0, 0, 1, 1], [], []>} : vector<8x8xbf16>, vector<8x8xbf16>, vector<8x8xf32> -> vector<8x8xf32>
    %101 = tpu.reciprocal %97 : vector<8x1xf32> -> vector<8x1xf32>
    %102 = vector.broadcast %101 : vector<8x1xf32> to vector<8x8xf32>
    %103 = arith.mulf %100, %102 : vector<8x8xf32>
    %104 = arith.truncf %103 : vector<8x8xf32> to vector<8x8xbf16>
    %c0_42 = arith.constant 0 : index
    %c16 = arith.constant 16 : index
    %105 = vector.load %arg14[%c0_42, %c16] : memref<8x32xbf16, #tpu.memory_space<vmem>>, vector<8x8xbf16>
    tpu.vector_store %arg14[%c0_42, %c16], %104 {strides = array<i32>} : memref<8x32xbf16, #tpu.memory_space<vmem>>, vector<8x8xbf16>,
    %106 = vector.extract_strided_slice %42 {offsets = [0, 24], sizes = [8, 8], strides = [1, 1]} : vector<8x32xbf16> to vector<8x8xbf16>
    %107 = vector.extract_strided_slice %44 {offsets = [0, 24], sizes = [8, 8], strides = [1, 1]} : vector<8x32xbf16> to vector<8x8xbf16>
    %cst_43 = arith.constant dense<0.000000e+00> : vector<8x8xf32>
    %108 = tpu.matmul %106, %107, %cst_43 {dimension_numbers = #tpu.dot_dimension_numbers<[1], [1], [0], [0], [0, 0, 1, 0], [], []>} : vector<8x8xbf16>, vector<8x8xbf16>, vector<8x8xf32> -> vector<8x8xf32>
    %109 = arith.addf %108, %48 : vector<8x8xf32>
    %cst_44 = arith.constant dense<0xFF800000> : vector<8xf32>
    %110 = vector.multi_reduction <maximumf>, %109, %cst_44 [1] : vector<8x8xf32> to vector<8xf32>
    %111 = vector.shape_cast %110 : vector<8xf32> to vector<8x1xf32>
    %112 = vector.broadcast %111 : vector<8x1xf32> to vector<8x8xf32>
    %113 = arith.subf %109, %112 : vector<8x8xf32>
    %114 = math.exp %113 : vector<8x8xf32>
    %cst_45 = arith.constant dense<0.000000e+00> : vector<8xf32>
    %115 = vector.multi_reduction <add>, %114, %cst_45 [1] : vector<8x8xf32> to vector<8xf32>
    %116 = vector.shape_cast %115 : vector<8xf32> to vector<8x1xf32>
    %117 = arith.truncf %114 : vector<8x8xf32> to vector<8x8xbf16>
    %118 = vector.extract_strided_slice %46 {offsets = [0, 24], sizes = [8, 8], strides = [1, 1]} : vector<8x32xbf16> to vector<8x8xbf16>
    %cst_46 = arith.constant dense<0.000000e+00> : vector<8x8xf32>
    %119 = tpu.matmul %117, %118, %cst_46 {dimension_numbers = #tpu.dot_dimension_numbers<[1], [0], [0], [1], [0, 0, 1, 1], [], []>} : vector<8x8xbf16>, vector<8x8xbf16>, vector<8x8xf32> -> vector<8x8xf32>
    %120 = tpu.reciprocal %116 : vector<8x1xf32> -> vector<8x1xf32>
    %121 = vector.broadcast %120 : vector<8x1xf32> to vector<8x8xf32>
    %122 = arith.mulf %119, %121 : vector<8x8xf32>
    %123 = arith.truncf %122 : vector<8x8xf32> to vector<8x8xbf16>
    %c0_47 = arith.constant 0 : index
    %c24 = arith.constant 24 : index
    %124 = vector.load %arg14[%c0_47, %c24] : memref<8x32xbf16, #tpu.memory_space<vmem>>, vector<8x8xbf16>
    tpu.vector_store %arg14[%c0_47, %c24], %123 {strides = array<i32>} : memref<8x32xbf16, #tpu.memory_space<vmem>>, vector<8x8xbf16>,
    %c0_48 = arith.constant 0 : index
    %c0_49 = arith.constant 0 : index
    %125 = vector.load %arg14[%c0_48, %c0_49] : memref<8x32xbf16, #tpu.memory_space<vmem>>, vector<8x32xbf16>
    %c0_50 = arith.constant 0 : index
    %c0_51 = arith.constant 0 : index
    %126 = vector.load %arg11[%c0_50, %c0_51] : memref<32x32xbf16, #tpu.memory_space<vmem>>, vector<32x32xbf16>
    %cst_52 = arith.constant dense<0.000000e+00> : vector<8x32xf32>
    %127 = tpu.matmul %125, %126, %cst_52 {dimension_numbers = #tpu.dot_dimension_numbers<[1], [0], [0], [1], [0, 0, 1, 1], [], []>} : vector<8x32xbf16>, vector<32x32xbf16>, vector<8x32xf32> -> vector<8x32xf32>
    %c0_53 = arith.constant 0 : index
    %c0_54 = arith.constant 0 : index
    %128 = vector.load %arg12[%c0_53, %c0_54] : memref<1x32xf32, #tpu.memory_space<vmem>>, vector<1x32xf32>
    %129 = vector.broadcast %128 : vector<1x32xf32> to vector<8x32xf32>
    %130 = arith.addf %127, %129 : vector<8x32xf32>
    %131 = arith.addf %1, %130 : vector<8x32xf32>
    %c0_55 = arith.constant 0 : index
    %c0_56 = arith.constant 0 : index
    %c0_57 = arith.constant 0 : index
    %132 = vector.load %arg13[%c0_55, %c0_56, %c0_57] : memref<1x8x32xf32, #tpu.memory_space<vmem>>, vector<1x8x32xf32>
    %133 = vector.shape_cast %132 : vector<1x8x32xf32> to vector<8x32xf32>
    %134 = vector.shape_cast %131 : vector<8x32xf32> to vector<1x8x32xf32>
    tpu.vector_store %arg13[%c0_55, %c0_56, %c0_57], %134 {strides = array<i32>} : memref<1x8x32xf32, #tpu.memory_space<vmem>>, vector<1x8x32xf32>,
    return
  }
  func.func @transform_0(%arg0: i32, %arg1: i32) -> (i32, i32, i32) {
    %c0_i32 = arith.constant 0 : i32
    %c0_i32_0 = arith.constant 0 : i32
    return %arg0, %arg1, %c0_i32 : i32, i32, i32
  }
  func.func @transform_1(%arg0: i32, %arg1: i32) -> (i32, i32, i32) {
    %c0_i32 = arith.constant 0 : i32
    %c0_i32_0 = arith.constant 0 : i32
    %c0_i32_1 = arith.constant 0 : i32
    return %arg0, %c0_i32, %c0_i32_0 : i32, i32, i32
  }
  func.func @transform_2(%arg0: i32, %arg1: i32) -> (i32, i32, i32) {
    %c0_i32 = arith.constant 0 : i32
    %c0_i32_0 = arith.constant 0 : i32
    return %arg0, %arg1, %c0_i32 : i32, i32, i32
  }
  func.func @transform_3(%arg0: i32, %arg1: i32) -> (i32, i32) {
    %c0_i32 = arith.constant 0 : i32
    %c0_i32_0 = arith.constant 0 : i32
    %c0_i32_1 = arith.constant 0 : i32
    return %c0_i32, %c0_i32_0 : i32, i32
  }
  func.func @transform_4(%arg0: i32, %arg1: i32) -> (i32, i32) {
    %c0_i32 = arith.constant 0 : i32
    %c0_i32_0 = arith.constant 0 : i32
    %c0_i32_1 = arith.constant 0 : i32
    return %c0_i32, %c0_i32_0 : i32, i32
  }
  func.func @transform_5(%arg0: i32, %arg1: i32) -> (i32, i32) {
    %c0_i32 = arith.constant 0 : i32
    %c0_i32_0 = arith.constant 0 : i32
    %c0_i32_1 = arith.constant 0 : i32
    return %c0_i32, %c0_i32_0 : i32, i32
  }
  func.func @transform_6(%arg0: i32, %arg1: i32) -> (i32, i32) {
    %c0_i32 = arith.constant 0 : i32
    %c0_i32_0 = arith.constant 0 : i32
    %c0_i32_1 = arith.constant 0 : i32
    return %c0_i32, %c0_i32_0 : i32, i32
  }
  func.func @transform_7(%arg0: i32, %arg1: i32) -> (i32, i32) {
    %c0_i32 = arith.constant 0 : i32
    %c0_i32_0 = arith.constant 0 : i32
    %c0_i32_1 = arith.constant 0 : i32
    return %c0_i32, %c0_i32_0 : i32, i32
  }
  func.func @transform_8(%arg0: i32, %arg1: i32) -> (i32, i32) {
    %c0_i32 = arith.constant 0 : i32
    %c0_i32_0 = arith.constant 0 : i32
    %c0_i32_1 = arith.constant 0 : i32
    return %c0_i32, %c0_i32_0 : i32, i32
  }
  func.func @transform_9(%arg0: i32, %arg1: i32) -> (i32, i32) {
    %c0_i32 = arith.constant 0 : i32
    %c0_i32_0 = arith.constant 0 : i32
    %c0_i32_1 = arith.constant 0 : i32
    return %c0_i32, %c0_i32_0 : i32, i32
  }
  func.func @transform_10(%arg0: i32, %arg1: i32) -> (i32, i32) {
    %c0_i32 = arith.constant 0 : i32
    %c0_i32_0 = arith.constant 0 : i32
    %c0_i32_1 = arith.constant 0 : i32
    return %c0_i32, %c0_i32_0 : i32, i32
  }
  func.func @transform_11(%arg0: i32, %arg1: i32) -> (i32, i32, i32) {
    %c0_i32 = arith.constant 0 : i32
    %c0_i32_0 = arith.constant 0 : i32
    return %arg0, %arg1, %c0_i32 : i32, i32, i32
  }
}

module attributes {stable_mosaic.version = 11 : i64} {
  func.func @_layernorm_kernel(%arg0: i32, %arg1: memref<16x32xf32, #tpu.memory_space<vmem>>, %arg2: memref<1x32xf32, #tpu.memory_space<vmem>>, %arg3: memref<1x32xf32, #tpu.memory_space<vmem>>, %arg4: memref<16x32xf32, #tpu.memory_space<vmem>>) attributes {dimension_semantics = [#tpu.dimension_semantics<parallel>], iteration_bounds = array<i64: 1>, scalar_prefetch = 0 : i64, scratch_operands = 0 : i64, tpu.core_type = #tpu.core_type<tc>, window_params = [{transform_indices = @transform_0, window_bounds = array<i64: 16, 32>}, {pipeline_mode = #tpu.pipeline_mode<synchronous>, transform_indices = @transform_1, window_bounds = array<i64: 1, 32>}, {pipeline_mode = #tpu.pipeline_mode<synchronous>, transform_indices = @transform_2, window_bounds = array<i64: 1, 32>}, {transform_indices = @transform_3, window_bounds = array<i64: 16, 32>}]} {
    %c0 = arith.constant 0 : index
    %c0_0 = arith.constant 0 : index
    %0 = vector.load %arg1[%c0, %c0_0] : memref<16x32xf32, #tpu.memory_space<vmem>>, vector<16x32xf32>
    %c0_1 = arith.constant 0 : index
    %c0_2 = arith.constant 0 : index
    %1 = vector.load %arg2[%c0_1, %c0_2] : memref<1x32xf32, #tpu.memory_space<vmem>>, vector<1x32xf32>
    %c0_3 = arith.constant 0 : index
    %c0_4 = arith.constant 0 : index
    %2 = vector.load %arg3[%c0_3, %c0_4] : memref<1x32xf32, #tpu.memory_space<vmem>>, vector<1x32xf32>
    %cst = arith.constant dense<0.000000e+00> : vector<16xf32>
    %3 = vector.multi_reduction <add>, %0, %cst [1] : vector<16x32xf32> to vector<16xf32>
    %4 = vector.shape_cast %3 : vector<16xf32> to vector<16x1xf32>
    %cst_5 = arith.constant 3.200000e+01 : f32
    %5 = vector.broadcast %cst_5 : f32 to vector<16x1xf32>
    %6 = arith.divf %4, %5 : vector<16x1xf32>
    %7 = vector.broadcast %6 : vector<16x1xf32> to vector<16x32xf32>
    %8 = arith.subf %0, %7 : vector<16x32xf32>
    %9 = arith.mulf %8, %8 : vector<16x32xf32>
    %cst_6 = arith.constant dense<0.000000e+00> : vector<16xf32>
    %10 = vector.multi_reduction <add>, %9, %cst_6 [1] : vector<16x32xf32> to vector<16xf32>
    %11 = vector.shape_cast %10 : vector<16xf32> to vector<16x1xf32>
    %cst_7 = arith.constant 3.100000e+01 : f32
    %12 = vector.broadcast %cst_7 : f32 to vector<16x1xf32>
    %13 = arith.divf %11, %12 : vector<16x1xf32>
    %14 = vector.broadcast %6 : vector<16x1xf32> to vector<16x32xf32>
    %15 = arith.subf %0, %14 : vector<16x32xf32>
    %16 = vector.broadcast %1 : vector<1x32xf32> to vector<16x32xf32>
    %17 = arith.mulf %16, %15 : vector<16x32xf32>
    %18 = math.sqrt %13 : vector<16x1xf32>
    %cst_8 = arith.constant 9.99999997E-7 : f32
    %19 = vector.broadcast %cst_8 : f32 to vector<16x1xf32>
    %20 = arith.addf %18, %19 : vector<16x1xf32>
    %21 = vector.broadcast %20 : vector<16x1xf32> to vector<16x32xf32>
    %22 = arith.divf %17, %21 : vector<16x32xf32>
    %23 = vector.broadcast %2 : vector<1x32xf32> to vector<16x32xf32>
    %24 = arith.addf %22, %23 : vector<16x32xf32>
    %c0_9 = arith.constant 0 : index
    %c0_10 = arith.constant 0 : index
    %25 = vector.load %arg4[%c0_9, %c0_10] : memref<16x32xf32, #tpu.memory_space<vmem>>, vector<16x32xf32>
    tpu.vector_store %arg4[%c0_9, %c0_10], %24 {strides = array<i32>} : memref<16x32xf32, #tpu.memory_space<vmem>>, vector<16x32xf32>,
    return
  }
  func.func @transform_0(%arg0: i32) -> (i32, i32) {
    %c0_i32 = arith.constant 0 : i32
    %c0_i32_0 = arith.constant 0 : i32
    return %arg0, %c0_i32 : i32, i32
  }
  func.func @transform_1(%arg0: i32) -> (i32, i32) {
    %c0_i32 = arith.constant 0 : i32
    %c0_i32_0 = arith.constant 0 : i32
    %c0_i32_1 = arith.constant 0 : i32
    return %c0_i32, %c0_i32_0 : i32, i32
  }
  func.func @transform_2(%arg0: i32) -> (i32, i32) {
    %c0_i32 = arith.constant 0 : i32
    %c0_i32_0 = arith.constant 0 : i32
    %c0_i32_1 = arith.constant 0 : i32
    return %c0_i32, %c0_i32_0 : i32, i32
  }
  func.func @transform_3(%arg0: i32) -> (i32, i32) {
    %c0_i32 = arith.constant 0 : i32
    %c0_i32_0 = arith.constant 0 : i32
    return %arg0, %c0_i32 : i32, i32
  }
}

</mosaic_0001>

<llo_original>
// kernel: decoder.9
$region0: #{decoder.9}
  #allocation0 [shape = 'u32[]', space=smem, size = 0x4, offset = 0x4, fixed_abs, tag = 'smem constant byte address 0x4 - core index']
  #allocation1 [shape = 'u32[72,128]{1,0:T(1,128)}', space=vmem, size = 0x9000, scoped, tag = 'internal scratch']
  %s0 = inlined_call_operand.vmem [shape: f32[16,32], index: 0, kind: input, shape index: {}]
  %s1 = inlined_call_operand.vmem [shape: f32[1,32], index: 1, kind: input, shape index: {}]
  %s2 = inlined_call_operand.vmem [shape: f32[1,32], index: 2, kind: input, shape index: {}]
  %s3 = inlined_call_operand.vmem [shape: bf16[32,64], index: 3, kind: input, shape index: {}]
  %s4 = inlined_call_operand.vmem [shape: f32[1,64], index: 4, kind: input, shape index: {}]
  %s5 = inlined_call_operand.vmem [shape: bf16[64,32], index: 5, kind: input, shape index: {}]
  %s6 = inlined_call_operand.vmem [shape: f32[1,32], index: 6, kind: input, shape index: {}]
  %s7 = inlined_call_operand.vmem [shape: f32[16,32], index: 7, kind: output, shape index: {}]
  %s8 = sld [smem:[#allocation0]]
  $region38: #{decoder.9} parent=0
    _
  %s10 = ssub.s32 1, %s8
  %s11 = scalar_select 0, %s10, %s8
  // Predicated region
  $region2: #{decoder.9} parent=0 // pred_check
    _
  $region3: #{decoder.9} parent=0 // pred_check_branch
    %13 = sbr.rel (0) target = $region5
  $region4: #{decoder.9} parent=0 // pred_region
    _
  $region5: #{decoder.9} parent=0 // pred_fallthru
    _
  // Predicated region
  $region6: #{decoder.9} parent=0 // pred_check
    _
  $region7: #{decoder.9} parent=0 // pred_check_branch
    %15 = sbr.rel (0) target = $region9
  $region8: #{decoder.9} parent=0 // pred_region
    _
  $region9: #{decoder.9} parent=0 // pred_fallthru
    _
  // Predicated region
  $region10: #{decoder.9} parent=0 // pred_check
    _
  $region11: #{decoder.9} parent=0 // pred_check_branch
    %17 = sbr.rel (0) target = $region13
  $region12: #{decoder.9} parent=0 // pred_region
    _
  $region13: #{decoder.9} parent=0 // pred_fallthru
    _
  // Predicated region
  $region14: #{decoder.9} parent=0 // pred_check
    _
  $region15: #{decoder.9} parent=0 // pred_check_branch
    %19 = sbr.rel (0) target = $region17
  $region16: #{decoder.9} parent=0 // pred_region
    _
  $region17: #{decoder.9} parent=0 // pred_fallthru
    _
  // Predicated region
  $region18: #{decoder.9} parent=0 // pred_check
    _
  $region19: #{decoder.9} parent=0 // pred_check_branch
    %21 = sbr.rel (0) target = $region21
  $region20: #{decoder.9} parent=0 // pred_region
    _
  $region21: #{decoder.9} parent=0 // pred_fallthru
    _
  // Predicated region
  $region22: #{decoder.9} parent=0 // pred_check
    _
  $region23: #{decoder.9} parent=0 // pred_check_branch
    %23 = sbr.rel (0) target = $region25
  $region24: #{decoder.9} parent=0 // pred_region
    _
  $region25: #{decoder.9} parent=0 // pred_fallthru
    _
  // Predicated region
  $region26: #{decoder.9} parent=0 // pred_check
    _
  $region27: #{decoder.9} parent=0 // pred_check_branch
    %25 = sbr.rel (0) target = $region29
  $region28: #{decoder.9} parent=0 // pred_region
    _
  $region29: #{decoder.9} parent=0 // pred_fallthru
    _
  %v27 = vld [vmem:[%s0] sm:$0xff]
  %v28 = vld [vmem:[%s0 + $0x8] sm:$0xff]
  %v29 = vld [vmem:[%s1] sm:$0x1]
  %v30 = vld [vmem:[%s2] sm:$0x1]
  %vm31 = vcmask 261120
  %v32 = vsel %vm31, %v27, 0.0
  %33 = vadd.xlane.f32.xlu0 %v32
  %v34 = vpop.xlane.xlu0 %33
  %v35 = vsel %vm31, %v28, 0.0
  %36 = vadd.xlane.f32.xlu0 %v35
  %v37 = vpop.xlane.xlu0 %36
  %v38 = vrcp.pop 32.0
  %v39 = vmul.f32 32.0, %v38
  %v40 = vsub.f32 1.0, %v39
  %v41 = vmul.f32 %v38, %v40
  %v42 = vadd.f32 %v38, %v41
  %vm43 = vweird.f32 %v38
  %v44 = vsel %vm43, %v38, %v42
  %v45 = vmul.f32 %v34, %v44
  %v46 = vmul.f32 %v37, %v44
  %v47 = vsub.f32 %v27, %v45
  %v48 = vsub.f32 %v28, %v46
  %v49 = vmul.f32 %v47, %v47
  %v50 = vmul.f32 %v48, %v48
  %v51 = vsel %vm31, %v49, 0.0
  %52 = vadd.xlane.f32.xlu0 %v51
  %v53 = vpop.xlane.xlu0 %52
  %v54 = vsel %vm31, %v50, 0.0
  %55 = vadd.xlane.f32.xlu0 %v54
  %v56 = vpop.xlane.xlu0 %55
  %v57 = vrcp.pop 31.0
  %v58 = vmul.f32 31.0, %v57
  %v59 = vsub.f32 1.0, %v58
  %v60 = vmul.f32 %v57, %v59
  %v61 = vadd.f32 %v57, %v60
  %vm62 = vweird.f32 %v57
  %v63 = vsel %vm62, %v57, %v61
  %v64 = vmul.f32 %v53, %v63
  %v65 = vmul.f32 %v56, %v63
  %v67 = vperm.slane %v29, 0
  %v69 = vmul.f32 %v67, %v47
  %v70 = vmul.f32 %v67, %v48
  %v71 = vrsqrt.pop %v64
  %v72 = vmul.f32 %v71, %v64
  %v73 = vmul.f32 %v72, %v71
  %v74 = vmul.f32 0.5, %v73
  %v75 = vsub.f32 1.5, %v74
  %v76 = vmul.f32 %v71, %v75
  %v77 = vmul.f32 %v64, %v76
  %vm78 = vcmp.eq.f32.partialorder %v64, inf
  %v79 = vsel %vm78, %v64, %v77
  %vm80 = vcmp.eq.f32.partialorder %v64, 0.0
  %v81 = vand.u32 %v64, 2147483648
  %v82 = vsel %vm80, %v81, %v79
  %v83 = vrsqrt.pop %v65
  %v84 = vmul.f32 %v83, %v65
  %v85 = vmul.f32 %v84, %v83
  %v86 = vmul.f32 0.5, %v85
  %v87 = vsub.f32 1.5, %v86
  %v88 = vmul.f32 %v83, %v87
  %v89 = vmul.f32 %v65, %v88
  %vm90 = vcmp.eq.f32.partialorder %v65, inf
  %v91 = vsel %vm90, %v65, %v89
  %vm92 = vcmp.eq.f32.partialorder %v65, 0.0
  %v93 = vand.u32 %v65, 2147483648
  %v94 = vsel %vm92, %v93, %v91
  %v95 = vadd.f32 %v82, 1e-06
  %v96 = vadd.f32 %v94, 1e-06
  %v97 = vrcp.pop %v95
  %v98 = vmul.f32 %v95, %v97
  %v99 = vsub.f32 1.0, %v98
  %v100 = vmul.f32 %v97, %v99
  %v101 = vadd.f32 %v97, %v100
  %vm102 = vweird.f32 %v95
  %vm103 = vweird.f32 %v97
  %vm104 = vmor %vm102, %vm103
  %v105 = vsel %vm104, %v97, %v101
  %v106 = vand.u32 2147483647, %v95
  %vm107 = vcmp.eq.f32.partialorder %v106, 8.507059e+37
  %v108 = vand.u32 %v95, 2147483648
  %v109 = vor.u32 1.1754944e-38, %v108
  %v110 = vsel %vm107, %v109, %v105
  %v111 = vmul.f32 %v69, %v110
  %v112 = vrcp.pop %v96
  %v113 = vmul.f32 %v96, %v112
  %v114 = vsub.f32 1.0, %v113
  %v115 = vmul.f32 %v112, %v114
  %v116 = vadd.f32 %v112, %v115
  %vm117 = vweird.f32 %v96
  %vm118 = vweird.f32 %v112
  %vm119 = vmor %vm117, %vm118
  %v120 = vsel %vm119, %v112, %v116
  %v121 = vand.u32 2147483647, %v96
  %vm122 = vcmp.eq.f32.partialorder %v121, 8.507059e+37
  %v123 = vand.u32 %v96, 2147483648
  %v124 = vor.u32 1.1754944e-38, %v123
  %v125 = vsel %vm122, %v124, %v120
  %v126 = vmul.f32 %v70, %v125
  %v128 = vperm.slane %v30, 0
  %v130 = vadd.f32 %v111, %v128
  %v131 = vadd.f32 %v126, %v128
  %v132 = vpack.c.bf16 %v131, %v130
  %v133 = vld [vmem:[%s3] sm:$0xf]
  %v134 = vld [vmem:[%s3 + $0x4] sm:$0xf]
  %v135 = vld [vmem:[%s3 + $0x8] sm:$0xf]
  %v136 = vld [vmem:[%s3 + $0xc] sm:$0xf]
  %v137 = vld [vmem:[%s4] sm:$0x1]
  %v139 = vperm.slane %v137, 0
  %v145 = vunpack.c.l.b16 %v133
  %v146 = vunpack.c.l.b16 %v134
  %v147 = vunpack.c.l.b16 %v135
  %v148 = vunpack.c.l.b16 %v136
  %v149 = vpack.c.b16 %v146, %v145
  %v150 = vpack.c.b16 %v148, %v147
  %v154 = vsel %vm31, %v132, 0
  %156 = vmatpush.bf16.msra.mxu0 0
  %157 = vmatpush.bf16.msra.mxu0 0
  %158 = vmatpush.bf16.msra.mxu0 0
  %159 = vmatpush.bf16.msra.mxu0 0
  %160 = vmatpush.bf16.msra.mxu0 0
  %161 = vmatpush.bf16.msra.mxu0 0
  %162 = vmatpush.bf16.msra.mxu0 %v150
  %163 = vmatpush.bf16.msra.mxu0 %v149
  %164 = vmatmul.bf16.gmra.mxu0 %v154
  %v165 = vpop.f32.mrf.mxu0
  %v166 = vadd.f32 %v139, %v165
  %v167 = vpop.f32.mrf.mxu0
  %v168 = vadd.f32 %v139, %v167
  %169 = vdwg.mxu0
  %v170 = vmax.f32 %v166, 0.0
  %v171 = vmax.f32 %v168, 0.0
  %v172 = vpack.c.bf16 %v171, %v170
  %v173 = vld [vmem:[%s5] sm:$0xf]
  %v174 = vld [vmem:[%s5 + $0x4] sm:$0xf]
  %v175 = vld [vmem:[%s5 + $0x8] sm:$0xf]
  %v176 = vld [vmem:[%s5 + $0xc] sm:$0xf]
  %v177 = vld [vmem:[%s5 + $0x10] sm:$0xf]
  %v178 = vld [vmem:[%s5 + $0x14] sm:$0xf]
  %v179 = vld [vmem:[%s5 + $0x18] sm:$0xf]
  %v180 = vld [vmem:[%s5 + $0x1c] sm:$0xf]
  %v189 = vunpack.c.l.b16 %v173
  %v190 = vunpack.c.l.b16 %v174
  %v191 = vunpack.c.l.b16 %v175
  %v192 = vunpack.c.l.b16 %v176
  %v193 = vunpack.c.l.b16 %v177
  %v194 = vunpack.c.l.b16 %v178
  %v195 = vunpack.c.l.b16 %v179
  %v196 = vunpack.c.l.b16 %v180
  %v197 = vpack.c.b16 %v190, %v189
  %v198 = vpack.c.b16 %v192, %v191
  %v199 = vpack.c.b16 %v194, %v193
  %v200 = vpack.c.b16 %v196, %v195
  %vm205 = vcmask 523264
  %v207 = vsel %vm205, %v172, 0
  %209 = vmatpush.bf16.msra.mxu0 0
  %210 = vmatpush.bf16.msra.mxu0 0
  %211 = vmatpush.bf16.msra.mxu0 0
  %212 = vmatpush.bf16.msra.mxu0 0
  %213 = vmatpush.bf16.msra.mxu0 %v200
  %214 = vmatpush.bf16.msra.mxu0 %v199
  %215 = vmatpush.bf16.msra.mxu0 %v198
  %216 = vmatpush.bf16.msra.mxu0 %v197
  %217 = vmatmul.bf16.gmra.mxu0 %v207
  %v218 = vpop.f32.mrf.mxu0
  %v219 = vadd.f32 0.0, %v218
  %v220 = vpop.f32.mrf.mxu0
  %v221 = vadd.f32 0.0, %v220
  %222 = vdwg.mxu0
  %v223 = vadd.f32 %v27, %v219
  %v224 = vadd.f32 %v28, %v221
  %v225 = vld [vmem:[%s6] sm:$0x1]
  %v227 = vperm.slane %v225, 0
  %v229 = vadd.f32 %v223, %v227
  %v230 = vadd.f32 %v224, %v227
  %231 = vst.msk [vmem:[%s7] sm:$0xff] %vm31, %v229
  %232 = vst.msk [vmem:[%s7 + $0x8] sm:$0xff] %vm31, %v230
  // Predicated region
  $region30: #{decoder.9} parent=0 // pred_check
    _
  $region31: #{decoder.9} parent=0 // pred_check_branch
    %234 = sbr.rel (0) target = $region33
  $region32: #{decoder.9} parent=0 // pred_region
    _
  $region33: #{decoder.9} parent=0 // pred_fallthru
    _
  // Predicated region
  $region34: #{decoder.9} parent=0 // pred_check
    _
  $region35: #{decoder.9} parent=0 // pred_check_branch
    %236 = sbr.rel (0) target = $region37
  $region36: #{decoder.9} parent=0 // pred_region
    _
  $region37: #{decoder.9} parent=0 // pred_fallthru
    _

// kernel: decoder.8
$region0: #{decoder.8}
  #allocation0 [shape = 'u32[]', space=smem, size = 0x4, offset = 0x4, fixed_abs, tag = 'smem constant byte address 0x4 - core index']
  #allocation1 [shape = 'u32[72,128]{1,0:T(1,128)}', space=vmem, size = 0x9000, scoped, tag = 'internal scratch']
  #allocation2 [shape = 'bf16[8,32]{1,0:T(8,128)(2,1)}', space=vmem, size = 0x800, scoped, tag = 'scratch operand']
  %s0 = inlined_call_operand.vmem [shape: f32[2,8,32], index: 0, kind: input, shape index: {}]
  %s1 = inlined_call_operand.vmem [shape: f32[2,8,32], index: 1, kind: input, shape index: {}]
  %s2 = inlined_call_operand.vmem [shape: f32[2,8,8], index: 2, kind: input, shape index: {}]
  %s3 = inlined_call_operand.vmem [shape: f32[1,32], index: 3, kind: input, shape index: {}]
  %s4 = inlined_call_operand.vmem [shape: f32[1,32], index: 4, kind: input, shape index: {}]
  %s5 = inlined_call_operand.vmem [shape: bf16[32,32], index: 5, kind: input, shape index: {}]
  %s6 = inlined_call_operand.vmem [shape: f32[1,32], index: 6, kind: input, shape index: {}]
  %s7 = inlined_call_operand.vmem [shape: bf16[32,64], index: 7, kind: input, shape index: {}]
  %s8 = inlined_call_operand.vmem [shape: f32[1,64], index: 8, kind: input, shape index: {}]
  %s9 = inlined_call_operand.vmem [shape: bf16[32,32], index: 9, kind: input, shape index: {}]
  %s10 = inlined_call_operand.vmem [shape: f32[1,32], index: 10, kind: input, shape index: {}]
  %s11 = inlined_call_operand.vmem [shape: f32[2,8,32], index: 11, kind: output, shape index: {}]
  %s12 = sld [smem:[#allocation0]]
  $region77: #{decoder.8} parent=0
    _
  %s14 = ssub.s32 1, %s12
  %s15 = scalar_select 0, %s14, %s12
  loop: start=0, step=1, limit=4
  $region2: #{decoder.8} parent=0 // loop_pre_header
    _
  $region3: #{decoder.8} parent=0 // loop_header
    %s17 = sphi 0, %s21
    %p18 = scmp.ge.s32.totalorder %s17, 4
    %s24 = sphi 0, %s36
    %s25 = sphi 0, %s32
    %s26 = sphi 0, %s24
    %s27 = sphi 0, %s25
    %s28 = sphi 0, %s26
    %s29 = sphi 0, %s27
    %s41 = sphi 0, %s43
    %s44 = sphi 0, %s41
    %s45 = sphi 0, %s44
    %s61 = sphi 0, %s45
    %s67 = sphi 0, %s69
    %s70 = sphi 0, %s67
    %s71 = sphi 0, %s70
    %s87 = sphi 0, %s71
    %s95 = sphi 0, %s97
    %s98 = sphi 0, %s95
    %s99 = sphi 0, %s98
    %s115 = sphi 0, %s99
    %s119 = sphi 0, %s119
    %s121 = sphi 0, %s119
    %s122 = sphi 0, %s121
    %s136 = sphi 0, %s122
    %s140 = sphi 0, %s140
    %s142 = sphi 0, %s140
    %s143 = sphi 0, %s142
    %s157 = sphi 0, %s143
    %s161 = sphi 0, %s161
    %s163 = sphi 0, %s161
    %s164 = sphi 0, %s163
    %s178 = sphi 0, %s164
    %s182 = sphi 0, %s182
    %s184 = sphi 0, %s182
    %s185 = sphi 0, %s184
    %s199 = sphi 0, %s185
    %s203 = sphi 0, %s203
    %s205 = sphi 0, %s203
    %s206 = sphi 0, %s205
    %s220 = sphi 0, %s206
    %s224 = sphi 0, %s224
    %s226 = sphi 0, %s224
    %s227 = sphi 0, %s226
    %s241 = sphi 0, %s227
    %s245 = sphi 0, %s245
    %s247 = sphi 0, %s245
    %s248 = sphi 0, %s247
    %s262 = sphi 0, %s248
    %s266 = sphi 0, %s266
    %s268 = sphi 0, %s266
    %s269 = sphi 0, %s268
    %s283 = sphi 0, %s269
    %s291 = sphi 0, %s293
    %s294 = sphi 0, %s291
    %s295 = sphi 0, %s294
    %s311 = sphi 0, %s295
  $region4: #{decoder.8} parent=0 // loop_header_branch
    %20 = sbr.rel (%p18) target = $region8
  $region5: #{decoder.8} parent=0 // loop_body
    %s22 = ssub.s32 %s17, 1
    %s23 = ssub.s32 %s17, 2
    %s30 = sadd.s32 1, %s25
    %p31 = scmp.ge.s32.totalorder %s30, 1
    %s32 = scalar_select %p31, 0, %s30
    %s33 = sadd.s32 1, %s24
    %s34 = scalar_select %p31, %s33, %s24
    %p35 = scmp.ge.s32.totalorder %s34, 2
    %s36 = scalar_select %p35, 0, %s34
    %s37 = ssub.s32 %s24, %s36
    %s38 = ssub.s32 %s25, %s32
    %s39 = sor.u32 %s37, %s38
    %p40 = scmp.eq.s32.totalorder %s39, 0
    %s42 = sadd.s32 %s41, 1
    %s43 = scalar_select %p40, %s41, %s42
    %p46 = pneg %p40
    %p47 = scmp.eq.s32.totalorder %s17, 1
    %p48 = por %p46, %p47
    %p49 = scmp.ne.s32.totalorder %s41, %s44
    %p50 = scmp.eq.s32.totalorder %s17, 0
    %p51 = por %p49, %p50
    %p52 = scmp.ne.s32.totalorder %s41, %s44
    %p53 = scmp.eq.s32.totalorder %s22, 1
    %p54 = por %p52, %p53
    %p55 = scmp.ne.s32.totalorder %s44, %s45
    %p56 = scmp.eq.s32.totalorder %s22, 0
    %p57 = por %p55, %p56
    %p58 = scmp.ne.s32.totalorder %s44, %s45
    %p59 = scmp.eq.s32.totalorder %s23, 1
    %p60 = por %p58, %p59
    %p62 = scmp.ne.s32.totalorder %s45, %s61
    %p63 = scmp.eq.s32.totalorder %s23, 0
    %p64 = por %p62, %p63
    %s65 = ssub.s32 %s24, %s36
    %p66 = scmp.eq.s32.totalorder %s65, 0
    %s68 = sadd.s32 %s67, 1
    %s69 = scalar_select %p66, %s67, %s68
    %p72 = pneg %p66
    %p73 = scmp.eq.s32.totalorder %s17, 1
    %p74 = por %p72, %p73
    %p75 = scmp.ne.s32.totalorder %s67, %s70
    %p76 = scmp.eq.s32.totalorder %s17, 0
    %p77 = por %p75, %p76
    %p78 = scmp.ne.s32.totalorder %s67, %s70
    %p79 = scmp.eq.s32.totalorder %s22, 1
    %p80 = por %p78, %p79
    %p81 = scmp.ne.s32.totalorder %s70, %s71
    %p82 = scmp.eq.s32.totalorder %s22, 0
    %p83 = por %p81, %p82
    %p84 = scmp.ne.s32.totalorder %s70, %s71
    %p85 = scmp.eq.s32.totalorder %s23, 1
    %p86 = por %p84, %p85
    %p88 = scmp.ne.s32.totalorder %s71, %s87
    %p89 = scmp.eq.s32.totalorder %s23, 0
    %p90 = por %p88, %p89
    %s91 = ssub.s32 %s24, %s36
    %s92 = ssub.s32 %s25, %s32
    %s93 = sor.u32 %s91, %s92
    %p94 = scmp.eq.s32.totalorder %s93, 0
    %s96 = sadd.s32 %s95, 1
    %s97 = scalar_select %p94, %s95, %s96
    %p100 = pneg %p94
    %p101 = scmp.eq.s32.totalorder %s17, 1
    %p102 = por %p100, %p101
    %p103 = scmp.ne.s32.totalorder %s95, %s98
    %p104 = scmp.eq.s32.totalorder %s17, 0
    %p105 = por %p103, %p104
    %p106 = scmp.ne.s32.totalorder %s95, %s98
    %p107 = scmp.eq.s32.totalorder %s22, 1
    %p108 = por %p106, %p107
    %p109 = scmp.ne.s32.totalorder %s98, %s99
    %p110 = scmp.eq.s32.totalorder %s22, 0
    %p111 = por %p109, %p110
    %p112 = scmp.ne.s32.totalorder %s98, %s99
    %p113 = scmp.eq.s32.totalorder %s23, 1
    %p114 = por %p112, %p113
    %p116 = scmp.ne.s32.totalorder %s99, %s115
    %p117 = scmp.eq.s32.totalorder %s23, 0
    %p118 = por %p116, %p117
    %s120 = sadd.s32 %s119, 1
    %p123 = scmp.eq.s32.totalorder %s17, 1
    %p124 = scmp.ne.s32.totalorder %s119, %s121
    %p125 = scmp.eq.s32.totalorder %s17, 0
    %p126 = por %p124, %p125
    %p127 = scmp.ne.s32.totalorder %s119, %s121
    %p128 = scmp.eq.s32.totalorder %s22, 1
    %p129 = por %p127, %p128
    %p130 = scmp.ne.s32.totalorder %s121, %s122
    %p131 = scmp.eq.s32.totalorder %s22, 0
    %p132 = por %p130, %p131
    %p133 = scmp.ne.s32.totalorder %s121, %s122
    %p134 = scmp.eq.s32.totalorder %s23, 1
    %p135 = por %p133, %p134
    %p137 = scmp.ne.s32.totalorder %s122, %s136
    %p138 = scmp.eq.s32.totalorder %s23, 0
    %p139 = por %p137, %p138
    %s141 = sadd.s32 %s140, 1
    %p144 = scmp.eq.s32.totalorder %s17, 1
    %p145 = scmp.ne.s32.totalorder %s140, %s142
    %p146 = scmp.eq.s32.totalorder %s17, 0
    %p147 = por %p145, %p146
    %p148 = scmp.ne.s32.totalorder %s140, %s142
    %p149 = scmp.eq.s32.totalorder %s22, 1
    %p150 = por %p148, %p149
    %p151 = scmp.ne.s32.totalorder %s142, %s143
    %p152 = scmp.eq.s32.totalorder %s22, 0
    %p153 = por %p151, %p152
    %p154 = scmp.ne.s32.totalorder %s142, %s143
    %p155 = scmp.eq.s32.totalorder %s23, 1
    %p156 = por %p154, %p155
    %p158 = scmp.ne.s32.totalorder %s143, %s157
    %p159 = scmp.eq.s32.totalorder %s23, 0
    %p160 = por %p158, %p159
    %s162 = sadd.s32 %s161, 1
    %p165 = scmp.eq.s32.totalorder %s17, 1
    %p166 = scmp.ne.s32.totalorder %s161, %s163
    %p167 = scmp.eq.s32.totalorder %s17, 0
    %p168 = por %p166, %p167
    %p169 = scmp.ne.s32.totalorder %s161, %s163
    %p170 = scmp.eq.s32.totalorder %s22, 1
    %p171 = por %p169, %p170
    %p172 = scmp.ne.s32.totalorder %s163, %s164
    %p173 = scmp.eq.s32.totalorder %s22, 0
    %p174 = por %p172, %p173
    %p175 = scmp.ne.s32.totalorder %s163, %s164
    %p176 = scmp.eq.s32.totalorder %s23, 1
    %p177 = por %p175, %p176
    %p179 = scmp.ne.s32.totalorder %s164, %s178
    %p180 = scmp.eq.s32.totalorder %s23, 0
    %p181 = por %p179, %p180
    %s183 = sadd.s32 %s182, 1
    %p186 = scmp.eq.s32.totalorder %s17, 1
    %p187 = scmp.ne.s32.totalorder %s182, %s184
    %p188 = scmp.eq.s32.totalorder %s17, 0
    %p189 = por %p187, %p188
    %p190 = scmp.ne.s32.totalorder %s182, %s184
    %p191 = scmp.eq.s32.totalorder %s22, 1
    %p192 = por %p190, %p191
    %p193 = scmp.ne.s32.totalorder %s184, %s185
    %p194 = scmp.eq.s32.totalorder %s22, 0
    %p195 = por %p193, %p194
    %p196 = scmp.ne.s32.totalorder %s184, %s185
    %p197 = scmp.eq.s32.totalorder %s23, 1
    %p198 = por %p196, %p197
    %p200 = scmp.ne.s32.totalorder %s185, %s199
    %p201 = scmp.eq.s32.totalorder %s23, 0
    %p202 = por %p200, %p201
    %s204 = sadd.s32 %s203, 1
    %p207 = scmp.eq.s32.totalorder %s17, 1
    %p208 = scmp.ne.s32.totalorder %s203, %s205
    %p209 = scmp.eq.s32.totalorder %s17, 0
    %p210 = por %p208, %p209
    %p211 = scmp.ne.s32.totalorder %s203, %s205
    %p212 = scmp.eq.s32.totalorder %s22, 1
    %p213 = por %p211, %p212
    %p214 = scmp.ne.s32.totalorder %s205, %s206
    %p215 = scmp.eq.s32.totalorder %s22, 0
    %p216 = por %p214, %p215
    %p217 = scmp.ne.s32.totalorder %s205, %s206
    %p218 = scmp.eq.s32.totalorder %s23, 1
    %p219 = por %p217, %p218
    %p221 = scmp.ne.s32.totalorder %s206, %s220
    %p222 = scmp.eq.s32.totalorder %s23, 0
    %p223 = por %p221, %p222
    %s225 = sadd.s32 %s224, 1
    %p228 = scmp.eq.s32.totalorder %s17, 1
    %p229 = scmp.ne.s32.totalorder %s224, %s226
    %p230 = scmp.eq.s32.totalorder %s17, 0
    %p231 = por %p229, %p230
    %p232 = scmp.ne.s32.totalorder %s224, %s226
    %p233 = scmp.eq.s32.totalorder %s22, 1
    %p234 = por %p232, %p233
    %p235 = scmp.ne.s32.totalorder %s226, %s227
    %p236 = scmp.eq.s32.totalorder %s22, 0
    %p237 = por %p235, %p236
    %p238 = scmp.ne.s32.totalorder %s226, %s227
    %p239 = scmp.eq.s32.totalorder %s23, 1
    %p240 = por %p238, %p239
    %p242 = scmp.ne.s32.totalorder %s227, %s241
    %p243 = scmp.eq.s32.totalorder %s23, 0
    %p244 = por %p242, %p243
    %s246 = sadd.s32 %s245, 1
    %p249 = scmp.eq.s32.totalorder %s17, 1
    %p250 = scmp.ne.s32.totalorder %s245, %s247
    %p251 = scmp.eq.s32.totalorder %s17, 0
    %p252 = por %p250, %p251
    %p253 = scmp.ne.s32.totalorder %s245, %s247
    %p254 = scmp.eq.s32.totalorder %s22, 1
    %p255 = por %p253, %p254
    %p256 = scmp.ne.s32.totalorder %s247, %s248
    %p257 = scmp.eq.s32.totalorder %s22, 0
    %p258 = por %p256, %p257
    %p259 = scmp.ne.s32.totalorder %s247, %s248
    %p260 = scmp.eq.s32.totalorder %s23, 1
    %p261 = por %p259, %p260
    %p263 = scmp.ne.s32.totalorder %s248, %s262
    %p264 = scmp.eq.s32.totalorder %s23, 0
    %p265 = por %p263, %p264
    %s267 = sadd.s32 %s266, 1
    %p270 = scmp.eq.s32.totalorder %s17, 1
    %p271 = scmp.ne.s32.totalorder %s266, %s268
    %p272 = scmp.eq.s32.totalorder %s17, 0
    %p273 = por %p271, %p272
    %p274 = scmp.ne.s32.totalorder %s266, %s268
    %p275 = scmp.eq.s32.totalorder %s22, 1
    %p276 = por %p274, %p275
    %p277 = scmp.ne.s32.totalorder %s268, %s269
    %p278 = scmp.eq.s32.totalorder %s22, 0
    %p279 = por %p277, %p278
    %p280 = scmp.ne.s32.totalorder %s268, %s269
    %p281 = scmp.eq.s32.totalorder %s23, 1
    %p282 = por %p280, %p281
    %p284 = scmp.ne.s32.totalorder %s269, %s283
    %p285 = scmp.eq.s32.totalorder %s23, 0
    %p286 = por %p284, %p285
    %s287 = ssub.s32 %s24, %s36
    %s288 = ssub.s32 %s25, %s32
    %s289 = sor.u32 %s287, %s288
    %p290 = scmp.eq.s32.totalorder %s289, 0
    %s292 = sadd.s32 %s291, 1
    %s293 = scalar_select %p290, %s291, %s292
    %p296 = pneg %p290
    %p297 = scmp.eq.s32.totalorder %s17, 1
    %p298 = por %p296, %p297
    %p299 = scmp.ne.s32.totalorder %s291, %s294
    %p300 = scmp.eq.s32.totalorder %s17, 0
    %p301 = por %p299, %p300
    %p302 = scmp.ne.s32.totalorder %s291, %s294
    %p303 = scmp.eq.s32.totalorder %s22, 1
    %p304 = por %p302, %p303
    %p305 = scmp.ne.s32.totalorder %s294, %s295
    %p306 = scmp.eq.s32.totalorder %s22, 0
    %p307 = por %p305, %p306
    %p308 = scmp.ne.s32.totalorder %s294, %s295
    %p309 = scmp.eq.s32.totalorder %s23, 1
    %p310 = por %p308, %p309
    %p312 = scmp.ne.s32.totalorder %s295, %s311
    %p313 = scmp.eq.s32.totalorder %s23, 0
    %p314 = por %p312, %p313
    %p315 = scmp.le.s32.totalorder 1, %s17
    %p316 = scmp.lt.s32.totalorder %s17, 3
    %p317 = pnand %p315, %p316
    %p318 = pneg %p317
    // Predicated region
    $region9: #{decoder.8} parent=5 // pred_check
      _
    $region10: #{decoder.8} parent=5 // pred_check_branch
      %320 = sbr.rel (%p317) target = $region12
    $region11: #{decoder.8} parent=5 // pred_region
      %s321 = ssub.s32 %s17, 1
      // Predicated region
      $region13: #{decoder.8} parent=11 // pred_check
        %p322 = pneg %p132
      $region14: #{decoder.8} parent=11 // pred_check_branch
        %324 = sbr.rel (%p322) target = $region16
      $region15: #{decoder.8} parent=11 // pred_region
        _
      $region16: #{decoder.8} parent=11 // pred_fallthru
        _
      // Predicated region
      $region17: #{decoder.8} parent=11 // pred_check
        %p325 = pneg %p153
      $region18: #{decoder.8} parent=11 // pred_check_branch
        %327 = sbr.rel (%p325) target = $region20
      $region19: #{decoder.8} parent=11 // pred_region
        _
      $region20: #{decoder.8} parent=11 // pred_fallthru
        _
      // Predicated region
      $region21: #{decoder.8} parent=11 // pred_check
        %p328 = pneg %p174
      $region22: #{decoder.8} parent=11 // pred_check_branch
        %330 = sbr.rel (%p328) target = $region24
      $region23: #{decoder.8} parent=11 // pred_region
        _
      $region24: #{decoder.8} parent=11 // pred_fallthru
        _
      // Predicated region
      $region25: #{decoder.8} parent=11 // pred_check
        %p331 = pneg %p195
      $region26: #{decoder.8} parent=11 // pred_check_branch
        %333 = sbr.rel (%p331) target = $region28
      $region27: #{decoder.8} parent=11 // pred_region
        _
      $region28: #{decoder.8} parent=11 // pred_fallthru
        _
      // Predicated region
      $region29: #{decoder.8} parent=11 // pred_check
        %p334 = pneg %p216
      $region30: #{decoder.8} parent=11 // pred_check_branch
        %336 = sbr.rel (%p334) target = $region32
      $region31: #{decoder.8} parent=11 // pred_region
        _
      $region32: #{decoder.8} parent=11 // pred_fallthru
        _
      // Predicated region
      $region33: #{decoder.8} parent=11 // pred_check
        %p337 = pneg %p237
      $region34: #{decoder.8} parent=11 // pred_check_branch
        %339 = sbr.rel (%p337) target = $region36
      $region35: #{decoder.8} parent=11 // pred_region
        _
      $region36: #{decoder.8} parent=11 // pred_fallthru
        _
      // Predicated region
      $region37: #{decoder.8} parent=11 // pred_check
        %p340 = pneg %p258
      $region38: #{decoder.8} parent=11 // pred_check_branch
        %342 = sbr.rel (%p340) target = $region40
      $region39: #{decoder.8} parent=11 // pred_region
        _
      $region40: #{decoder.8} parent=11 // pred_fallthru
        _
      // Predicated region
      $region41: #{decoder.8} parent=11 // pred_check
        %p343 = pneg %p279
      $region42: #{decoder.8} parent=11 // pred_check_branch
        %345 = sbr.rel (%p343) target = $region44
      $region43: #{decoder.8} parent=11 // pred_region
        _
      $region44: #{decoder.8} parent=11 // pred_fallthru
        _
    $region12: #{decoder.8} parent=5 // pred_fallthru
      _
    %p346 = scmp.lt.s32.totalorder %s17, 2
    // Predicated region
    $region45: #{decoder.8} parent=5 // pred_check
      %p347 = pneg %p346
    $region46: #{decoder.8} parent=5 // pred_check_branch
      %349 = sbr.rel (%p347) target = $region48
    $region47: #{decoder.8} parent=5 // pred_region
      // Predicated region
      $region49: #{decoder.8} parent=47 // pred_check
        %p350 = pneg %p51
      $region50: #{decoder.8} parent=47 // pred_check_branch
        %352 = sbr.rel (%p350) target = $region52
      $region51: #{decoder.8} parent=47 // pred_region
        %p353 = scmp.lt.s32.totalorder %s24, 1
        %s354 = scalar_select %p353, %s24, 1
        %p355 = scmp.lt.s32.totalorder %s25, 0
        %s356 = scalar_select %p355, %s25, 0
        %s357 = sadd.s32 %s356, %s354
        %s358 = smul.addr %s357, 8
        %s359 = scalar_lea.vmem %s0, %s358
      $region52: #{decoder.8} parent=47 // pred_fallthru
        _
      // Predicated region
      $region53: #{decoder.8} parent=47 // pred_check
        %p360 = pneg %p77
      $region54: #{decoder.8} parent=47 // pred_check_branch
        %362 = sbr.rel (%p360) target = $region56
      $region55: #{decoder.8} parent=47 // pred_region
        %p363 = scmp.lt.s32.totalorder %s24, 1
        %s364 = scalar_select %p363, %s24, 1
        %s365 = smul.addr %s364, 8
        %s366 = scalar_lea.vmem %s1, %s365
      $region56: #{decoder.8} parent=47 // pred_fallthru
        _
      // Predicated region
      $region57: #{decoder.8} parent=47 // pred_check
        %p367 = pneg %p105
      $region58: #{decoder.8} parent=47 // pred_check_branch
        %369 = sbr.rel (%p367) target = $region60
      $region59: #{decoder.8} parent=47 // pred_region
        %p370 = scmp.lt.s32.totalorder %s24, 1
        %s371 = scalar_select %p370, %s24, 1
        %p372 = scmp.lt.s32.totalorder %s25, 0
        %s373 = scalar_select %p372, %s25, 0
        %s374 = sadd.s32 %s373, %s371
        %s375 = smul.addr %s374, 8
        %s376 = scalar_lea.vmem %s2, %s375
      $region60: #{decoder.8} parent=47 // pred_fallthru
        _
    $region48: #{decoder.8} parent=5 // pred_fallthru
      _
    %p377 = scmp.le.s32.totalorder 1, %s17
    %p378 = scmp.lt.s32.totalorder %s17, 3
    %p379 = pnand %p377, %p378
    %p380 = pneg %p379
    // Predicated region
    $region61: #{decoder.8} parent=5 // pred_check
      _
    $region62: #{decoder.8} parent=5 // pred_check_branch
      %382 = sbr.rel (%p379) target = $region64
    $region63: #{decoder.8} parent=5 // pred_region
      %s383 = ssub.s32 %s17, 1
      %p384 = scmp.lt.s32.totalorder %s26, 1
      %s385 = scalar_select %p384, %s26, 1
      %p386 = scmp.lt.s32.totalorder %s27, 0
      %s387 = scalar_select %p386, %s27, 0
      %s388 = sadd.s32 %s387, %s385
      %s389 = smul.addr %s388, 8
      %s390 = scalar_lea.vmem %s0, %s389
      %p391 = pneg %p57
      %p392 = pneg %p54
      %p393 = scmp.lt.s32.totalorder %s26, 1
      %s394 = scalar_select %p393, %s26, 1
      %s395 = smul.addr %s394, 8
      %s396 = scalar_lea.vmem %s1, %s395
      %p397 = pneg %p83
      %p398 = pneg %p80
      %p399 = scmp.lt.s32.totalorder %s26, 1
      %s400 = scalar_select %p399, %s26, 1
      %p401 = scmp.lt.s32.totalorder %s27, 0
      %s402 = scalar_select %p401, %s27, 0
      %s403 = sadd.s32 %s402, %s400
      %s404 = smul.addr %s403, 8
      %s405 = scalar_lea.vmem %s2, %s404
      %p406 = pneg %p111
      %p407 = pneg %p108
      %p408 = pneg %p132
      %p409 = pneg %p129
      %p410 = pneg %p153
      %p411 = pneg %p150
      %p412 = pneg %p174
      %p413 = pneg %p171
      %p414 = pneg %p195
      %p415 = pneg %p192
      %p416 = pneg %p216
      %p417 = pneg %p213
      %p418 = pneg %p237
      %p419 = pneg %p234
      %p420 = pneg %p258
      %p421 = pneg %p255
      %p422 = pneg %p279
      %p423 = pneg %p276
      %p424 = pneg %p307
      %p425 = pneg %p304
      %p426 = scmp.lt.s32.totalorder %s26, 1
      %s427 = scalar_select %p426, %s26, 1
      %p428 = scmp.lt.s32.totalorder %s27, 0
      %s429 = scalar_select %p428, %s27, 0
      %s430 = sadd.s32 %s429, %s427
      %s431 = smul.addr %s430, 8
      %s432 = scalar_lea.vmem %s11, %s431
      %p433 = scmp.lt.s32.totalorder %s26, 1
      %s434 = scalar_select %p433, %s26, 1
      %p435 = scmp.lt.s32.totalorder %s27, 0
      %s436 = scalar_select %p435, %s27, 0
      %s437 = sadd.s32 %s436, %s434
      %s438 = smul.addr %s437, 8
      %s439 = scalar_lea.vmem %s0, %s438
      %p440 = scmp.lt.s32.totalorder %s26, 1
      %s441 = scalar_select %p440, %s26, 1
      %s442 = smul.addr %s441, 8
      %s443 = scalar_lea.vmem %s1, %s442
      %p444 = scmp.lt.s32.totalorder %s26, 1
      %s445 = scalar_select %p444, %s26, 1
      %p446 = scmp.lt.s32.totalorder %s27, 0
      %s447 = scalar_select %p446, %s27, 0
      %s448 = sadd.s32 %s447, %s445
      %s449 = smul.addr %s448, 8
      %s450 = scalar_lea.vmem %s2, %s449
      %p451 = scmp.lt.s32.totalorder %s26, 1
      %s452 = scalar_select %p451, %s26, 1
      %p453 = scmp.lt.s32.totalorder %s27, 0
      %s454 = scalar_select %p453, %s27, 0
      %s455 = sadd.s32 %s454, %s452
      %s456 = smul.addr %s455, 8
      %s457 = scalar_lea.vmem %s11, %s456
      %v459 = vld [vmem:[%s439] sm:$0xff]
      %v460 = vld [vmem:[%s3] sm:$0x1]
      %v461 = vld [vmem:[%s4] sm:$0x1]
      %vm462 = vcmask 261120
      %v463 = vsel %vm462, %v459, 0.0
      %464 = vadd.xlane.f32.xlu0 %v463
      %v465 = vpop.xlane.xlu0 %464
      %v466 = vrcp.pop 32.0
      %v467 = vmul.f32 32.0, %v466
      %v468 = vsub.f32 1.0, %v467
      %v469 = vmul.f32 %v466, %v468
      %v470 = vadd.f32 %v466, %v469
      %vm471 = vweird.f32 %v466
      %v472 = vsel %vm471, %v466, %v470
      %v473 = vmul.f32 %v465, %v472
      %v474 = vsub.f32 %v459, %v473
      %v475 = vmul.f32 %v474, %v474
      %v476 = vsel %vm462, %v475, 0.0
      %477 = vadd.xlane.f32.xlu0 %v476
      %v478 = vpop.xlane.xlu0 %477
      %v479 = vrcp.pop 31.0
      %v480 = vmul.f32 31.0, %v479
      %v481 = vsub.f32 1.0, %v480
      %v482 = vmul.f32 %v479, %v481
      %v483 = vadd.f32 %v479, %v482
      %vm484 = vweird.f32 %v479
      %v485 = vsel %vm484, %v479, %v483
      %v486 = vmul.f32 %v478, %v485
      %v488 = vperm.slane %v460, 0
      %v490 = vmul.f32 %v488, %v474
      %v491 = vrsqrt.pop %v486
      %v492 = vmul.f32 %v491, %v486
      %v493 = vmul.f32 %v492, %v491
      %v494 = vmul.f32 0.5, %v493
      %v495 = vsub.f32 1.5, %v494
      %v496 = vmul.f32 %v491, %v495
      %v497 = vmul.f32 %v486, %v496
      %vm498 = vcmp.eq.f32.partialorder %v486, inf
      %v499 = vsel %vm498, %v486, %v497
      %vm500 = vcmp.eq.f32.partialorder %v486, 0.0
      %v501 = vand.u32 %v486, 2147483648
      %v502 = vsel %vm500, %v501, %v499
      %v503 = vadd.f32 %v502, 1e-06
      %v504 = vrcp.pop %v503
      %v505 = vmul.f32 %v503, %v504
      %v506 = vsub.f32 1.0, %v505
      %v507 = vmul.f32 %v504, %v506
      %v508 = vadd.f32 %v504, %v507
      %vm509 = vweird.f32 %v503
      %vm510 = vweird.f32 %v504
      %vm511 = vmor %vm509, %vm510
      %v512 = vsel %vm511, %v504, %v508
      %v513 = vand.u32 2147483647, %v503
      %vm514 = vcmp.eq.f32.partialorder %v513, 8.507059e+37
      %v515 = vand.u32 %v503, 2147483648
      %v516 = vor.u32 1.1754944e-38, %v515
      %v517 = vsel %vm514, %v516, %v512
      %v518 = vmul.f32 %v490, %v517
      %v520 = vperm.slane %v461, 0
      %v522 = vadd.f32 %v518, %v520
      %v523 = vld [vmem:[%s443] sm:$0xff]
      %v524 = vpack.c.bf16 %v522, %v522
      %v525 = vld [vmem:[%s5] sm:$0xf]
      %v526 = vld [vmem:[%s5 + $0x4] sm:$0xf]
      %v527 = vld [vmem:[%s5 + $0x8] sm:$0xf]
      %v528 = vld [vmem:[%s5 + $0xc] sm:$0xf]
      %v529 = vld [vmem:[%s6] sm:$0x1]
      %v531 = vperm.slane %v529, 0
      %v537 = vunpack.c.l.b16 %v525
      %v538 = vunpack.c.l.b16 %v526
      %v539 = vunpack.c.l.b16 %v527
      %v540 = vunpack.c.l.b16 %v528
      %v541 = vpack.c.b16 %v538, %v537
      %v542 = vpack.c.b16 %v540, %v539
      %v546 = vsel %vm462, %v524, 0
      %548 = vmatpush.bf16.msra.mxu0 0
      %549 = vmatpush.bf16.msra.mxu0 0
      %550 = vmatpush.bf16.msra.mxu0 0
      %551 = vmatpush.bf16.msra.mxu0 0
      %552 = vmatpush.bf16.msra.mxu0 0
      %553 = vmatpush.bf16.msra.mxu0 0
      %554 = vmatpush.bf16.msra.mxu0 %v542
      %555 = vmatpush.bf16.msra.mxu0 %v541
      %556 = vmatmul.bf16.gmra.mxu0 %v546
      %v557 = vpop.f32.mrf.mxu0
      %v558 = vadd.f32 %v531, %v557
      %v559 = vpop.f32.mrf.mxu0
      %560 = vdwg.mxu0
      %v561 = vmul.f32 %v558, 0.35355338
      %v562 = vpack.c.bf16 %v523, %v523
      %v563 = vld [vmem:[%s7] sm:$0xf]
      %v564 = vld [vmem:[%s7 + $0x4] sm:$0xf]
      %v565 = vld [vmem:[%s7 + $0x8] sm:$0xf]
      %v566 = vld [vmem:[%s7 + $0xc] sm:$0xf]
      %v567 = vld [vmem:[%s8] sm:$0x1]
      %v569 = vperm.slane %v567, 0
      %v575 = vunpack.c.l.b16 %v563
      %v576 = vunpack.c.l.b16 %v564
      %v577 = vunpack.c.l.b16 %v565
      %v578 = vunpack.c.l.b16 %v566
      %v579 = vpack.c.b16 %v576, %v575
      %v580 = vpack.c.b16 %v578, %v577
      %v584 = vsel %vm462, %v562, 0
      %586 = vmatpush.bf16.msra.mxu0 0
      %587 = vmatpush.bf16.msra.mxu0 0
      %588 = vmatpush.bf16.msra.mxu0 0
      %589 = vmatpush.bf16.msra.mxu0 0
      %590 = vmatpush.bf16.msra.mxu0 0
      %591 = vmatpush.bf16.msra.mxu0 0
      %592 = vmatpush.bf16.msra.mxu0 %v580
      %593 = vmatpush.bf16.msra.mxu0 %v579
      %594 = vmatmul.bf16.gmra.mxu0 %v584
      %v595 = vpop.f32.mrf.mxu0
      %v596 = vadd.f32 %v569, %v595
      %v597 = vpop.f32.mrf.mxu0
      %598 = vdwg.mxu0
      %v599 = vpack.c.bf16 %v561, %v561
      %v600 = vpack.c.bf16 %v596, %v596
      %v601 = vld [vmem:[%s450] sm:$0xff]
      %vm602 = vcmask 64512
      %v604 = vsel %vm602, %v599, 0
      %v607 = vsel %vm602, %v600, 0
      %609 = vmatpush.bf16.xpose.msra.mxu0 0
      %610 = vmatpush.bf16.xpose.msra.mxu0 0
      %611 = vmatpush.bf16.xpose.msra.mxu0 0
      %612 = vmatpush.bf16.xpose.msra.mxu0 0
      %613 = vmatpush.bf16.xpose.msra.mxu0 0
      %614 = vmatpush.bf16.xpose.msra.mxu0 0
      %615 = vmatpush.bf16.xpose.msra.mxu0 0
      %616 = vmatpush.bf16.xpose.msra.mxu0 %v607
      %617 = vmatmul.bf16.gmra.mxu0 %v604
      %v618 = vpop.f32.mrf.mxu0
      %v619 = vadd.f32 %v601, %v618
      %v620 = vpop.f32.mrf.mxu0
      %621 = vdwg.mxu0
      %v622 = vsel %vm602, %v619, -inf
      %623 = vmax.xlane.f32.xlu0 %v622
      %v624 = vpop.xlane.xlu0 %623
      %v625 = vsub.f32 %v619, %v624
      %v626 = vmul.f32 %v625, 1.442695
      %v627 = vpow.pop %v626
      %v628 = vsel %vm602, %v627, 0.0
      %629 = vadd.xlane.f32.xlu0 %v628
      %v630 = vpop.xlane.xlu0 %629
      %v631 = vpack.c.bf16 %v627, %v627
      %v633 = vunpack.c.l.b16 %v600
      %v634 = vpack.c.b16 %v633, %v633
      %635 = vrot.lane.b32.xlu0 %v634, 96
      %v636 = vpop.permute.xlu0 %635
      %v638 = vsel %vm602, %v631, 0
      %vm640 = vcmask 1043456
      %v642 = vsel %vm640, %v636, 0
      %644 = vmatpush.bf16.msra.mxu0 0
      %645 = vmatpush.bf16.msra.mxu0 0
      %646 = vmatpush.bf16.msra.mxu0 0
      %647 = vmatpush.bf16.msra.mxu0 0
      %648 = vmatpush.bf16.msra.mxu0 0
      %649 = vmatpush.bf16.msra.mxu0 0
      %650 = vmatpush.bf16.msra.mxu0 0
      %651 = vmatpush.bf16.msra.mxu0 %v642
      %652 = vmatmul.bf16.gmra.mxu0 %v638
      %v653 = vpop.f32.mrf.mxu0
      %v654 = vadd.f32 0.0, %v653
      %v655 = vpop.f32.mrf.mxu0
      %656 = vdwg.mxu0
      %v657 = vrcp.pop %v630
      %v658 = vmul.f32 %v630, %v657
      %v659 = vsub.f32 1.0, %v658
      %v660 = vmul.f32 %v657, %v659
      %v661 = vadd.f32 %v657, %v660
      %vm662 = vweird.f32 %v630
      %vm663 = vweird.f32 %v657
      %vm664 = vmor %vm662, %vm663
      %v665 = vsel %vm664, %v657, %v661
      %v666 = vand.u32 2147483647, %v630
      %vm667 = vcmp.eq.f32.partialorder %v666, 8.507059e+37
      %v668 = vand.u32 %v630, 2147483648
      %v669 = vor.u32 1.1754944e-38, %v668
      %v670 = vsel %vm667, %v669, %v665
      %v671 = vmul.f32 %v654, %v670
      %v672 = vpack.c.bf16 %v671, %v671
      %vm673 = vcmask 60416
      %674 = vst.msk [vmem:[#allocation2] sm:$0xf] %vm673, %v672
      %v676 = vunpack.c.l.b16 %v599
      %v677 = vpack.c.b16 %v676, %v676
      %678 = vrot.lane.b32.xlu0 %v677, 120
      %v679 = vpop.permute.xlu0 %678
      %680 = vrot.lane.b32.xlu0 %v634, 120
      %v681 = vpop.permute.xlu0 %680
      %v683 = vsel %vm602, %v679, 0
      %v686 = vsel %vm602, %v681, 0
      %688 = vmatpush.bf16.xpose.msra.mxu0 0
      %689 = vmatpush.bf16.xpose.msra.mxu0 0
      %690 = vmatpush.bf16.xpose.msra.mxu0 0
      %691 = vmatpush.bf16.xpose.msra.mxu0 0
      %692 = vmatpush.bf16.xpose.msra.mxu0 0
      %693 = vmatpush.bf16.xpose.msra.mxu0 0
      %694 = vmatpush.bf16.xpose.msra.mxu0 0
      %695 = vmatpush.bf16.xpose.msra.mxu0 %v686
      %696 = vmatmul.bf16.gmra.mxu0 %v683
      %v697 = vpop.f32.mrf.mxu0
      %v698 = vadd.f32 %v601, %v697
      %v699 = vpop.f32.mrf.mxu0
      %700 = vdwg.mxu0
      %v701 = vsel %vm602, %v698, -inf
      %702 = vmax.xlane.f32.xlu0 %v701
      %v703 = vpop.xlane.xlu0 %702
      %v704 = vsub.f32 %v698, %v703
      %v705 = vmul.f32 %v704, 1.442695
      %v706 = vpow.pop %v705
      %v707 = vsel %vm602, %v706, 0.0
      %708 = vadd.xlane.f32.xlu0 %v707
      %v709 = vpop.xlane.xlu0 %708
      %v710 = vpack.c.bf16 %v706, %v706
      %711 = vrot.lane.b32.xlu0 %v634, 88
      %v712 = vpop.permute.xlu0 %711
      %v714 = vsel %vm602, %v710, 0
      %v717 = vsel %vm640, %v712, 0
      %719 = vmatpush.bf16.msra.mxu0 0
      %720 = vmatpush.bf16.msra.mxu0 0
      %721 = vmatpush.bf16.msra.mxu0 0
      %722 = vmatpush.bf16.msra.mxu0 0
      %723 = vmatpush.bf16.msra.mxu0 0
      %724 = vmatpush.bf16.msra.mxu0 0
      %725 = vmatpush.bf16.msra.mxu0 0
      %726 = vmatpush.bf16.msra.mxu0 %v717
      %727 = vmatmul.bf16.gmra.mxu0 %v714
      %v728 = vpop.f32.mrf.mxu0
      %v729 = vadd.f32 0.0, %v728
      %v730 = vpop.f32.mrf.mxu0
      %731 = vdwg.mxu0
      %v732 = vrcp.pop %v709
      %v733 = vmul.f32 %v709, %v732
      %v734 = vsub.f32 1.0, %v733
      %v735 = vmul.f32 %v732, %v734
      %v736 = vadd.f32 %v732, %v735
      %vm737 = vweird.f32 %v709
      %vm738 = vweird.f32 %v732
      %vm739 = vmor %vm737, %vm738
      %v740 = vsel %vm739, %v732, %v736
      %v741 = vand.u32 2147483647, %v709
      %vm742 = vcmp.eq.f32.partialorder %v741, 8.507059e+37
      %v743 = vand.u32 %v709, 2147483648
      %v744 = vor.u32 1.1754944e-38, %v743
      %v745 = vsel %vm742, %v744, %v740
      %v746 = vmul.f32 %v729, %v745
      %v747 = vpack.c.bf16 %v746, %v746
      %749 = vrot.lane.b32.xlu0 %v747, 8
      %v750 = vpop.permute.xlu0 %749
      %vm752 = vcmask 126016
      %753 = vst.msk [vmem:[#allocation2] sm:$0xf] %vm752, %v750
      %754 = vrot.lane.b32.xlu0 %v677, 112
      %v755 = vpop.permute.xlu0 %754
      %756 = vrot.lane.b32.xlu0 %v634, 112
      %v757 = vpop.permute.xlu0 %756
      %v759 = vsel %vm602, %v755, 0
      %v762 = vsel %vm602, %v757, 0
      %764 = vmatpush.bf16.xpose.msra.mxu0 0
      %765 = vmatpush.bf16.xpose.msra.mxu0 0
      %766 = vmatpush.bf16.xpose.msra.mxu0 0
      %767 = vmatpush.bf16.xpose.msra.mxu0 0
      %768 = vmatpush.bf16.xpose.msra.mxu0 0
      %769 = vmatpush.bf16.xpose.msra.mxu0 0
      %770 = vmatpush.bf16.xpose.msra.mxu0 0
      %771 = vmatpush.bf16.xpose.msra.mxu0 %v762
      %772 = vmatmul.bf16.gmra.mxu0 %v759
      %v773 = vpop.f32.mrf.mxu0
      %v774 = vadd.f32 %v601, %v773
      %v775 = vpop.f32.mrf.mxu0
      %776 = vdwg.mxu0
      %v777 = vsel %vm602, %v774, -inf
      %778 = vmax.xlane.f32.xlu0 %v777
      %v779 = vpop.xlane.xlu0 %778
      %v780 = vsub.f32 %v774, %v779
      %v781 = vmul.f32 %v780, 1.442695
      %v782 = vpow.pop %v781
      %v783 = vsel %vm602, %v782, 0.0
      %784 = vadd.xlane.f32.xlu0 %v783
      %v785 = vpop.xlane.xlu0 %784
      %v786 = vpack.c.bf16 %v782, %v782
      %787 = vrot.lane.b32.xlu0 %v634, 80
      %v788 = vpop.permute.xlu0 %787
      %v790 = vsel %vm602, %v786, 0
      %v793 = vsel %vm640, %v788, 0
      %795 = vmatpush.bf16.msra.mxu0 0
      %796 = vmatpush.bf16.msra.mxu0 0
      %797 = vmatpush.bf16.msra.mxu0 0
      %798 = vmatpush.bf16.msra.mxu0 0
      %799 = vmatpush.bf16.msra.mxu0 0
      %800 = vmatpush.bf16.msra.mxu0 0
      %801 = vmatpush.bf16.msra.mxu0 0
      %802 = vmatpush.bf16.msra.mxu0 %v793
      %803 = vmatmul.bf16.gmra.mxu0 %v790
      %v804 = vpop.f32.mrf.mxu0
      %v805 = vadd.f32 0.0, %v804
      %v806 = vpop.f32.mrf.mxu0
      %807 = vdwg.mxu0
      %v808 = vrcp.pop %v785
      %v809 = vmul.f32 %v785, %v808
      %v810 = vsub.f32 1.0, %v809
      %v811 = vmul.f32 %v808, %v810
      %v812 = vadd.f32 %v808, %v811
      %vm813 = vweird.f32 %v785
      %vm814 = vweird.f32 %v808
      %vm815 = vmor %vm813, %vm814
      %v816 = vsel %vm815, %v808, %v812
      %v817 = vand.u32 2147483647, %v785
      %vm818 = vcmp.eq.f32.partialorder %v817, 8.507059e+37
      %v819 = vand.u32 %v785, 2147483648
      %v820 = vor.u32 1.1754944e-38, %v819
      %v821 = vsel %vm818, %v820, %v816
      %v822 = vmul.f32 %v805, %v821
      %v823 = vpack.c.bf16 %v822, %v822
      %825 = vrot.lane.b32.xlu0 %v823, 16
      %v826 = vpop.permute.xlu0 %825
      %vm828 = vcmask 191616
      %829 = vst.msk [vmem:[#allocation2] sm:$0xf] %vm828, %v826
      %830 = vrot.lane.b32.xlu0 %v677, 104
      %v831 = vpop.permute.xlu0 %830
      %832 = vrot.lane.b32.xlu0 %v634, 104
      %v833 = vpop.permute.xlu0 %832
      %v835 = vsel %vm602, %v831, 0
      %v838 = vsel %vm602, %v833, 0
      %840 = vmatpush.bf16.xpose.msra.mxu0 0
      %841 = vmatpush.bf16.xpose.msra.mxu0 0
      %842 = vmatpush.bf16.xpose.msra.mxu0 0
      %843 = vmatpush.bf16.xpose.msra.mxu0 0
      %844 = vmatpush.bf16.xpose.msra.mxu0 0
      %845 = vmatpush.bf16.xpose.msra.mxu0 0
      %846 = vmatpush.bf16.xpose.msra.mxu0 0
      %847 = vmatpush.bf16.xpose.msra.mxu0 %v838
      %848 = vmatmul.bf16.gmra.mxu0 %v835
      %v849 = vpop.f32.mrf.mxu0
      %v850 = vadd.f32 %v601, %v849
      %v851 = vpop.f32.mrf.mxu0
      %852 = vdwg.mxu0
      %v853 = vsel %vm602, %v850, -inf
      %854 = vmax.xlane.f32.xlu0 %v853
      %v855 = vpop.xlane.xlu0 %854
      %v856 = vsub.f32 %v850, %v855
      %v857 = vmul.f32 %v856, 1.442695
      %v858 = vpow.pop %v857
      %v859 = vsel %vm602, %v858, 0.0
      %860 = vadd.xlane.f32.xlu0 %v859
      %v861 = vpop.xlane.xlu0 %860
      %v862 = vpack.c.bf16 %v858, %v858
      %863 = vrot.lane.b32.xlu0 %v634, 72
      %v864 = vpop.permute.xlu0 %863
      %v866 = vsel %vm602, %v862, 0
      %v869 = vsel %vm640, %v864, 0
      %871 = vmatpush.bf16.msra.mxu0 0
      %872 = vmatpush.bf16.msra.mxu0 0
      %873 = vmatpush.bf16.msra.mxu0 0
      %874 = vmatpush.bf16.msra.mxu0 0
      %875 = vmatpush.bf16.msra.mxu0 0
      %876 = vmatpush.bf16.msra.mxu0 0
      %877 = vmatpush.bf16.msra.mxu0 0
      %878 = vmatpush.bf16.msra.mxu0 %v869
      %879 = vmatmul.bf16.gmra.mxu0 %v866
      %v880 = vpop.f32.mrf.mxu0
      %v881 = vadd.f32 0.0, %v880
      %v882 = vpop.f32.mrf.mxu0
      %883 = vdwg.mxu0
      %v884 = vrcp.pop %v861
      %v885 = vmul.f32 %v861, %v884
      %v886 = vsub.f32 1.0, %v885
      %v887 = vmul.f32 %v884, %v886
      %v888 = vadd.f32 %v884, %v887
      %vm889 = vweird.f32 %v861
      %vm890 = vweird.f32 %v884
      %vm891 = vmor %vm889, %vm890
      %v892 = vsel %vm891, %v884, %v888
      %v893 = vand.u32 2147483647, %v861
      %vm894 = vcmp.eq.f32.partialorder %v893, 8.507059e+37
      %v895 = vand.u32 %v861, 2147483648
      %v896 = vor.u32 1.1754944e-38, %v895
      %v897 = vsel %vm894, %v896, %v892
      %v898 = vmul.f32 %v881, %v897
      %v899 = vpack.c.bf16 %v898, %v898
      %901 = vrot.lane.b32.xlu0 %v899, 24
      %v902 = vpop.permute.xlu0 %901
      %vm904 = vcmask 257216
      %905 = vst.msk [vmem:[#allocation2] sm:$0xf] %vm904, %v902
      %v906 = vld [vmem:[#allocation2] sm:$0xf]
      %v907 = vld [vmem:[%s9] sm:$0xf]
      %v908 = vld [vmem:[%s9 + $0x4] sm:$0xf]
      %v909 = vld [vmem:[%s9 + $0x8] sm:$0xf]
      %v910 = vld [vmem:[%s9 + $0xc] sm:$0xf]
      %v911 = vld [vmem:[%s10] sm:$0x1]
      %v913 = vperm.slane %v911, 0
      %v919 = vunpack.c.l.b16 %v907
      %v920 = vunpack.c.l.b16 %v908
      %v921 = vunpack.c.l.b16 %v909
      %v922 = vunpack.c.l.b16 %v910
      %v923 = vpack.c.b16 %v920, %v919
      %v924 = vpack.c.b16 %v922, %v921
      %v928 = vsel %vm462, %v906, 0
      %930 = vmatpush.bf16.msra.mxu0 0
      %931 = vmatpush.bf16.msra.mxu0 0
      %932 = vmatpush.bf16.msra.mxu0 0
      %933 = vmatpush.bf16.msra.mxu0 0
      %934 = vmatpush.bf16.msra.mxu0 0
      %935 = vmatpush.bf16.msra.mxu0 0
      %936 = vmatpush.bf16.msra.mxu0 %v924
      %937 = vmatpush.bf16.msra.mxu0 %v923
      %938 = vmatmul.bf16.gmra.mxu0 %v928
      %v939 = vpop.f32.mrf.mxu0
      %v940 = vadd.f32 %v913, %v939
      %v941 = vpop.f32.mrf.mxu0
      %942 = vdwg.mxu0
      %v943 = vadd.f32 %v459, %v940
      %944 = vst.msk [vmem:[%s457] sm:$0xff] %vm462, %v943
      %p945 = scmp.lt.s32.totalorder %s26, 1
      %s946 = scalar_select %p945, %s26, 1
      %p947 = scmp.lt.s32.totalorder %s27, 0
      %s948 = scalar_select %p947, %s27, 0
      %s949 = sadd.s32 %s948, %s946
      %s950 = smul.addr %s949, 8
      %s951 = scalar_lea.vmem %s11, %s950
      // Predicated region
      $region65: #{decoder.8} parent=63 // pred_check
        %p952 = pneg %p304
      $region66: #{decoder.8} parent=63 // pred_check_branch
        %954 = sbr.rel (%p952) target = $region68
      $region67: #{decoder.8} parent=63 // pred_region
        _
      $region68: #{decoder.8} parent=63 // pred_fallthru
        _
    $region64: #{decoder.8} parent=5 // pred_fallthru
      _
    %p955 = scmp.le.s32.totalorder 2, %s17
    // Predicated region
    $region69: #{decoder.8} parent=5 // pred_check
      %p956 = pneg %p955
    $region70: #{decoder.8} parent=5 // pred_check_branch
      %958 = sbr.rel (%p956) target = $region72
    $region71: #{decoder.8} parent=5 // pred_region
      %s959 = ssub.s32 %s17, 2
      // Predicated region
      $region73: #{decoder.8} parent=71 // pred_check
        %p960 = pneg %p310
      $region74: #{decoder.8} parent=71 // pred_check_branch
        %962 = sbr.rel (%p960) target = $region76
      $region75: #{decoder.8} parent=71 // pred_region
        %p963 = scmp.lt.s32.totalorder %s28, 1
        %s964 = scalar_select %p963, %s28, 1
        %p965 = scmp.lt.s32.totalorder %s29, 0
        %s966 = scalar_select %p965, %s29, 0
        %s967 = sadd.s32 %s966, %s964
        %s968 = smul.addr %s967, 8
        %s969 = scalar_lea.vmem %s11, %s968
      $region76: #{decoder.8} parent=71 // pred_fallthru
        _
    $region72: #{decoder.8} parent=5 // pred_fallthru
      _
  $region6: #{decoder.8} parent=0 // loop_footer
    %s21 = sadd.s32 1, %s17
  $region7: #{decoder.8} parent=0 // loop_footer_branch
    %16 = sbr.rel target = $region3
  $region8: #{decoder.8} parent=0 // loop_exit
    _

// kernel: decoder.7
$region0: #{decoder.7}
  #allocation0 [shape = 'u32[]', space=smem, size = 0x4, offset = 0x4, fixed_abs, tag = 'smem constant byte address 0x4 - core index']
  #allocation1 [shape = 'u32[72,128]{1,0:T(1,128)}', space=vmem, size = 0x9000, scoped, tag = 'internal scratch']
  #allocation2 [shape = 'bf16[8,32]{1,0:T(8,128)(2,1)}', space=vmem, size = 0x800, scoped, tag = 'scratch operand']
  %s0 = inlined_call_operand.vmem [shape: f32[2,8,32], index: 0, kind: input, shape index: {}, may-alias: {0,1}]
  %s1 = inlined_call_operand.vmem [shape: f32[2,8,32], index: 1, kind: input, shape index: {}, may-alias: {0,1}]
  %s2 = inlined_call_operand.vmem [shape: f32[2,8,8], index: 2, kind: input, shape index: {}]
  %s3 = inlined_call_operand.hbm [shape: f32[1,32], index: 3, kind: input, shape index: {}]
  %s4 = inlined_call_operand.hbm [shape: f32[1,32], index: 4, kind: input, shape index: {}]
  %s5 = inlined_call_operand.vmem [shape: bf16[32,32], index: 5, kind: input, shape index: {}]
  %s6 = inlined_call_operand.hbm [shape: f32[1,32], index: 6, kind: input, shape index: {}]
  %s7 = inlined_call_operand.vmem [shape: bf16[32,64], index: 7, kind: input, shape index: {}]
  %s8 = inlined_call_operand.hbm [shape: f32[1,64], index: 8, kind: input, shape index: {}]
  %s9 = inlined_call_operand.vmem [shape: bf16[32,32], index: 9, kind: input, shape index: {}]
  %s10 = inlined_call_operand.hbm [shape: f32[1,32], index: 10, kind: input, shape index: {}]
  %s11 = inlined_call_operand.vmem [shape: f32[2,8,32], index: 11, kind: output, shape index: {}]
  %s12 = sld [smem:[#allocation0]]
  $region97: #{decoder.7} parent=0
    _
  %s14 = ssub.s32 1, %s12
  %s15 = scalar_select 0, %s14, %s12
  $region1: #{decoder.7} parent=0
    #allocation3 [shape = 'u8[512]{0}', space=vmem, size = 0x400, scoped, tag = 'input window, operand 3, single buffered']
    #allocation4 [shape = 's32[2]{0}', space=sflag, size = 0x8, scoped, tag = 'scoped memory for decoder.7']
    #allocation5 [shape = 'u8[512]{0}', space=vmem, size = 0x400, scoped, tag = 'input window, operand 4, single buffered']
    #allocation6 [shape = 's32[1]{0}', space=sflag, size = 0x4, scoped, tag = 'scoped memory for decoder.7']
    #allocation7 [shape = 'u8[512]{0}', space=vmem, size = 0x400, scoped, tag = 'input window, operand 6, single buffered']
    #allocation8 [shape = 'u8[512]{0}', space=vmem, size = 0x400, scoped, tag = 'input window, operand 8, single buffered']
    #allocation9 [shape = 's32[1]{0}', space=sflag, size = 0x4, scoped, tag = 'scoped memory for decoder.7']
    #allocation10 [shape = 'u8[512]{0}', space=vmem, size = 0x400, scoped, tag = 'input window, operand 10, single buffered']
    %16 = vsyncpa [#allocation4], 0
    %17 = vsyncpa [#allocation6], 0
    %18 = vsyncpa [#allocation9], 0
    loop: start=0, step=1, limit=4
    $region2: #{decoder.7} parent=1 // loop_pre_header
      _
    $region3: #{decoder.7} parent=1 // loop_header
      %s20 = sphi 0, %s24
      %p21 = scmp.ge.s32.totalorder %s20, 4
      %s27 = sphi 0, %s39
      %s28 = sphi 0, %s35
      %s29 = sphi 0, %s27
      %s30 = sphi 0, %s28
      %s31 = sphi 0, %s29
      %s32 = sphi 0, %s30
      %s44 = sphi 0, %s46
      %s47 = sphi 0, %s44
      %s48 = sphi 0, %s47
      %s64 = sphi 0, %s48
      %s70 = sphi 0, %s72
      %s73 = sphi 0, %s70
      %s74 = sphi 0, %s73
      %s90 = sphi 0, %s74
      %s98 = sphi 0, %s100
      %s101 = sphi 0, %s98
      %s102 = sphi 0, %s101
      %s118 = sphi 0, %s102
      %s122 = sphi 0, %s122
      %s124 = sphi 0, %s122
      %s125 = sphi 0, %s124
      %s139 = sphi 0, %s125
      %s143 = sphi 0, %s143
      %s145 = sphi 0, %s143
      %s146 = sphi 0, %s145
      %s160 = sphi 0, %s146
      %s164 = sphi 0, %s164
      %s166 = sphi 0, %s164
      %s167 = sphi 0, %s166
      %s181 = sphi 0, %s167
      %s185 = sphi 0, %s185
      %s187 = sphi 0, %s185
      %s188 = sphi 0, %s187
      %s202 = sphi 0, %s188
      %s206 = sphi 0, %s206
      %s208 = sphi 0, %s206
      %s209 = sphi 0, %s208
      %s223 = sphi 0, %s209
      %s227 = sphi 0, %s227
      %s229 = sphi 0, %s227
      %s230 = sphi 0, %s229
      %s244 = sphi 0, %s230
      %s248 = sphi 0, %s248
      %s250 = sphi 0, %s248
      %s251 = sphi 0, %s250
      %s265 = sphi 0, %s251
      %s269 = sphi 0, %s269
      %s271 = sphi 0, %s269
      %s272 = sphi 0, %s271
      %s286 = sphi 0, %s272
      %s294 = sphi 0, %s296
      %s297 = sphi 0, %s294
      %s298 = sphi 0, %s297
      %s314 = sphi 0, %s298
    $region4: #{decoder.7} parent=1 // loop_header_branch
      %23 = sbr.rel (%p21) target = $region8
    $region5: #{decoder.7} parent=1 // loop_body
      %s25 = ssub.s32 %s20, 1
      %s26 = ssub.s32 %s20, 2
      %s33 = sadd.s32 1, %s28
      %p34 = scmp.ge.s32.totalorder %s33, 1
      %s35 = scalar_select %p34, 0, %s33
      %s36 = sadd.s32 1, %s27
      %s37 = scalar_select %p34, %s36, %s27
      %p38 = scmp.ge.s32.totalorder %s37, 2
      %s39 = scalar_select %p38, 0, %s37
      %s40 = ssub.s32 %s27, %s39
      %s41 = ssub.s32 %s28, %s35
      %s42 = sor.u32 %s40, %s41
      %p43 = scmp.eq.s32.totalorder %s42, 0
      %s45 = sadd.s32 %s44, 1
      %s46 = scalar_select %p43, %s44, %s45
      %p49 = pneg %p43
      %p50 = scmp.eq.s32.totalorder %s20, 1
      %p51 = por %p49, %p50
      %p52 = scmp.ne.s32.totalorder %s44, %s47
      %p53 = scmp.eq.s32.totalorder %s20, 0
      %p54 = por %p52, %p53
      %p55 = scmp.ne.s32.totalorder %s44, %s47
      %p56 = scmp.eq.s32.totalorder %s25, 1
      %p57 = por %p55, %p56
      %p58 = scmp.ne.s32.totalorder %s47, %s48
      %p59 = scmp.eq.s32.totalorder %s25, 0
      %p60 = por %p58, %p59
      %p61 = scmp.ne.s32.totalorder %s47, %s48
      %p62 = scmp.eq.s32.totalorder %s26, 1
      %p63 = por %p61, %p62
      %p65 = scmp.ne.s32.totalorder %s48, %s64
      %p66 = scmp.eq.s32.totalorder %s26, 0
      %p67 = por %p65, %p66
      %s68 = ssub.s32 %s27, %s39
      %p69 = scmp.eq.s32.totalorder %s68, 0
      %s71 = sadd.s32 %s70, 1
      %s72 = scalar_select %p69, %s70, %s71
      %p75 = pneg %p69
      %p76 = scmp.eq.s32.totalorder %s20, 1
      %p77 = por %p75, %p76
      %p78 = scmp.ne.s32.totalorder %s70, %s73
      %p79 = scmp.eq.s32.totalorder %s20, 0
      %p80 = por %p78, %p79
      %p81 = scmp.ne.s32.totalorder %s70, %s73
      %p82 = scmp.eq.s32.totalorder %s25, 1
      %p83 = por %p81, %p82
      %p84 = scmp.ne.s32.totalorder %s73, %s74
      %p85 = scmp.eq.s32.totalorder %s25, 0
      %p86 = por %p84, %p85
      %p87 = scmp.ne.s32.totalorder %s73, %s74
      %p88 = scmp.eq.s32.totalorder %s26, 1
      %p89 = por %p87, %p88
      %p91 = scmp.ne.s32.totalorder %s74, %s90
      %p92 = scmp.eq.s32.totalorder %s26, 0
      %p93 = por %p91, %p92
      %s94 = ssub.s32 %s27, %s39
      %s95 = ssub.s32 %s28, %s35
      %s96 = sor.u32 %s94, %s95
      %p97 = scmp.eq.s32.totalorder %s96, 0
      %s99 = sadd.s32 %s98, 1
      %s100 = scalar_select %p97, %s98, %s99
      %p103 = pneg %p97
      %p104 = scmp.eq.s32.totalorder %s20, 1
      %p105 = por %p103, %p104
      %p106 = scmp.ne.s32.totalorder %s98, %s101
      %p107 = scmp.eq.s32.totalorder %s20, 0
      %p108 = por %p106, %p107
      %p109 = scmp.ne.s32.totalorder %s98, %s101
      %p110 = scmp.eq.s32.totalorder %s25, 1
      %p111 = por %p109, %p110
      %p112 = scmp.ne.s32.totalorder %s101, %s102
      %p113 = scmp.eq.s32.totalorder %s25, 0
      %p114 = por %p112, %p113
      %p115 = scmp.ne.s32.totalorder %s101, %s102
      %p116 = scmp.eq.s32.totalorder %s26, 1
      %p117 = por %p115, %p116
      %p119 = scmp.ne.s32.totalorder %s102, %s118
      %p120 = scmp.eq.s32.totalorder %s26, 0
      %p121 = por %p119, %p120
      %s123 = sadd.s32 %s122, 1
      %p126 = scmp.eq.s32.totalorder %s20, 1
      %p127 = scmp.ne.s32.totalorder %s122, %s124
      %p128 = scmp.eq.s32.totalorder %s20, 0
      %p129 = por %p127, %p128
      %p130 = scmp.ne.s32.totalorder %s122, %s124
      %p131 = scmp.eq.s32.totalorder %s25, 1
      %p132 = por %p130, %p131
      %p133 = scmp.ne.s32.totalorder %s124, %s125
      %p134 = scmp.eq.s32.totalorder %s25, 0
      %p135 = por %p133, %p134
      %p136 = scmp.ne.s32.totalorder %s124, %s125
      %p137 = scmp.eq.s32.totalorder %s26, 1
      %p138 = por %p136, %p137
      %p140 = scmp.ne.s32.totalorder %s125, %s139
      %p141 = scmp.eq.s32.totalorder %s26, 0
      %p142 = por %p140, %p141
      %s144 = sadd.s32 %s143, 1
      %p147 = scmp.eq.s32.totalorder %s20, 1
      %p148 = scmp.ne.s32.totalorder %s143, %s145
      %p149 = scmp.eq.s32.totalorder %s20, 0
      %p150 = por %p148, %p149
      %p151 = scmp.ne.s32.totalorder %s143, %s145
      %p152 = scmp.eq.s32.totalorder %s25, 1
      %p153 = por %p151, %p152
      %p154 = scmp.ne.s32.totalorder %s145, %s146
      %p155 = scmp.eq.s32.totalorder %s25, 0
      %p156 = por %p154, %p155
      %p157 = scmp.ne.s32.totalorder %s145, %s146
      %p158 = scmp.eq.s32.totalorder %s26, 1
      %p159 = por %p157, %p158
      %p161 = scmp.ne.s32.totalorder %s146, %s160
      %p162 = scmp.eq.s32.totalorder %s26, 0
      %p163 = por %p161, %p162
      %s165 = sadd.s32 %s164, 1
      %p168 = scmp.eq.s32.totalorder %s20, 1
      %p169 = scmp.ne.s32.totalorder %s164, %s166
      %p170 = scmp.eq.s32.totalorder %s20, 0
      %p171 = por %p169, %p170
      %p172 = scmp.ne.s32.totalorder %s164, %s166
      %p173 = scmp.eq.s32.totalorder %s25, 1
      %p174 = por %p172, %p173
      %p175 = scmp.ne.s32.totalorder %s166, %s167
      %p176 = scmp.eq.s32.totalorder %s25, 0
      %p177 = por %p175, %p176
      %p178 = scmp.ne.s32.totalorder %s166, %s167
      %p179 = scmp.eq.s32.totalorder %s26, 1
      %p180 = por %p178, %p179
      %p182 = scmp.ne.s32.totalorder %s167, %s181
      %p183 = scmp.eq.s32.totalorder %s26, 0
      %p184 = por %p182, %p183
      %s186 = sadd.s32 %s185, 1
      %p189 = scmp.eq.s32.totalorder %s20, 1
      %p190 = scmp.ne.s32.totalorder %s185, %s187
      %p191 = scmp.eq.s32.totalorder %s20, 0
      %p192 = por %p190, %p191
      %p193 = scmp.ne.s32.totalorder %s185, %s187
      %p194 = scmp.eq.s32.totalorder %s25, 1
      %p195 = por %p193, %p194
      %p196 = scmp.ne.s32.totalorder %s187, %s188
      %p197 = scmp.eq.s32.totalorder %s25, 0
      %p198 = por %p196, %p197
      %p199 = scmp.ne.s32.totalorder %s187, %s188
      %p200 = scmp.eq.s32.totalorder %s26, 1
      %p201 = por %p199, %p200
      %p203 = scmp.ne.s32.totalorder %s188, %s202
      %p204 = scmp.eq.s32.totalorder %s26, 0
      %p205 = por %p203, %p204
      %s207 = sadd.s32 %s206, 1
      %p210 = scmp.eq.s32.totalorder %s20, 1
      %p211 = scmp.ne.s32.totalorder %s206, %s208
      %p212 = scmp.eq.s32.totalorder %s20, 0
      %p213 = por %p211, %p212
      %p214 = scmp.ne.s32.totalorder %s206, %s208
      %p215 = scmp.eq.s32.totalorder %s25, 1
      %p216 = por %p214, %p215
      %p217 = scmp.ne.s32.totalorder %s208, %s209
      %p218 = scmp.eq.s32.totalorder %s25, 0
      %p219 = por %p217, %p218
      %p220 = scmp.ne.s32.totalorder %s208, %s209
      %p221 = scmp.eq.s32.totalorder %s26, 1
      %p222 = por %p220, %p221
      %p224 = scmp.ne.s32.totalorder %s209, %s223
      %p225 = scmp.eq.s32.totalorder %s26, 0
      %p226 = por %p224, %p225
      %s228 = sadd.s32 %s227, 1
      %p231 = scmp.eq.s32.totalorder %s20, 1
      %p232 = scmp.ne.s32.totalorder %s227, %s229
      %p233 = scmp.eq.s32.totalorder %s20, 0
      %p234 = por %p232, %p233
      %p235 = scmp.ne.s32.totalorder %s227, %s229
      %p236 = scmp.eq.s32.totalorder %s25, 1
      %p237 = por %p235, %p236
      %p238 = scmp.ne.s32.totalorder %s229, %s230
      %p239 = scmp.eq.s32.totalorder %s25, 0
      %p240 = por %p238, %p239
      %p241 = scmp.ne.s32.totalorder %s229, %s230
      %p242 = scmp.eq.s32.totalorder %s26, 1
      %p243 = por %p241, %p242
      %p245 = scmp.ne.s32.totalorder %s230, %s244
      %p246 = scmp.eq.s32.totalorder %s26, 0
      %p247 = por %p245, %p246
      %s249 = sadd.s32 %s248, 1
      %p252 = scmp.eq.s32.totalorder %s20, 1
      %p253 = scmp.ne.s32.totalorder %s248, %s250
      %p254 = scmp.eq.s32.totalorder %s20, 0
      %p255 = por %p253, %p254
      %p256 = scmp.ne.s32.totalorder %s248, %s250
      %p257 = scmp.eq.s32.totalorder %s25, 1
      %p258 = por %p256, %p257
      %p259 = scmp.ne.s32.totalorder %s250, %s251
      %p260 = scmp.eq.s32.totalorder %s25, 0
      %p261 = por %p259, %p260
      %p262 = scmp.ne.s32.totalorder %s250, %s251
      %p263 = scmp.eq.s32.totalorder %s26, 1
      %p264 = por %p262, %p263
      %p266 = scmp.ne.s32.totalorder %s251, %s265
      %p267 = scmp.eq.s32.totalorder %s26, 0
      %p268 = por %p266, %p267
      %s270 = sadd.s32 %s269, 1
      %p273 = scmp.eq.s32.totalorder %s20, 1
      %p274 = scmp.ne.s32.totalorder %s269, %s271
      %p275 = scmp.eq.s32.totalorder %s20, 0
      %p276 = por %p274, %p275
      %p277 = scmp.ne.s32.totalorder %s269, %s271
      %p278 = scmp.eq.s32.totalorder %s25, 1
      %p279 = por %p277, %p278
      %p280 = scmp.ne.s32.totalorder %s271, %s272
      %p281 = scmp.eq.s32.totalorder %s25, 0
      %p282 = por %p280, %p281
      %p283 = scmp.ne.s32.totalorder %s271, %s272
      %p284 = scmp.eq.s32.totalorder %s26, 1
      %p285 = por %p283, %p284
      %p287 = scmp.ne.s32.totalorder %s272, %s286
      %p288 = scmp.eq.s32.totalorder %s26, 0
      %p289 = por %p287, %p288
      %s290 = ssub.s32 %s27, %s39
      %s291 = ssub.s32 %s28, %s35
      %s292 = sor.u32 %s290, %s291
      %p293 = scmp.eq.s32.totalorder %s292, 0
      %s295 = sadd.s32 %s294, 1
      %s296 = scalar_select %p293, %s294, %s295
      %p299 = pneg %p293
      %p300 = scmp.eq.s32.totalorder %s20, 1
      %p301 = por %p299, %p300
      %p302 = scmp.ne.s32.totalorder %s294, %s297
      %p303 = scmp.eq.s32.totalorder %s20, 0
      %p304 = por %p302, %p303
      %p305 = scmp.ne.s32.totalorder %s294, %s297
      %p306 = scmp.eq.s32.totalorder %s25, 1
      %p307 = por %p305, %p306
      %p308 = scmp.ne.s32.totalorder %s297, %s298
      %p309 = scmp.eq.s32.totalorder %s25, 0
      %p310 = por %p308, %p309
      %p311 = scmp.ne.s32.totalorder %s297, %s298
      %p312 = scmp.eq.s32.totalorder %s26, 1
      %p313 = por %p311, %p312
      %p315 = scmp.ne.s32.totalorder %s298, %s314
      %p316 = scmp.eq.s32.totalorder %s26, 0
      %p317 = por %p315, %p316
      %p318 = scmp.le.s32.totalorder 1, %s20
      %p319 = scmp.lt.s32.totalorder %s20, 3
      %p320 = pnand %p318, %p319
      %p321 = pneg %p320
      // Predicated region
      $region9: #{decoder.7} parent=5 // pred_check
        _
      $region10: #{decoder.7} parent=5 // pred_check_branch
        %323 = sbr.rel (%p320) target = $region12
      $region11: #{decoder.7} parent=5 // pred_region
        %s324 = ssub.s32 %s20, 1
        // Predicated region
        $region13: #{decoder.7} parent=11 // pred_check
          %p325 = pneg %p135
        $region14: #{decoder.7} parent=11 // pred_check_branch
          %327 = sbr.rel (%p325) target = $region16
        $region15: #{decoder.7} parent=11 // pred_region
          %329 = vsyncadd [#allocation4], 0
          %s331 = sshll.u32 %s3, 4
          %s332 = int_to_ptr.hbm [resolvable:$true] %s331
          %s333 = sshll.u32 [#allocation3], 4
          %s334 = int_to_ptr.vmem [resolvable:$true] %s333
          %336 = dma.hbm_to_vmem [thread:$0]  %s332, 16, %s334, [#allocation4]
        $region16: #{decoder.7} parent=11 // pred_fallthru
          _
        // Predicated region
        $region17: #{decoder.7} parent=11 // pred_check
          %p337 = pneg %p156
        $region18: #{decoder.7} parent=11 // pred_check_branch
          %339 = sbr.rel (%p337) target = $region20
        $region19: #{decoder.7} parent=11 // pred_region
          %341 = vsyncadd [#allocation6], 0
          %s343 = sshll.u32 %s4, 4
          %s344 = int_to_ptr.hbm [resolvable:$true] %s343
          %s345 = sshll.u32 [#allocation5], 4
          %s346 = int_to_ptr.vmem [resolvable:$true] %s345
          %348 = dma.hbm_to_vmem [thread:$0]  %s344, 16, %s346, [#allocation6]
        $region20: #{decoder.7} parent=11 // pred_fallthru
          _
        // Predicated region
        $region21: #{decoder.7} parent=11 // pred_check
          %p349 = pneg %p177
        $region22: #{decoder.7} parent=11 // pred_check_branch
          %351 = sbr.rel (%p349) target = $region24
        $region23: #{decoder.7} parent=11 // pred_region
          _
        $region24: #{decoder.7} parent=11 // pred_fallthru
          _
        // Predicated region
        $region25: #{decoder.7} parent=11 // pred_check
          %p352 = pneg %p198
        $region26: #{decoder.7} parent=11 // pred_check_branch
          %354 = sbr.rel (%p352) target = $region28
        $region27: #{decoder.7} parent=11 // pred_region
          %356 = vsyncadd [#allocation6], 0
          %s358 = sshll.u32 %s6, 4
          %s359 = int_to_ptr.hbm [resolvable:$true] %s358
          %s360 = sshll.u32 [#allocation7], 4
          %s361 = int_to_ptr.vmem [resolvable:$true] %s360
          %363 = dma.hbm_to_vmem [thread:$0]  %s359, 16, %s361, [#allocation6]
        $region28: #{decoder.7} parent=11 // pred_fallthru
          _
        // Predicated region
        $region29: #{decoder.7} parent=11 // pred_check
          %p364 = pneg %p219
        $region30: #{decoder.7} parent=11 // pred_check_branch
          %366 = sbr.rel (%p364) target = $region32
        $region31: #{decoder.7} parent=11 // pred_region
          _
        $region32: #{decoder.7} parent=11 // pred_fallthru
          _
        // Predicated region
        $region33: #{decoder.7} parent=11 // pred_check
          %p367 = pneg %p240
        $region34: #{decoder.7} parent=11 // pred_check_branch
          %369 = sbr.rel (%p367) target = $region36
        $region35: #{decoder.7} parent=11 // pred_region
          %371 = vsyncadd [#allocation9], 0
          %s373 = sshll.u32 %s8, 4
          %s374 = int_to_ptr.hbm [resolvable:$true] %s373
          %s375 = sshll.u32 [#allocation8], 4
          %s376 = int_to_ptr.vmem [resolvable:$true] %s375
          %378 = dma.hbm_to_vmem [thread:$0]  %s374, 16, %s376, [#allocation9]
        $region36: #{decoder.7} parent=11 // pred_fallthru
          _
        // Predicated region
        $region37: #{decoder.7} parent=11 // pred_check
          %p379 = pneg %p261
        $region38: #{decoder.7} parent=11 // pred_check_branch
          %381 = sbr.rel (%p379) target = $region40
        $region39: #{decoder.7} parent=11 // pred_region
          _
        $region40: #{decoder.7} parent=11 // pred_fallthru
          _
        // Predicated region
        $region41: #{decoder.7} parent=11 // pred_check
          %p382 = pneg %p282
        $region42: #{decoder.7} parent=11 // pred_check_branch
          %384 = sbr.rel (%p382) target = $region44
        $region43: #{decoder.7} parent=11 // pred_region
          %386 = vsyncadd [#allocation9], 0
          %s388 = sshll.u32 %s10, 4
          %s389 = int_to_ptr.hbm [resolvable:$true] %s388
          %s390 = sshll.u32 [#allocation10], 4
          %s391 = int_to_ptr.vmem [resolvable:$true] %s390
          %393 = dma.hbm_to_vmem [thread:$0]  %s389, 16, %s391, [#allocation9]
        $region44: #{decoder.7} parent=11 // pred_fallthru
          _
      $region12: #{decoder.7} parent=5 // pred_fallthru
        _
      %p394 = scmp.lt.s32.totalorder %s20, 2
      // Predicated region
      $region45: #{decoder.7} parent=5 // pred_check
        %p395 = pneg %p394
      $region46: #{decoder.7} parent=5 // pred_check_branch
        %397 = sbr.rel (%p395) target = $region48
      $region47: #{decoder.7} parent=5 // pred_region
        // Predicated region
        $region49: #{decoder.7} parent=47 // pred_check
          %p398 = pneg %p54
        $region50: #{decoder.7} parent=47 // pred_check_branch
          %400 = sbr.rel (%p398) target = $region52
        $region51: #{decoder.7} parent=47 // pred_region
          %p401 = scmp.lt.s32.totalorder %s27, 1
          %s402 = scalar_select %p401, %s27, 1
          %p403 = scmp.lt.s32.totalorder %s28, 0
          %s404 = scalar_select %p403, %s28, 0
          %s405 = sadd.s32 %s404, %s402
          %s406 = smul.addr %s405, 8
          %s407 = scalar_lea.vmem %s0, %s406
        $region52: #{decoder.7} parent=47 // pred_fallthru
          _
        // Predicated region
        $region53: #{decoder.7} parent=47 // pred_check
          %p408 = pneg %p80
        $region54: #{decoder.7} parent=47 // pred_check_branch
          %410 = sbr.rel (%p408) target = $region56
        $region55: #{decoder.7} parent=47 // pred_region
          %p411 = scmp.lt.s32.totalorder %s27, 1
          %s412 = scalar_select %p411, %s27, 1
          %s413 = smul.addr %s412, 8
          %s414 = scalar_lea.vmem %s1, %s413
        $region56: #{decoder.7} parent=47 // pred_fallthru
          _
        // Predicated region
        $region57: #{decoder.7} parent=47 // pred_check
          %p415 = pneg %p108
        $region58: #{decoder.7} parent=47 // pred_check_branch
          %417 = sbr.rel (%p415) target = $region60
        $region59: #{decoder.7} parent=47 // pred_region
          %p418 = scmp.lt.s32.totalorder %s27, 1
          %s419 = scalar_select %p418, %s27, 1
          %p420 = scmp.lt.s32.totalorder %s28, 0
          %s421 = scalar_select %p420, %s28, 0
          %s422 = sadd.s32 %s421, %s419
          %s423 = smul.addr %s422, 8
          %s424 = scalar_lea.vmem %s2, %s423
        $region60: #{decoder.7} parent=47 // pred_fallthru
          _
      $region48: #{decoder.7} parent=5 // pred_fallthru
        _
      %p425 = scmp.le.s32.totalorder 1, %s20
      %p426 = scmp.lt.s32.totalorder %s20, 3
      %p427 = pnand %p425, %p426
      %p428 = pneg %p427
      // Predicated region
      $region61: #{decoder.7} parent=5 // pred_check
        _
      $region62: #{decoder.7} parent=5 // pred_check_branch
        %430 = sbr.rel (%p427) target = $region64
      $region63: #{decoder.7} parent=5 // pred_region
        %s431 = ssub.s32 %s20, 1
        // Predicated region
        $region65: #{decoder.7} parent=63 // pred_check
          %p432 = pneg %p135
        $region66: #{decoder.7} parent=63 // pred_check_branch
          %434 = sbr.rel (%p432) target = $region68
        $region67: #{decoder.7} parent=63 // pred_region
          %436 = dma.done [#allocation4], 16
        $region68: #{decoder.7} parent=63 // pred_fallthru
          _
        // Predicated region
        $region69: #{decoder.7} parent=63 // pred_check
          %p437 = pneg %p156
        $region70: #{decoder.7} parent=63 // pred_check_branch
          %439 = sbr.rel (%p437) target = $region72
        $region71: #{decoder.7} parent=63 // pred_region
          %441 = dma.done [#allocation6], 16
        $region72: #{decoder.7} parent=63 // pred_fallthru
          _
        // Predicated region
        $region73: #{decoder.7} parent=63 // pred_check
          %p442 = pneg %p198
        $region74: #{decoder.7} parent=63 // pred_check_branch
          %444 = sbr.rel (%p442) target = $region76
        $region75: #{decoder.7} parent=63 // pred_region
          %446 = dma.done [#allocation6], 16
        $region76: #{decoder.7} parent=63 // pred_fallthru
          _
        // Predicated region
        $region77: #{decoder.7} parent=63 // pred_check
          %p447 = pneg %p240
        $region78: #{decoder.7} parent=63 // pred_check_branch
          %449 = sbr.rel (%p447) target = $region80
        $region79: #{decoder.7} parent=63 // pred_region
          %451 = dma.done [#allocation9], 16
        $region80: #{decoder.7} parent=63 // pred_fallthru
          _
        // Predicated region
        $region81: #{decoder.7} parent=63 // pred_check
          %p452 = pneg %p282
        $region82: #{decoder.7} parent=63 // pred_check_branch
          %454 = sbr.rel (%p452) target = $region84
        $region83: #{decoder.7} parent=63 // pred_region
          %456 = dma.done [#allocation9], 16
        $region84: #{decoder.7} parent=63 // pred_fallthru
          _
        %p457 = scmp.lt.s32.totalorder %s29, 1
        %s458 = scalar_select %p457, %s29, 1
        %p459 = scmp.lt.s32.totalorder %s30, 0
        %s460 = scalar_select %p459, %s30, 0
        %s461 = sadd.s32 %s460, %s458
        %s462 = smul.addr %s461, 8
        %s463 = scalar_lea.vmem %s0, %s462
        %p464 = pneg %p60
        %p465 = pneg %p57
        %p466 = scmp.lt.s32.totalorder %s29, 1
        %s467 = scalar_select %p466, %s29, 1
        %s468 = smul.addr %s467, 8
        %s469 = scalar_lea.vmem %s1, %s468
        %p470 = pneg %p86
        %p471 = pneg %p83
        %p472 = scmp.lt.s32.totalorder %s29, 1
        %s473 = scalar_select %p472, %s29, 1
        %p474 = scmp.lt.s32.totalorder %s30, 0
        %s475 = scalar_select %p474, %s30, 0
        %s476 = sadd.s32 %s475, %s473
        %s477 = smul.addr %s476, 8
        %s478 = scalar_lea.vmem %s2, %s477
        %p479 = pneg %p114
        %p480 = pneg %p111
        %p481 = pneg %p135
        %p482 = pneg %p132
        %p483 = pneg %p156
        %p484 = pneg %p153
        %p485 = pneg %p177
        %p486 = pneg %p174
        %p487 = pneg %p198
        %p488 = pneg %p195
        %p489 = pneg %p219
        %p490 = pneg %p216
        %p491 = pneg %p240
        %p492 = pneg %p237
        %p493 = pneg %p261
        %p494 = pneg %p258
        %p495 = pneg %p282
        %p496 = pneg %p279
        %p497 = pneg %p310
        %p498 = pneg %p307
        %p499 = scmp.lt.s32.totalorder %s29, 1
        %s500 = scalar_select %p499, %s29, 1
        %p501 = scmp.lt.s32.totalorder %s30, 0
        %s502 = scalar_select %p501, %s30, 0
        %s503 = sadd.s32 %s502, %s500
        %s504 = smul.addr %s503, 8
        %s505 = scalar_lea.vmem %s11, %s504
        %p506 = scmp.lt.s32.totalorder %s29, 1
        %s507 = scalar_select %p506, %s29, 1
        %p508 = scmp.lt.s32.totalorder %s30, 0
        %s509 = scalar_select %p508, %s30, 0
        %s510 = sadd.s32 %s509, %s507
        %s511 = smul.addr %s510, 8
        %s512 = scalar_lea.vmem %s0, %s511
        %p513 = scmp.lt.s32.totalorder %s29, 1
        %s514 = scalar_select %p513, %s29, 1
        %s515 = smul.addr %s514, 8
        %s516 = scalar_lea.vmem %s1, %s515
        %p517 = scmp.lt.s32.totalorder %s29, 1
        %s518 = scalar_select %p517, %s29, 1
        %p519 = scmp.lt.s32.totalorder %s30, 0
        %s520 = scalar_select %p519, %s30, 0
        %s521 = sadd.s32 %s520, %s518
        %s522 = smul.addr %s521, 8
        %s523 = scalar_lea.vmem %s2, %s522
        %p524 = scmp.lt.s32.totalorder %s29, 1
        %s525 = scalar_select %p524, %s29, 1
        %p526 = scmp.lt.s32.totalorder %s30, 0
        %s527 = scalar_select %p526, %s30, 0
        %s528 = sadd.s32 %s527, %s525
        %s529 = smul.addr %s528, 8
        %s530 = scalar_lea.vmem %s11, %s529
        %v532 = vld [vmem:[%s512] sm:$0xff]
        %v533 = vld [vmem:[#allocation3] sm:$0x1]
        %v534 = vld [vmem:[#allocation5] sm:$0x1]
        %vm535 = vcmask 261120
        %v536 = vsel %vm535, %v532, 0.0
        %537 = vadd.xlane.f32.xlu0 %v536
        %v538 = vpop.xlane.xlu0 %537
        %v539 = vrcp.pop 32.0
        %v540 = vmul.f32 32.0, %v539
        %v541 = vsub.f32 1.0, %v540
        %v542 = vmul.f32 %v539, %v541
        %v543 = vadd.f32 %v539, %v542
        %vm544 = vweird.f32 %v539
        %v545 = vsel %vm544, %v539, %v543
        %v546 = vmul.f32 %v538, %v545
        %v547 = vsub.f32 %v532, %v546
        %v548 = vmul.f32 %v547, %v547
        %v549 = vsel %vm535, %v548, 0.0
        %550 = vadd.xlane.f32.xlu0 %v549
        %v551 = vpop.xlane.xlu0 %550
        %v552 = vrcp.pop 31.0
        %v553 = vmul.f32 31.0, %v552
        %v554 = vsub.f32 1.0, %v553
        %v555 = vmul.f32 %v552, %v554
        %v556 = vadd.f32 %v552, %v555
        %vm557 = vweird.f32 %v552
        %v558 = vsel %vm557, %v552, %v556
        %v559 = vmul.f32 %v551, %v558
        %v561 = vperm.slane %v533, 0
        %v563 = vmul.f32 %v561, %v547
        %v564 = vrsqrt.pop %v559
        %v565 = vmul.f32 %v564, %v559
        %v566 = vmul.f32 %v565, %v564
        %v567 = vmul.f32 0.5, %v566
        %v568 = vsub.f32 1.5, %v567
        %v569 = vmul.f32 %v564, %v568
        %v570 = vmul.f32 %v559, %v569
        %vm571 = vcmp.eq.f32.partialorder %v559, inf
        %v572 = vsel %vm571, %v559, %v570
        %vm573 = vcmp.eq.f32.partialorder %v559, 0.0
        %v574 = vand.u32 %v559, 2147483648
        %v575 = vsel %vm573, %v574, %v572
        %v576 = vadd.f32 %v575, 1e-06
        %v577 = vrcp.pop %v576
        %v578 = vmul.f32 %v576, %v577
        %v579 = vsub.f32 1.0, %v578
        %v580 = vmul.f32 %v577, %v579
        %v581 = vadd.f32 %v577, %v580
        %vm582 = vweird.f32 %v576
        %vm583 = vweird.f32 %v577
        %vm584 = vmor %vm582, %vm583
        %v585 = vsel %vm584, %v577, %v581
        %v586 = vand.u32 2147483647, %v576
        %vm587 = vcmp.eq.f32.partialorder %v586, 8.507059e+37
        %v588 = vand.u32 %v576, 2147483648
        %v589 = vor.u32 1.1754944e-38, %v588
        %v590 = vsel %vm587, %v589, %v585
        %v591 = vmul.f32 %v563, %v590
        %v593 = vperm.slane %v534, 0
        %v595 = vadd.f32 %v591, %v593
        %v596 = vld [vmem:[%s516] sm:$0xff]
        %v597 = vsel %vm535, %v596, 0.0
        %598 = vadd.xlane.f32.xlu0 %v597
        %v599 = vpop.xlane.xlu0 %598
        %v600 = vmul.f32 %v599, %v545
        %v601 = vsub.f32 %v596, %v600
        %v602 = vmul.f32 %v601, %v601
        %v603 = vsel %vm535, %v602, 0.0
        %604 = vadd.xlane.f32.xlu0 %v603
        %v605 = vpop.xlane.xlu0 %604
        %v606 = vmul.f32 %v605, %v558
        %v607 = vmul.f32 %v561, %v601
        %v608 = vrsqrt.pop %v606
        %v609 = vmul.f32 %v608, %v606
        %v610 = vmul.f32 %v609, %v608
        %v611 = vmul.f32 0.5, %v610
        %v612 = vsub.f32 1.5, %v611
        %v613 = vmul.f32 %v608, %v612
        %v614 = vmul.f32 %v606, %v613
        %vm615 = vcmp.eq.f32.partialorder %v606, inf
        %v616 = vsel %vm615, %v606, %v614
        %vm617 = vcmp.eq.f32.partialorder %v606, 0.0
        %v618 = vand.u32 %v606, 2147483648
        %v619 = vsel %vm617, %v618, %v616
        %v620 = vadd.f32 %v619, 1e-06
        %v621 = vrcp.pop %v620
        %v622 = vmul.f32 %v620, %v621
        %v623 = vsub.f32 1.0, %v622
        %v624 = vmul.f32 %v621, %v623
        %v625 = vadd.f32 %v621, %v624
        %vm626 = vweird.f32 %v620
        %vm627 = vweird.f32 %v621
        %vm628 = vmor %vm626, %vm627
        %v629 = vsel %vm628, %v621, %v625
        %v630 = vand.u32 2147483647, %v620
        %vm631 = vcmp.eq.f32.partialorder %v630, 8.507059e+37
        %v632 = vand.u32 %v620, 2147483648
        %v633 = vor.u32 1.1754944e-38, %v632
        %v634 = vsel %vm631, %v633, %v629
        %v635 = vmul.f32 %v607, %v634
        %v636 = vadd.f32 %v635, %v593
        %v637 = vpack.c.bf16 %v595, %v595
        %v638 = vld [vmem:[%s5] sm:$0xf]
        %v639 = vld [vmem:[%s5 + $0x4] sm:$0xf]
        %v640 = vld [vmem:[%s5 + $0x8] sm:$0xf]
        %v641 = vld [vmem:[%s5 + $0xc] sm:$0xf]
        %v642 = vld [vmem:[#allocation7] sm:$0x1]
        %v644 = vperm.slane %v642, 0
        %v650 = vunpack.c.l.b16 %v638
        %v651 = vunpack.c.l.b16 %v639
        %v652 = vunpack.c.l.b16 %v640
        %v653 = vunpack.c.l.b16 %v641
        %v654 = vpack.c.b16 %v651, %v650
        %v655 = vpack.c.b16 %v653, %v652
        %v659 = vsel %vm535, %v637, 0
        %661 = vmatpush.bf16.msra.mxu0 0
        %662 = vmatpush.bf16.msra.mxu0 0
        %663 = vmatpush.bf16.msra.mxu0 0
        %664 = vmatpush.bf16.msra.mxu0 0
        %665 = vmatpush.bf16.msra.mxu0 0
        %666 = vmatpush.bf16.msra.mxu0 0
        %667 = vmatpush.bf16.msra.mxu0 %v655
        %668 = vmatpush.bf16.msra.mxu0 %v654
        %669 = vmatmul.bf16.gmra.mxu0 %v659
        %v670 = vpop.f32.mrf.mxu0
        %v671 = vadd.f32 %v644, %v670
        %v672 = vpop.f32.mrf.mxu0
        %673 = vdwg.mxu0
        %v674 = vmul.f32 %v671, 0.35355338
        %v675 = vpack.c.bf16 %v636, %v636
        %v676 = vld [vmem:[%s7] sm:$0xf]
        %v677 = vld [vmem:[%s7 + $0x4] sm:$0xf]
        %v678 = vld [vmem:[%s7 + $0x8] sm:$0xf]
        %v679 = vld [vmem:[%s7 + $0xc] sm:$0xf]
        %v680 = vld [vmem:[#allocation8] sm:$0x1]
        %v682 = vperm.slane %v680, 0
        %v688 = vunpack.c.l.b16 %v676
        %v689 = vunpack.c.l.b16 %v677
        %v690 = vunpack.c.l.b16 %v678
        %v691 = vunpack.c.l.b16 %v679
        %v692 = vpack.c.b16 %v689, %v688
        %v693 = vpack.c.b16 %v691, %v690
        %v697 = vsel %vm535, %v675, 0
        %699 = vmatpush.bf16.msra.mxu0 0
        %700 = vmatpush.bf16.msra.mxu0 0
        %701 = vmatpush.bf16.msra.mxu0 0
        %702 = vmatpush.bf16.msra.mxu0 0
        %703 = vmatpush.bf16.msra.mxu0 0
        %704 = vmatpush.bf16.msra.mxu0 0
        %705 = vmatpush.bf16.msra.mxu0 %v693
        %706 = vmatpush.bf16.msra.mxu0 %v692
        %707 = vmatmul.bf16.gmra.mxu0 %v697
        %v708 = vpop.f32.mrf.mxu0
        %v709 = vadd.f32 %v682, %v708
        %v710 = vpop.f32.mrf.mxu0
        %711 = vdwg.mxu0
        %v712 = vpack.c.bf16 %v674, %v674
        %v713 = vpack.c.bf16 %v709, %v709
        %v714 = vld [vmem:[%s523] sm:$0xff]
        %vm715 = vcmask 64512
        %v717 = vsel %vm715, %v712, 0
        %v720 = vsel %vm715, %v713, 0
        %722 = vmatpush.bf16.xpose.msra.mxu0 0
        %723 = vmatpush.bf16.xpose.msra.mxu0 0
        %724 = vmatpush.bf16.xpose.msra.mxu0 0
        %725 = vmatpush.bf16.xpose.msra.mxu0 0
        %726 = vmatpush.bf16.xpose.msra.mxu0 0
        %727 = vmatpush.bf16.xpose.msra.mxu0 0
        %728 = vmatpush.bf16.xpose.msra.mxu0 0
        %729 = vmatpush.bf16.xpose.msra.mxu0 %v720
        %730 = vmatmul.bf16.gmra.mxu0 %v717
        %v731 = vpop.f32.mrf.mxu0
        %v732 = vadd.f32 %v714, %v731
        %v733 = vpop.f32.mrf.mxu0
        %734 = vdwg.mxu0
        %v735 = vsel %vm715, %v732, -inf
        %736 = vmax.xlane.f32.xlu0 %v735
        %v737 = vpop.xlane.xlu0 %736
        %v738 = vsub.f32 %v732, %v737
        %v739 = vmul.f32 %v738, 1.442695
        %v740 = vpow.pop %v739
        %v741 = vsel %vm715, %v740, 0.0
        %742 = vadd.xlane.f32.xlu0 %v741
        %v743 = vpop.xlane.xlu0 %742
        %v744 = vpack.c.bf16 %v740, %v740
        %v746 = vunpack.c.l.b16 %v713
        %v747 = vpack.c.b16 %v746, %v746
        %748 = vrot.lane.b32.xlu0 %v747, 96
        %v749 = vpop.permute.xlu0 %748
        %v751 = vsel %vm715, %v744, 0
        %vm753 = vcmask 1043456
        %v755 = vsel %vm753, %v749, 0
        %757 = vmatpush.bf16.msra.mxu0 0
        %758 = vmatpush.bf16.msra.mxu0 0
        %759 = vmatpush.bf16.msra.mxu0 0
        %760 = vmatpush.bf16.msra.mxu0 0
        %761 = vmatpush.bf16.msra.mxu0 0
        %762 = vmatpush.bf16.msra.mxu0 0
        %763 = vmatpush.bf16.msra.mxu0 0
        %764 = vmatpush.bf16.msra.mxu0 %v755
        %765 = vmatmul.bf16.gmra.mxu0 %v751
        %v766 = vpop.f32.mrf.mxu0
        %v767 = vadd.f32 0.0, %v766
        %v768 = vpop.f32.mrf.mxu0
        %769 = vdwg.mxu0
        %v770 = vrcp.pop %v743
        %v771 = vmul.f32 %v743, %v770
        %v772 = vsub.f32 1.0, %v771
        %v773 = vmul.f32 %v770, %v772
        %v774 = vadd.f32 %v770, %v773
        %vm775 = vweird.f32 %v743
        %vm776 = vweird.f32 %v770
        %vm777 = vmor %vm775, %vm776
        %v778 = vsel %vm777, %v770, %v774
        %v779 = vand.u32 2147483647, %v743
        %vm780 = vcmp.eq.f32.partialorder %v779, 8.507059e+37
        %v781 = vand.u32 %v743, 2147483648
        %v782 = vor.u32 1.1754944e-38, %v781
        %v783 = vsel %vm780, %v782, %v778
        %v784 = vmul.f32 %v767, %v783
        %v785 = vpack.c.bf16 %v784, %v784
        %vm786 = vcmask 60416
        %787 = vst.msk [vmem:[#allocation2] sm:$0xf] %vm786, %v785
        %v789 = vunpack.c.l.b16 %v712
        %v790 = vpack.c.b16 %v789, %v789
        %791 = vrot.lane.b32.xlu0 %v790, 120
        %v792 = vpop.permute.xlu0 %791
        %793 = vrot.lane.b32.xlu0 %v747, 120
        %v794 = vpop.permute.xlu0 %793
        %v796 = vsel %vm715, %v792, 0
        %v799 = vsel %vm715, %v794, 0
        %801 = vmatpush.bf16.xpose.msra.mxu0 0
        %802 = vmatpush.bf16.xpose.msra.mxu0 0
        %803 = vmatpush.bf16.xpose.msra.mxu0 0
        %804 = vmatpush.bf16.xpose.msra.mxu0 0
        %805 = vmatpush.bf16.xpose.msra.mxu0 0
        %806 = vmatpush.bf16.xpose.msra.mxu0 0
        %807 = vmatpush.bf16.xpose.msra.mxu0 0
        %808 = vmatpush.bf16.xpose.msra.mxu0 %v799
        %809 = vmatmul.bf16.gmra.mxu0 %v796
        %v810 = vpop.f32.mrf.mxu0
        %v811 = vadd.f32 %v714, %v810
        %v812 = vpop.f32.mrf.mxu0
        %813 = vdwg.mxu0
        %v814 = vsel %vm715, %v811, -inf
        %815 = vmax.xlane.f32.xlu0 %v814
        %v816 = vpop.xlane.xlu0 %815
        %v817 = vsub.f32 %v811, %v816
        %v818 = vmul.f32 %v817, 1.442695
        %v819 = vpow.pop %v818
        %v820 = vsel %vm715, %v819, 0.0
        %821 = vadd.xlane.f32.xlu0 %v820
        %v822 = vpop.xlane.xlu0 %821
        %v823 = vpack.c.bf16 %v819, %v819
        %824 = vrot.lane.b32.xlu0 %v747, 88
        %v825 = vpop.permute.xlu0 %824
        %v827 = vsel %vm715, %v823, 0
        %v830 = vsel %vm753, %v825, 0
        %832 = vmatpush.bf16.msra.mxu0 0
        %833 = vmatpush.bf16.msra.mxu0 0
        %834 = vmatpush.bf16.msra.mxu0 0
        %835 = vmatpush.bf16.msra.mxu0 0
        %836 = vmatpush.bf16.msra.mxu0 0
        %837 = vmatpush.bf16.msra.mxu0 0
        %838 = vmatpush.bf16.msra.mxu0 0
        %839 = vmatpush.bf16.msra.mxu0 %v830
        %840 = vmatmul.bf16.gmra.mxu0 %v827
        %v841 = vpop.f32.mrf.mxu0
        %v842 = vadd.f32 0.0, %v841
        %v843 = vpop.f32.mrf.mxu0
        %844 = vdwg.mxu0
        %v845 = vrcp.pop %v822
        %v846 = vmul.f32 %v822, %v845
        %v847 = vsub.f32 1.0, %v846
        %v848 = vmul.f32 %v845, %v847
        %v849 = vadd.f32 %v845, %v848
        %vm850 = vweird.f32 %v822
        %vm851 = vweird.f32 %v845
        %vm852 = vmor %vm850, %vm851
        %v853 = vsel %vm852, %v845, %v849
        %v854 = vand.u32 2147483647, %v822
        %vm855 = vcmp.eq.f32.partialorder %v854, 8.507059e+37
        %v856 = vand.u32 %v822, 2147483648
        %v857 = vor.u32 1.1754944e-38, %v856
        %v858 = vsel %vm855, %v857, %v853
        %v859 = vmul.f32 %v842, %v858
        %v860 = vpack.c.bf16 %v859, %v859
        %862 = vrot.lane.b32.xlu0 %v860, 8
        %v863 = vpop.permute.xlu0 %862
        %vm865 = vcmask 126016
        %866 = vst.msk [vmem:[#allocation2] sm:$0xf] %vm865, %v863
        %867 = vrot.lane.b32.xlu0 %v790, 112
        %v868 = vpop.permute.xlu0 %867
        %869 = vrot.lane.b32.xlu0 %v747, 112
        %v870 = vpop.permute.xlu0 %869
        %v872 = vsel %vm715, %v868, 0
        %v875 = vsel %vm715, %v870, 0
        %877 = vmatpush.bf16.xpose.msra.mxu0 0
        %878 = vmatpush.bf16.xpose.msra.mxu0 0
        %879 = vmatpush.bf16.xpose.msra.mxu0 0
        %880 = vmatpush.bf16.xpose.msra.mxu0 0
        %881 = vmatpush.bf16.xpose.msra.mxu0 0
        %882 = vmatpush.bf16.xpose.msra.mxu0 0
        %883 = vmatpush.bf16.xpose.msra.mxu0 0
        %884 = vmatpush.bf16.xpose.msra.mxu0 %v875
        %885 = vmatmul.bf16.gmra.mxu0 %v872
        %v886 = vpop.f32.mrf.mxu0
        %v887 = vadd.f32 %v714, %v886
        %v888 = vpop.f32.mrf.mxu0
        %889 = vdwg.mxu0
        %v890 = vsel %vm715, %v887, -inf
        %891 = vmax.xlane.f32.xlu0 %v890
        %v892 = vpop.xlane.xlu0 %891
        %v893 = vsub.f32 %v887, %v892
        %v894 = vmul.f32 %v893, 1.442695
        %v895 = vpow.pop %v894
        %v896 = vsel %vm715, %v895, 0.0
        %897 = vadd.xlane.f32.xlu0 %v896
        %v898 = vpop.xlane.xlu0 %897
        %v899 = vpack.c.bf16 %v895, %v895
        %900 = vrot.lane.b32.xlu0 %v747, 80
        %v901 = vpop.permute.xlu0 %900
        %v903 = vsel %vm715, %v899, 0
        %v906 = vsel %vm753, %v901, 0
        %908 = vmatpush.bf16.msra.mxu0 0
        %909 = vmatpush.bf16.msra.mxu0 0
        %910 = vmatpush.bf16.msra.mxu0 0
        %911 = vmatpush.bf16.msra.mxu0 0
        %912 = vmatpush.bf16.msra.mxu0 0
        %913 = vmatpush.bf16.msra.mxu0 0
        %914 = vmatpush.bf16.msra.mxu0 0
        %915 = vmatpush.bf16.msra.mxu0 %v906
        %916 = vmatmul.bf16.gmra.mxu0 %v903
        %v917 = vpop.f32.mrf.mxu0
        %v918 = vadd.f32 0.0, %v917
        %v919 = vpop.f32.mrf.mxu0
        %920 = vdwg.mxu0
        %v921 = vrcp.pop %v898
        %v922 = vmul.f32 %v898, %v921
        %v923 = vsub.f32 1.0, %v922
        %v924 = vmul.f32 %v921, %v923
        %v925 = vadd.f32 %v921, %v924
        %vm926 = vweird.f32 %v898
        %vm927 = vweird.f32 %v921
        %vm928 = vmor %vm926, %vm927
        %v929 = vsel %vm928, %v921, %v925
        %v930 = vand.u32 2147483647, %v898
        %vm931 = vcmp.eq.f32.partialorder %v930, 8.507059e+37
        %v932 = vand.u32 %v898, 2147483648
        %v933 = vor.u32 1.1754944e-38, %v932
        %v934 = vsel %vm931, %v933, %v929
        %v935 = vmul.f32 %v918, %v934
        %v936 = vpack.c.bf16 %v935, %v935
        %938 = vrot.lane.b32.xlu0 %v936, 16
        %v939 = vpop.permute.xlu0 %938
        %vm941 = vcmask 191616
        %942 = vst.msk [vmem:[#allocation2] sm:$0xf] %vm941, %v939
        %943 = vrot.lane.b32.xlu0 %v790, 104
        %v944 = vpop.permute.xlu0 %943
        %945 = vrot.lane.b32.xlu0 %v747, 104
        %v946 = vpop.permute.xlu0 %945
        %v948 = vsel %vm715, %v944, 0
        %v951 = vsel %vm715, %v946, 0
        %953 = vmatpush.bf16.xpose.msra.mxu0 0
        %954 = vmatpush.bf16.xpose.msra.mxu0 0
        %955 = vmatpush.bf16.xpose.msra.mxu0 0
        %956 = vmatpush.bf16.xpose.msra.mxu0 0
        %957 = vmatpush.bf16.xpose.msra.mxu0 0
        %958 = vmatpush.bf16.xpose.msra.mxu0 0
        %959 = vmatpush.bf16.xpose.msra.mxu0 0
        %960 = vmatpush.bf16.xpose.msra.mxu0 %v951
        %961 = vmatmul.bf16.gmra.mxu0 %v948
        %v962 = vpop.f32.mrf.mxu0
        %v963 = vadd.f32 %v714, %v962
        %v964 = vpop.f32.mrf.mxu0
        %965 = vdwg.mxu0
        %v966 = vsel %vm715, %v963, -inf
        %967 = vmax.xlane.f32.xlu0 %v966
        %v968 = vpop.xlane.xlu0 %967
        %v969 = vsub.f32 %v963, %v968
        %v970 = vmul.f32 %v969, 1.442695
        %v971 = vpow.pop %v970
        %v972 = vsel %vm715, %v971, 0.0
        %973 = vadd.xlane.f32.xlu0 %v972
        %v974 = vpop.xlane.xlu0 %973
        %v975 = vpack.c.bf16 %v971, %v971
        %976 = vrot.lane.b32.xlu0 %v747, 72
        %v977 = vpop.permute.xlu0 %976
        %v979 = vsel %vm715, %v975, 0
        %v982 = vsel %vm753, %v977, 0
        %984 = vmatpush.bf16.msra.mxu0 0
        %985 = vmatpush.bf16.msra.mxu0 0
        %986 = vmatpush.bf16.msra.mxu0 0
        %987 = vmatpush.bf16.msra.mxu0 0
        %988 = vmatpush.bf16.msra.mxu0 0
        %989 = vmatpush.bf16.msra.mxu0 0
        %990 = vmatpush.bf16.msra.mxu0 0
        %991 = vmatpush.bf16.msra.mxu0 %v982
        %992 = vmatmul.bf16.gmra.mxu0 %v979
        %v993 = vpop.f32.mrf.mxu0
        %v994 = vadd.f32 0.0, %v993
        %v995 = vpop.f32.mrf.mxu0
        %996 = vdwg.mxu0
        %v997 = vrcp.pop %v974
        %v998 = vmul.f32 %v974, %v997
        %v999 = vsub.f32 1.0, %v998
        %v1000 = vmul.f32 %v997, %v999
        %v1001 = vadd.f32 %v997, %v1000
        %vm1002 = vweird.f32 %v974
        %vm1003 = vweird.f32 %v997
        %vm1004 = vmor %vm1002, %vm1003
        %v1005 = vsel %vm1004, %v997, %v1001
        %v1006 = vand.u32 2147483647, %v974
        %vm1007 = vcmp.eq.f32.partialorder %v1006, 8.507059e+37
        %v1008 = vand.u32 %v974, 2147483648
        %v1009 = vor.u32 1.1754944e-38, %v1008
        %v1010 = vsel %vm1007, %v1009, %v1005
        %v1011 = vmul.f32 %v994, %v1010
        %v1012 = vpack.c.bf16 %v1011, %v1011
        %1014 = vrot.lane.b32.xlu0 %v1012, 24
        %v1015 = vpop.permute.xlu0 %1014
        %vm1017 = vcmask 257216
        %1018 = vst.msk [vmem:[#allocation2] sm:$0xf] %vm1017, %v1015
        %v1019 = vld [vmem:[#allocation2] sm:$0xf]
        %v1020 = vld [vmem:[%s9] sm:$0xf]
        %v1021 = vld [vmem:[%s9 + $0x4] sm:$0xf]
        %v1022 = vld [vmem:[%s9 + $0x8] sm:$0xf]
        %v1023 = vld [vmem:[%s9 + $0xc] sm:$0xf]
        %v1024 = vld [vmem:[#allocation10] sm:$0x1]
        %v1026 = vperm.slane %v1024, 0
        %v1032 = vunpack.c.l.b16 %v1020
        %v1033 = vunpack.c.l.b16 %v1021
        %v1034 = vunpack.c.l.b16 %v1022
        %v1035 = vunpack.c.l.b16 %v1023
        %v1036 = vpack.c.b16 %v1033, %v1032
        %v1037 = vpack.c.b16 %v1035, %v1034
        %v1041 = vsel %vm535, %v1019, 0
        %1043 = vmatpush.bf16.msra.mxu0 0
        %1044 = vmatpush.bf16.msra.mxu0 0
        %1045 = vmatpush.bf16.msra.mxu0 0
        %1046 = vmatpush.bf16.msra.mxu0 0
        %1047 = vmatpush.bf16.msra.mxu0 0
        %1048 = vmatpush.bf16.msra.mxu0 0
        %1049 = vmatpush.bf16.msra.mxu0 %v1037
        %1050 = vmatpush.bf16.msra.mxu0 %v1036
        %1051 = vmatmul.bf16.gmra.mxu0 %v1041
        %v1052 = vpop.f32.mrf.mxu0
        %v1053 = vadd.f32 %v1026, %v1052
        %v1054 = vpop.f32.mrf.mxu0
        %1055 = vdwg.mxu0
        %v1056 = vadd.f32 %v532, %v1053
        %1057 = vst.msk [vmem:[%s530] sm:$0xff] %vm535, %v1056
        %p1058 = scmp.lt.s32.totalorder %s29, 1
        %s1059 = scalar_select %p1058, %s29, 1
        %p1060 = scmp.lt.s32.totalorder %s30, 0
        %s1061 = scalar_select %p1060, %s30, 0
        %s1062 = sadd.s32 %s1061, %s1059
        %s1063 = smul.addr %s1062, 8
        %s1064 = scalar_lea.vmem %s11, %s1063
        // Predicated region
        $region85: #{decoder.7} parent=63 // pred_check
          %p1065 = pneg %p307
        $region86: #{decoder.7} parent=63 // pred_check_branch
          %1067 = sbr.rel (%p1065) target = $region88
        $region87: #{decoder.7} parent=63 // pred_region
          _
        $region88: #{decoder.7} parent=63 // pred_fallthru
          _
      $region64: #{decoder.7} parent=5 // pred_fallthru
        _
      %p1068 = scmp.le.s32.totalorder 2, %s20
      // Predicated region
      $region89: #{decoder.7} parent=5 // pred_check
        %p1069 = pneg %p1068
      $region90: #{decoder.7} parent=5 // pred_check_branch
        %1071 = sbr.rel (%p1069) target = $region92
      $region91: #{decoder.7} parent=5 // pred_region
        %s1072 = ssub.s32 %s20, 2
        // Predicated region
        $region93: #{decoder.7} parent=91 // pred_check
          %p1073 = pneg %p313
        $region94: #{decoder.7} parent=91 // pred_check_branch
          %1075 = sbr.rel (%p1073) target = $region96
        $region95: #{decoder.7} parent=91 // pred_region
          %p1076 = scmp.lt.s32.totalorder %s31, 1
          %s1077 = scalar_select %p1076, %s31, 1
          %p1078 = scmp.lt.s32.totalorder %s32, 0
          %s1079 = scalar_select %p1078, %s32, 0
          %s1080 = sadd.s32 %s1079, %s1077
          %s1081 = smul.addr %s1080, 8
          %s1082 = scalar_lea.vmem %s11, %s1081
        $region96: #{decoder.7} parent=91 // pred_fallthru
          _
      $region92: #{decoder.7} parent=5 // pred_fallthru
        _
    $region6: #{decoder.7} parent=1 // loop_footer
      %s24 = sadd.s32 1, %s20
    $region7: #{decoder.7} parent=1 // loop_footer_branch
      %19 = sbr.rel target = $region3
    $region8: #{decoder.7} parent=1 // loop_exit
      _
    %1083 = vsyncpa [#allocation4], 1
    %s1084 = scalar_lea.sflag [#allocation4], 1
    %1085 = vsyncpa %s1084, 1
    %1086 = vsyncpa [#allocation6], 1
    %1087 = vsyncpa [#allocation9], 1

// kernel: decoder.10
$region0: #{decoder.10}
  #allocation0 [shape = 'u32[]', space=smem, size = 0x4, offset = 0x4, fixed_abs, tag = 'smem constant byte address 0x4 - core index']
  #allocation1 [shape = 'u32[72,128]{1,0:T(1,128)}', space=vmem, size = 0x9000, scoped, tag = 'internal scratch']
  #allocation2 [shape = 'bf16[8,32]{1,0:T(8,128)(2,1)}', space=vmem, size = 0x800, scoped, tag = 'scratch operand']
  %s0 = inlined_call_operand.vmem [shape: f32[2,8,32], index: 0, kind: input, shape index: {}, may-alias: {0,1}]
  %s1 = inlined_call_operand.vmem [shape: f32[2,8,32], index: 1, kind: input, shape index: {}, may-alias: {0,1}]
  %s2 = inlined_call_operand.vmem [shape: f32[2,8,8], index: 2, kind: input, shape index: {}]
  %s3 = inlined_call_operand.vmem [shape: f32[1,32], index: 3, kind: input, shape index: {}]
  %s4 = inlined_call_operand.vmem [shape: f32[1,32], index: 4, kind: input, shape index: {}]
  %s5 = inlined_call_operand.vmem [shape: bf16[32,32], index: 5, kind: input, shape index: {}]
  %s6 = inlined_call_operand.vmem [shape: f32[1,32], index: 6, kind: input, shape index: {}]
  %s7 = inlined_call_operand.vmem [shape: bf16[32,64], index: 7, kind: input, shape index: {}]
  %s8 = inlined_call_operand.vmem [shape: f32[1,64], index: 8, kind: input, shape index: {}]
  %s9 = inlined_call_operand.vmem [shape: bf16[32,32], index: 9, kind: input, shape index: {}]
  %s10 = inlined_call_operand.vmem [shape: f32[1,32], index: 10, kind: input, shape index: {}]
  %s11 = inlined_call_operand.vmem [shape: f32[2,8,32], index: 11, kind: output, shape index: {}]
  %s12 = sld [smem:[#allocation0]]
  $region77: #{decoder.10} parent=0
    _
  %s14 = ssub.s32 1, %s12
  %s15 = scalar_select 0, %s14, %s12
  loop: start=0, step=1, limit=4
  $region2: #{decoder.10} parent=0 // loop_pre_header
    _
  $region3: #{decoder.10} parent=0 // loop_header
    %s17 = sphi 0, %s21
    %p18 = scmp.ge.s32.totalorder %s17, 4
    %s24 = sphi 0, %s36
    %s25 = sphi 0, %s32
    %s26 = sphi 0, %s24
    %s27 = sphi 0, %s25
    %s28 = sphi 0, %s26
    %s29 = sphi 0, %s27
    %s41 = sphi 0, %s43
    %s44 = sphi 0, %s41
    %s45 = sphi 0, %s44
    %s61 = sphi 0, %s45
    %s67 = sphi 0, %s69
    %s70 = sphi 0, %s67
    %s71 = sphi 0, %s70
    %s87 = sphi 0, %s71
    %s95 = sphi 0, %s97
    %s98 = sphi 0, %s95
    %s99 = sphi 0, %s98
    %s115 = sphi 0, %s99
    %s119 = sphi 0, %s119
    %s121 = sphi 0, %s119
    %s122 = sphi 0, %s121
    %s136 = sphi 0, %s122
    %s140 = sphi 0, %s140
    %s142 = sphi 0, %s140
    %s143 = sphi 0, %s142
    %s157 = sphi 0, %s143
    %s161 = sphi 0, %s161
    %s163 = sphi 0, %s161
    %s164 = sphi 0, %s163
    %s178 = sphi 0, %s164
    %s182 = sphi 0, %s182
    %s184 = sphi 0, %s182
    %s185 = sphi 0, %s184
    %s199 = sphi 0, %s185
    %s203 = sphi 0, %s203
    %s205 = sphi 0, %s203
    %s206 = sphi 0, %s205
    %s220 = sphi 0, %s206
    %s224 = sphi 0, %s224
    %s226 = sphi 0, %s224
    %s227 = sphi 0, %s226
    %s241 = sphi 0, %s227
    %s245 = sphi 0, %s245
    %s247 = sphi 0, %s245
    %s248 = sphi 0, %s247
    %s262 = sphi 0, %s248
    %s266 = sphi 0, %s266
    %s268 = sphi 0, %s266
    %s269 = sphi 0, %s268
    %s283 = sphi 0, %s269
    %s291 = sphi 0, %s293
    %s294 = sphi 0, %s291
    %s295 = sphi 0, %s294
    %s311 = sphi 0, %s295
  $region4: #{decoder.10} parent=0 // loop_header_branch
    %20 = sbr.rel (%p18) target = $region8
  $region5: #{decoder.10} parent=0 // loop_body
    %s22 = ssub.s32 %s17, 1
    %s23 = ssub.s32 %s17, 2
    %s30 = sadd.s32 1, %s25
    %p31 = scmp.ge.s32.totalorder %s30, 1
    %s32 = scalar_select %p31, 0, %s30
    %s33 = sadd.s32 1, %s24
    %s34 = scalar_select %p31, %s33, %s24
    %p35 = scmp.ge.s32.totalorder %s34, 2
    %s36 = scalar_select %p35, 0, %s34
    %s37 = ssub.s32 %s24, %s36
    %s38 = ssub.s32 %s25, %s32
    %s39 = sor.u32 %s37, %s38
    %p40 = scmp.eq.s32.totalorder %s39, 0
    %s42 = sadd.s32 %s41, 1
    %s43 = scalar_select %p40, %s41, %s42
    %p46 = pneg %p40
    %p47 = scmp.eq.s32.totalorder %s17, 1
    %p48 = por %p46, %p47
    %p49 = scmp.ne.s32.totalorder %s41, %s44
    %p50 = scmp.eq.s32.totalorder %s17, 0
    %p51 = por %p49, %p50
    %p52 = scmp.ne.s32.totalorder %s41, %s44
    %p53 = scmp.eq.s32.totalorder %s22, 1
    %p54 = por %p52, %p53
    %p55 = scmp.ne.s32.totalorder %s44, %s45
    %p56 = scmp.eq.s32.totalorder %s22, 0
    %p57 = por %p55, %p56
    %p58 = scmp.ne.s32.totalorder %s44, %s45
    %p59 = scmp.eq.s32.totalorder %s23, 1
    %p60 = por %p58, %p59
    %p62 = scmp.ne.s32.totalorder %s45, %s61
    %p63 = scmp.eq.s32.totalorder %s23, 0
    %p64 = por %p62, %p63
    %s65 = ssub.s32 %s24, %s36
    %p66 = scmp.eq.s32.totalorder %s65, 0
    %s68 = sadd.s32 %s67, 1
    %s69 = scalar_select %p66, %s67, %s68
    %p72 = pneg %p66
    %p73 = scmp.eq.s32.totalorder %s17, 1
    %p74 = por %p72, %p73
    %p75 = scmp.ne.s32.totalorder %s67, %s70
    %p76 = scmp.eq.s32.totalorder %s17, 0
    %p77 = por %p75, %p76
    %p78 = scmp.ne.s32.totalorder %s67, %s70
    %p79 = scmp.eq.s32.totalorder %s22, 1
    %p80 = por %p78, %p79
    %p81 = scmp.ne.s32.totalorder %s70, %s71
    %p82 = scmp.eq.s32.totalorder %s22, 0
    %p83 = por %p81, %p82
    %p84 = scmp.ne.s32.totalorder %s70, %s71
    %p85 = scmp.eq.s32.totalorder %s23, 1
    %p86 = por %p84, %p85
    %p88 = scmp.ne.s32.totalorder %s71, %s87
    %p89 = scmp.eq.s32.totalorder %s23, 0
    %p90 = por %p88, %p89
    %s91 = ssub.s32 %s24, %s36
    %s92 = ssub.s32 %s25, %s32
    %s93 = sor.u32 %s91, %s92
    %p94 = scmp.eq.s32.totalorder %s93, 0
    %s96 = sadd.s32 %s95, 1
    %s97 = scalar_select %p94, %s95, %s96
    %p100 = pneg %p94
    %p101 = scmp.eq.s32.totalorder %s17, 1
    %p102 = por %p100, %p101
    %p103 = scmp.ne.s32.totalorder %s95, %s98
    %p104 = scmp.eq.s32.totalorder %s17, 0
    %p105 = por %p103, %p104
    %p106 = scmp.ne.s32.totalorder %s95, %s98
    %p107 = scmp.eq.s32.totalorder %s22, 1
    %p108 = por %p106, %p107
    %p109 = scmp.ne.s32.totalorder %s98, %s99
    %p110 = scmp.eq.s32.totalorder %s22, 0
    %p111 = por %p109, %p110
    %p112 = scmp.ne.s32.totalorder %s98, %s99
    %p113 = scmp.eq.s32.totalorder %s23, 1
    %p114 = por %p112, %p113
    %p116 = scmp.ne.s32.totalorder %s99, %s115
    %p117 = scmp.eq.s32.totalorder %s23, 0
    %p118 = por %p116, %p117
    %s120 = sadd.s32 %s119, 1
    %p123 = scmp.eq.s32.totalorder %s17, 1
    %p124 = scmp.ne.s32.totalorder %s119, %s121
    %p125 = scmp.eq.s32.totalorder %s17, 0
    %p126 = por %p124, %p125
    %p127 = scmp.ne.s32.totalorder %s119, %s121
    %p128 = scmp.eq.s32.totalorder %s22, 1
    %p129 = por %p127, %p128
    %p130 = scmp.ne.s32.totalorder %s121, %s122
    %p131 = scmp.eq.s32.totalorder %s22, 0
    %p132 = por %p130, %p131
    %p133 = scmp.ne.s32.totalorder %s121, %s122
    %p134 = scmp.eq.s32.totalorder %s23, 1
    %p135 = por %p133, %p134
    %p137 = scmp.ne.s32.totalorder %s122, %s136
    %p138 = scmp.eq.s32.totalorder %s23, 0
    %p139 = por %p137, %p138
    %s141 = sadd.s32 %s140, 1
    %p144 = scmp.eq.s32.totalorder %s17, 1
    %p145 = scmp.ne.s32.totalorder %s140, %s142
    %p146 = scmp.eq.s32.totalorder %s17, 0
    %p147 = por %p145, %p146
    %p148 = scmp.ne.s32.totalorder %s140, %s142
    %p149 = scmp.eq.s32.totalorder %s22, 1
    %p150 = por %p148, %p149
    %p151 = scmp.ne.s32.totalorder %s142, %s143
    %p152 = scmp.eq.s32.totalorder %s22, 0
    %p153 = por %p151, %p152
    %p154 = scmp.ne.s32.totalorder %s142, %s143
    %p155 = scmp.eq.s32.totalorder %s23, 1
    %p156 = por %p154, %p155
    %p158 = scmp.ne.s32.totalorder %s143, %s157
    %p159 = scmp.eq.s32.totalorder %s23, 0
    %p160 = por %p158, %p159
    %s162 = sadd.s32 %s161, 1
    %p165 = scmp.eq.s32.totalorder %s17, 1
    %p166 = scmp.ne.s32.totalorder %s161, %s163
    %p167 = scmp.eq.s32.totalorder %s17, 0
    %p168 = por %p166, %p167
    %p169 = scmp.ne.s32.totalorder %s161, %s163
    %p170 = scmp.eq.s32.totalorder %s22, 1
    %p171 = por %p169, %p170
    %p172 = scmp.ne.s32.totalorder %s163, %s164
    %p173 = scmp.eq.s32.totalorder %s22, 0
    %p174 = por %p172, %p173
    %p175 = scmp.ne.s32.totalorder %s163, %s164
    %p176 = scmp.eq.s32.totalorder %s23, 1
    %p177 = por %p175, %p176
    %p179 = scmp.ne.s32.totalorder %s164, %s178
    %p180 = scmp.eq.s32.totalorder %s23, 0
    %p181 = por %p179, %p180
    %s183 = sadd.s32 %s182, 1
    %p186 = scmp.eq.s32.totalorder %s17, 1
    %p187 = scmp.ne.s32.totalorder %s182, %s184
    %p188 = scmp.eq.s32.totalorder %s17, 0
    %p189 = por %p187, %p188
    %p190 = scmp.ne.s32.totalorder %s182, %s184
    %p191 = scmp.eq.s32.totalorder %s22, 1
    %p192 = por %p190, %p191
    %p193 = scmp.ne.s32.totalorder %s184, %s185
    %p194 = scmp.eq.s32.totalorder %s22, 0
    %p195 = por %p193, %p194
    %p196 = scmp.ne.s32.totalorder %s184, %s185
    %p197 = scmp.eq.s32.totalorder %s23, 1
    %p198 = por %p196, %p197
    %p200 = scmp.ne.s32.totalorder %s185, %s199
    %p201 = scmp.eq.s32.totalorder %s23, 0
    %p202 = por %p200, %p201
    %s204 = sadd.s32 %s203, 1
    %p207 = scmp.eq.s32.totalorder %s17, 1
    %p208 = scmp.ne.s32.totalorder %s203, %s205
    %p209 = scmp.eq.s32.totalorder %s17, 0
    %p210 = por %p208, %p209
    %p211 = scmp.ne.s32.totalorder %s203, %s205
    %p212 = scmp.eq.s32.totalorder %s22, 1
    %p213 = por %p211, %p212
    %p214 = scmp.ne.s32.totalorder %s205, %s206
    %p215 = scmp.eq.s32.totalorder %s22, 0
    %p216 = por %p214, %p215
    %p217 = scmp.ne.s32.totalorder %s205, %s206
    %p218 = scmp.eq.s32.totalorder %s23, 1
    %p219 = por %p217, %p218
    %p221 = scmp.ne.s32.totalorder %s206, %s220
    %p222 = scmp.eq.s32.totalorder %s23, 0
    %p223 = por %p221, %p222
    %s225 = sadd.s32 %s224, 1
    %p228 = scmp.eq.s32.totalorder %s17, 1
    %p229 = scmp.ne.s32.totalorder %s224, %s226
    %p230 = scmp.eq.s32.totalorder %s17, 0
    %p231 = por %p229, %p230
    %p232 = scmp.ne.s32.totalorder %s224, %s226
    %p233 = scmp.eq.s32.totalorder %s22, 1
    %p234 = por %p232, %p233
    %p235 = scmp.ne.s32.totalorder %s226, %s227
    %p236 = scmp.eq.s32.totalorder %s22, 0
    %p237 = por %p235, %p236
    %p238 = scmp.ne.s32.totalorder %s226, %s227
    %p239 = scmp.eq.s32.totalorder %s23, 1
    %p240 = por %p238, %p239
    %p242 = scmp.ne.s32.totalorder %s227, %s241
    %p243 = scmp.eq.s32.totalorder %s23, 0
    %p244 = por %p242, %p243
    %s246 = sadd.s32 %s245, 1
    %p249 = scmp.eq.s32.totalorder %s17, 1
    %p250 = scmp.ne.s32.totalorder %s245, %s247
    %p251 = scmp.eq.s32.totalorder %s17, 0
    %p252 = por %p250, %p251
    %p253 = scmp.ne.s32.totalorder %s245, %s247
    %p254 = scmp.eq.s32.totalorder %s22, 1
    %p255 = por %p253, %p254
    %p256 = scmp.ne.s32.totalorder %s247, %s248
    %p257 = scmp.eq.s32.totalorder %s22, 0
    %p258 = por %p256, %p257
    %p259 = scmp.ne.s32.totalorder %s247, %s248
    %p260 = scmp.eq.s32.totalorder %s23, 1
    %p261 = por %p259, %p260
    %p263 = scmp.ne.s32.totalorder %s248, %s262
    %p264 = scmp.eq.s32.totalorder %s23, 0
    %p265 = por %p263, %p264
    %s267 = sadd.s32 %s266, 1
    %p270 = scmp.eq.s32.totalorder %s17, 1
    %p271 = scmp.ne.s32.totalorder %s266, %s268
    %p272 = scmp.eq.s32.totalorder %s17, 0
    %p273 = por %p271, %p272
    %p274 = scmp.ne.s32.totalorder %s266, %s268
    %p275 = scmp.eq.s32.totalorder %s22, 1
    %p276 = por %p274, %p275
    %p277 = scmp.ne.s32.totalorder %s268, %s269
    %p278 = scmp.eq.s32.totalorder %s22, 0
    %p279 = por %p277, %p278
    %p280 = scmp.ne.s32.totalorder %s268, %s269
    %p281 = scmp.eq.s32.totalorder %s23, 1
    %p282 = por %p280, %p281
    %p284 = scmp.ne.s32.totalorder %s269, %s283
    %p285 = scmp.eq.s32.totalorder %s23, 0
    %p286 = por %p284, %p285
    %s287 = ssub.s32 %s24, %s36
    %s288 = ssub.s32 %s25, %s32
    %s289 = sor.u32 %s287, %s288
    %p290 = scmp.eq.s32.totalorder %s289, 0
    %s292 = sadd.s32 %s291, 1
    %s293 = scalar_select %p290, %s291, %s292
    %p296 = pneg %p290
    %p297 = scmp.eq.s32.totalorder %s17, 1
    %p298 = por %p296, %p297
    %p299 = scmp.ne.s32.totalorder %s291, %s294
    %p300 = scmp.eq.s32.totalorder %s17, 0
    %p301 = por %p299, %p300
    %p302 = scmp.ne.s32.totalorder %s291, %s294
    %p303 = scmp.eq.s32.totalorder %s22, 1
    %p304 = por %p302, %p303
    %p305 = scmp.ne.s32.totalorder %s294, %s295
    %p306 = scmp.eq.s32.totalorder %s22, 0
    %p307 = por %p305, %p306
    %p308 = scmp.ne.s32.totalorder %s294, %s295
    %p309 = scmp.eq.s32.totalorder %s23, 1
    %p310 = por %p308, %p309
    %p312 = scmp.ne.s32.totalorder %s295, %s311
    %p313 = scmp.eq.s32.totalorder %s23, 0
    %p314 = por %p312, %p313
    %p315 = scmp.le.s32.totalorder 1, %s17
    %p316 = scmp.lt.s32.totalorder %s17, 3
    %p317 = pnand %p315, %p316
    %p318 = pneg %p317
    // Predicated region
    $region9: #{decoder.10} parent=5 // pred_check
      _
    $region10: #{decoder.10} parent=5 // pred_check_branch
      %320 = sbr.rel (%p317) target = $region12
    $region11: #{decoder.10} parent=5 // pred_region
      %s321 = ssub.s32 %s17, 1
      // Predicated region
      $region13: #{decoder.10} parent=11 // pred_check
        %p322 = pneg %p132
      $region14: #{decoder.10} parent=11 // pred_check_branch
        %324 = sbr.rel (%p322) target = $region16
      $region15: #{decoder.10} parent=11 // pred_region
        _
      $region16: #{decoder.10} parent=11 // pred_fallthru
        _
      // Predicated region
      $region17: #{decoder.10} parent=11 // pred_check
        %p325 = pneg %p153
      $region18: #{decoder.10} parent=11 // pred_check_branch
        %327 = sbr.rel (%p325) target = $region20
      $region19: #{decoder.10} parent=11 // pred_region
        _
      $region20: #{decoder.10} parent=11 // pred_fallthru
        _
      // Predicated region
      $region21: #{decoder.10} parent=11 // pred_check
        %p328 = pneg %p174
      $region22: #{decoder.10} parent=11 // pred_check_branch
        %330 = sbr.rel (%p328) target = $region24
      $region23: #{decoder.10} parent=11 // pred_region
        _
      $region24: #{decoder.10} parent=11 // pred_fallthru
        _
      // Predicated region
      $region25: #{decoder.10} parent=11 // pred_check
        %p331 = pneg %p195
      $region26: #{decoder.10} parent=11 // pred_check_branch
        %333 = sbr.rel (%p331) target = $region28
      $region27: #{decoder.10} parent=11 // pred_region
        _
      $region28: #{decoder.10} parent=11 // pred_fallthru
        _
      // Predicated region
      $region29: #{decoder.10} parent=11 // pred_check
        %p334 = pneg %p216
      $region30: #{decoder.10} parent=11 // pred_check_branch
        %336 = sbr.rel (%p334) target = $region32
      $region31: #{decoder.10} parent=11 // pred_region
        _
      $region32: #{decoder.10} parent=11 // pred_fallthru
        _
      // Predicated region
      $region33: #{decoder.10} parent=11 // pred_check
        %p337 = pneg %p237
      $region34: #{decoder.10} parent=11 // pred_check_branch
        %339 = sbr.rel (%p337) target = $region36
      $region35: #{decoder.10} parent=11 // pred_region
        _
      $region36: #{decoder.10} parent=11 // pred_fallthru
        _
      // Predicated region
      $region37: #{decoder.10} parent=11 // pred_check
        %p340 = pneg %p258
      $region38: #{decoder.10} parent=11 // pred_check_branch
        %342 = sbr.rel (%p340) target = $region40
      $region39: #{decoder.10} parent=11 // pred_region
        _
      $region40: #{decoder.10} parent=11 // pred_fallthru
        _
      // Predicated region
      $region41: #{decoder.10} parent=11 // pred_check
        %p343 = pneg %p279
      $region42: #{decoder.10} parent=11 // pred_check_branch
        %345 = sbr.rel (%p343) target = $region44
      $region43: #{decoder.10} parent=11 // pred_region
        _
      $region44: #{decoder.10} parent=11 // pred_fallthru
        _
    $region12: #{decoder.10} parent=5 // pred_fallthru
      _
    %p346 = scmp.lt.s32.totalorder %s17, 2
    // Predicated region
    $region45: #{decoder.10} parent=5 // pred_check
      %p347 = pneg %p346
    $region46: #{decoder.10} parent=5 // pred_check_branch
      %349 = sbr.rel (%p347) target = $region48
    $region47: #{decoder.10} parent=5 // pred_region
      // Predicated region
      $region49: #{decoder.10} parent=47 // pred_check
        %p350 = pneg %p51
      $region50: #{decoder.10} parent=47 // pred_check_branch
        %352 = sbr.rel (%p350) target = $region52
      $region51: #{decoder.10} parent=47 // pred_region
        %p353 = scmp.lt.s32.totalorder %s24, 1
        %s354 = scalar_select %p353, %s24, 1
        %p355 = scmp.lt.s32.totalorder %s25, 0
        %s356 = scalar_select %p355, %s25, 0
        %s357 = sadd.s32 %s356, %s354
        %s358 = smul.addr %s357, 8
        %s359 = scalar_lea.vmem %s0, %s358
      $region52: #{decoder.10} parent=47 // pred_fallthru
        _
      // Predicated region
      $region53: #{decoder.10} parent=47 // pred_check
        %p360 = pneg %p77
      $region54: #{decoder.10} parent=47 // pred_check_branch
        %362 = sbr.rel (%p360) target = $region56
      $region55: #{decoder.10} parent=47 // pred_region
        %p363 = scmp.lt.s32.totalorder %s24, 1
        %s364 = scalar_select %p363, %s24, 1
        %s365 = smul.addr %s364, 8
        %s366 = scalar_lea.vmem %s1, %s365
      $region56: #{decoder.10} parent=47 // pred_fallthru
        _
      // Predicated region
      $region57: #{decoder.10} parent=47 // pred_check
        %p367 = pneg %p105
      $region58: #{decoder.10} parent=47 // pred_check_branch
        %369 = sbr.rel (%p367) target = $region60
      $region59: #{decoder.10} parent=47 // pred_region
        %p370 = scmp.lt.s32.totalorder %s24, 1
        %s371 = scalar_select %p370, %s24, 1
        %p372 = scmp.lt.s32.totalorder %s25, 0
        %s373 = scalar_select %p372, %s25, 0
        %s374 = sadd.s32 %s373, %s371
        %s375 = smul.addr %s374, 8
        %s376 = scalar_lea.vmem %s2, %s375
      $region60: #{decoder.10} parent=47 // pred_fallthru
        _
    $region48: #{decoder.10} parent=5 // pred_fallthru
      _
    %p377 = scmp.le.s32.totalorder 1, %s17
    %p378 = scmp.lt.s32.totalorder %s17, 3
    %p379 = pnand %p377, %p378
    %p380 = pneg %p379
    // Predicated region
    $region61: #{decoder.10} parent=5 // pred_check
      _
    $region62: #{decoder.10} parent=5 // pred_check_branch
      %382 = sbr.rel (%p379) target = $region64
    $region63: #{decoder.10} parent=5 // pred_region
      %s383 = ssub.s32 %s17, 1
      %p384 = scmp.lt.s32.totalorder %s26, 1
      %s385 = scalar_select %p384, %s26, 1
      %p386 = scmp.lt.s32.totalorder %s27, 0
      %s387 = scalar_select %p386, %s27, 0
      %s388 = sadd.s32 %s387, %s385
      %s389 = smul.addr %s388, 8
      %s390 = scalar_lea.vmem %s0, %s389
      %p391 = pneg %p57
      %p392 = pneg %p54
      %p393 = scmp.lt.s32.totalorder %s26, 1
      %s394 = scalar_select %p393, %s26, 1
      %s395 = smul.addr %s394, 8
      %s396 = scalar_lea.vmem %s1, %s395
      %p397 = pneg %p83
      %p398 = pneg %p80
      %p399 = scmp.lt.s32.totalorder %s26, 1
      %s400 = scalar_select %p399, %s26, 1
      %p401 = scmp.lt.s32.totalorder %s27, 0
      %s402 = scalar_select %p401, %s27, 0
      %s403 = sadd.s32 %s402, %s400
      %s404 = smul.addr %s403, 8
      %s405 = scalar_lea.vmem %s2, %s404
      %p406 = pneg %p111
      %p407 = pneg %p108
      %p408 = pneg %p132
      %p409 = pneg %p129
      %p410 = pneg %p153
      %p411 = pneg %p150
      %p412 = pneg %p174
      %p413 = pneg %p171
      %p414 = pneg %p195
      %p415 = pneg %p192
      %p416 = pneg %p216
      %p417 = pneg %p213
      %p418 = pneg %p237
      %p419 = pneg %p234
      %p420 = pneg %p258
      %p421 = pneg %p255
      %p422 = pneg %p279
      %p423 = pneg %p276
      %p424 = pneg %p307
      %p425 = pneg %p304
      %p426 = scmp.lt.s32.totalorder %s26, 1
      %s427 = scalar_select %p426, %s26, 1
      %p428 = scmp.lt.s32.totalorder %s27, 0
      %s429 = scalar_select %p428, %s27, 0
      %s430 = sadd.s32 %s429, %s427
      %s431 = smul.addr %s430, 8
      %s432 = scalar_lea.vmem %s11, %s431
      %p433 = scmp.lt.s32.totalorder %s26, 1
      %s434 = scalar_select %p433, %s26, 1
      %p435 = scmp.lt.s32.totalorder %s27, 0
      %s436 = scalar_select %p435, %s27, 0
      %s437 = sadd.s32 %s436, %s434
      %s438 = smul.addr %s437, 8
      %s439 = scalar_lea.vmem %s0, %s438
      %p440 = scmp.lt.s32.totalorder %s26, 1
      %s441 = scalar_select %p440, %s26, 1
      %s442 = smul.addr %s441, 8
      %s443 = scalar_lea.vmem %s1, %s442
      %p444 = scmp.lt.s32.totalorder %s26, 1
      %s445 = scalar_select %p444, %s26, 1
      %p446 = scmp.lt.s32.totalorder %s27, 0
      %s447 = scalar_select %p446, %s27, 0
      %s448 = sadd.s32 %s447, %s445
      %s449 = smul.addr %s448, 8
      %s450 = scalar_lea.vmem %s2, %s449
      %p451 = scmp.lt.s32.totalorder %s26, 1
      %s452 = scalar_select %p451, %s26, 1
      %p453 = scmp.lt.s32.totalorder %s27, 0
      %s454 = scalar_select %p453, %s27, 0
      %s455 = sadd.s32 %s454, %s452
      %s456 = smul.addr %s455, 8
      %s457 = scalar_lea.vmem %s11, %s456
      %v459 = vld [vmem:[%s439] sm:$0xff]
      %v460 = vld [vmem:[%s3] sm:$0x1]
      %v461 = vld [vmem:[%s4] sm:$0x1]
      %vm462 = vcmask 261120
      %v463 = vsel %vm462, %v459, 0.0
      %464 = vadd.xlane.f32.xlu0 %v463
      %v465 = vpop.xlane.xlu0 %464
      %v466 = vrcp.pop 32.0
      %v467 = vmul.f32 32.0, %v466
      %v468 = vsub.f32 1.0, %v467
      %v469 = vmul.f32 %v466, %v468
      %v470 = vadd.f32 %v466, %v469
      %vm471 = vweird.f32 %v466
      %v472 = vsel %vm471, %v466, %v470
      %v473 = vmul.f32 %v465, %v472
      %v474 = vsub.f32 %v459, %v473
      %v475 = vmul.f32 %v474, %v474
      %v476 = vsel %vm462, %v475, 0.0
      %477 = vadd.xlane.f32.xlu0 %v476
      %v478 = vpop.xlane.xlu0 %477
      %v479 = vrcp.pop 31.0
      %v480 = vmul.f32 31.0, %v479
      %v481 = vsub.f32 1.0, %v480
      %v482 = vmul.f32 %v479, %v481
      %v483 = vadd.f32 %v479, %v482
      %vm484 = vweird.f32 %v479
      %v485 = vsel %vm484, %v479, %v483
      %v486 = vmul.f32 %v478, %v485
      %v488 = vperm.slane %v460, 0
      %v490 = vmul.f32 %v488, %v474
      %v491 = vrsqrt.pop %v486
      %v492 = vmul.f32 %v491, %v486
      %v493 = vmul.f32 %v492, %v491
      %v494 = vmul.f32 0.5, %v493
      %v495 = vsub.f32 1.5, %v494
      %v496 = vmul.f32 %v491, %v495
      %v497 = vmul.f32 %v486, %v496
      %vm498 = vcmp.eq.f32.partialorder %v486, inf
      %v499 = vsel %vm498, %v486, %v497
      %vm500 = vcmp.eq.f32.partialorder %v486, 0.0
      %v501 = vand.u32 %v486, 2147483648
      %v502 = vsel %vm500, %v501, %v499
      %v503 = vadd.f32 %v502, 1e-06
      %v504 = vrcp.pop %v503
      %v505 = vmul.f32 %v503, %v504
      %v506 = vsub.f32 1.0, %v505
      %v507 = vmul.f32 %v504, %v506
      %v508 = vadd.f32 %v504, %v507
      %vm509 = vweird.f32 %v503
      %vm510 = vweird.f32 %v504
      %vm511 = vmor %vm509, %vm510
      %v512 = vsel %vm511, %v504, %v508
      %v513 = vand.u32 2147483647, %v503
      %vm514 = vcmp.eq.f32.partialorder %v513, 8.507059e+37
      %v515 = vand.u32 %v503, 2147483648
      %v516 = vor.u32 1.1754944e-38, %v515
      %v517 = vsel %vm514, %v516, %v512
      %v518 = vmul.f32 %v490, %v517
      %v520 = vperm.slane %v461, 0
      %v522 = vadd.f32 %v518, %v520
      %v523 = vld [vmem:[%s443] sm:$0xff]
      %v524 = vsel %vm462, %v523, 0.0
      %525 = vadd.xlane.f32.xlu0 %v524
      %v526 = vpop.xlane.xlu0 %525
      %v527 = vmul.f32 %v526, %v472
      %v528 = vsub.f32 %v523, %v527
      %v529 = vmul.f32 %v528, %v528
      %v530 = vsel %vm462, %v529, 0.0
      %531 = vadd.xlane.f32.xlu0 %v530
      %v532 = vpop.xlane.xlu0 %531
      %v533 = vmul.f32 %v532, %v485
      %v534 = vmul.f32 %v488, %v528
      %v535 = vrsqrt.pop %v533
      %v536 = vmul.f32 %v535, %v533
      %v537 = vmul.f32 %v536, %v535
      %v538 = vmul.f32 0.5, %v537
      %v539 = vsub.f32 1.5, %v538
      %v540 = vmul.f32 %v535, %v539
      %v541 = vmul.f32 %v533, %v540
      %vm542 = vcmp.eq.f32.partialorder %v533, inf
      %v543 = vsel %vm542, %v533, %v541
      %vm544 = vcmp.eq.f32.partialorder %v533, 0.0
      %v545 = vand.u32 %v533, 2147483648
      %v546 = vsel %vm544, %v545, %v543
      %v547 = vadd.f32 %v546, 1e-06
      %v548 = vrcp.pop %v547
      %v549 = vmul.f32 %v547, %v548
      %v550 = vsub.f32 1.0, %v549
      %v551 = vmul.f32 %v548, %v550
      %v552 = vadd.f32 %v548, %v551
      %vm553 = vweird.f32 %v547
      %vm554 = vweird.f32 %v548
      %vm555 = vmor %vm553, %vm554
      %v556 = vsel %vm555, %v548, %v552
      %v557 = vand.u32 2147483647, %v547
      %vm558 = vcmp.eq.f32.partialorder %v557, 8.507059e+37
      %v559 = vand.u32 %v547, 2147483648
      %v560 = vor.u32 1.1754944e-38, %v559
      %v561 = vsel %vm558, %v560, %v556
      %v562 = vmul.f32 %v534, %v561
      %v563 = vadd.f32 %v562, %v520
      %v564 = vpack.c.bf16 %v522, %v522
      %v565 = vld [vmem:[%s5] sm:$0xf]
      %v566 = vld [vmem:[%s5 + $0x4] sm:$0xf]
      %v567 = vld [vmem:[%s5 + $0x8] sm:$0xf]
      %v568 = vld [vmem:[%s5 + $0xc] sm:$0xf]
      %v569 = vld [vmem:[%s6] sm:$0x1]
      %v571 = vperm.slane %v569, 0
      %v577 = vunpack.c.l.b16 %v565
      %v578 = vunpack.c.l.b16 %v566
      %v579 = vunpack.c.l.b16 %v567
      %v580 = vunpack.c.l.b16 %v568
      %v581 = vpack.c.b16 %v578, %v577
      %v582 = vpack.c.b16 %v580, %v579
      %v586 = vsel %vm462, %v564, 0
      %588 = vmatpush.bf16.msra.mxu0 0
      %589 = vmatpush.bf16.msra.mxu0 0
      %590 = vmatpush.bf16.msra.mxu0 0
      %591 = vmatpush.bf16.msra.mxu0 0
      %592 = vmatpush.bf16.msra.mxu0 0
      %593 = vmatpush.bf16.msra.mxu0 0
      %594 = vmatpush.bf16.msra.mxu0 %v582
      %595 = vmatpush.bf16.msra.mxu0 %v581
      %596 = vmatmul.bf16.gmra.mxu0 %v586
      %v597 = vpop.f32.mrf.mxu0
      %v598 = vadd.f32 %v571, %v597
      %v599 = vpop.f32.mrf.mxu0
      %600 = vdwg.mxu0
      %v601 = vmul.f32 %v598, 0.35355338
      %v602 = vpack.c.bf16 %v563, %v563
      %v603 = vld [vmem:[%s7] sm:$0xf]
      %v604 = vld [vmem:[%s7 + $0x4] sm:$0xf]
      %v605 = vld [vmem:[%s7 + $0x8] sm:$0xf]
      %v606 = vld [vmem:[%s7 + $0xc] sm:$0xf]
      %v607 = vld [vmem:[%s8] sm:$0x1]
      %v609 = vperm.slane %v607, 0
      %v615 = vunpack.c.l.b16 %v603
      %v616 = vunpack.c.l.b16 %v604
      %v617 = vunpack.c.l.b16 %v605
      %v618 = vunpack.c.l.b16 %v606
      %v619 = vpack.c.b16 %v616, %v615
      %v620 = vpack.c.b16 %v618, %v617
      %v624 = vsel %vm462, %v602, 0
      %626 = vmatpush.bf16.msra.mxu0 0
      %627 = vmatpush.bf16.msra.mxu0 0
      %628 = vmatpush.bf16.msra.mxu0 0
      %629 = vmatpush.bf16.msra.mxu0 0
      %630 = vmatpush.bf16.msra.mxu0 0
      %631 = vmatpush.bf16.msra.mxu0 0
      %632 = vmatpush.bf16.msra.mxu0 %v620
      %633 = vmatpush.bf16.msra.mxu0 %v619
      %634 = vmatmul.bf16.gmra.mxu0 %v624
      %v635 = vpop.f32.mrf.mxu0
      %v636 = vadd.f32 %v609, %v635
      %v637 = vpop.f32.mrf.mxu0
      %638 = vdwg.mxu0
      %v639 = vpack.c.bf16 %v601, %v601
      %v640 = vpack.c.bf16 %v636, %v636
      %v641 = vld [vmem:[%s450] sm:$0xff]
      %vm642 = vcmask 64512
      %v644 = vsel %vm642, %v639, 0
      %v647 = vsel %vm642, %v640, 0
      %649 = vmatpush.bf16.xpose.msra.mxu0 0
      %650 = vmatpush.bf16.xpose.msra.mxu0 0
      %651 = vmatpush.bf16.xpose.msra.mxu0 0
      %652 = vmatpush.bf16.xpose.msra.mxu0 0
      %653 = vmatpush.bf16.xpose.msra.mxu0 0
      %654 = vmatpush.bf16.xpose.msra.mxu0 0
      %655 = vmatpush.bf16.xpose.msra.mxu0 0
      %656 = vmatpush.bf16.xpose.msra.mxu0 %v647
      %657 = vmatmul.bf16.gmra.mxu0 %v644
      %v658 = vpop.f32.mrf.mxu0
      %v659 = vadd.f32 %v641, %v658
      %v660 = vpop.f32.mrf.mxu0
      %661 = vdwg.mxu0
      %v662 = vsel %vm642, %v659, -inf
      %663 = vmax.xlane.f32.xlu0 %v662
      %v664 = vpop.xlane.xlu0 %663
      %v665 = vsub.f32 %v659, %v664
      %v666 = vmul.f32 %v665, 1.442695
      %v667 = vpow.pop %v666
      %v668 = vsel %vm642, %v667, 0.0
      %669 = vadd.xlane.f32.xlu0 %v668
      %v670 = vpop.xlane.xlu0 %669
      %v671 = vpack.c.bf16 %v667, %v667
      %v673 = vunpack.c.l.b16 %v640
      %v674 = vpack.c.b16 %v673, %v673
      %675 = vrot.lane.b32.xlu0 %v674, 96
      %v676 = vpop.permute.xlu0 %675
      %v678 = vsel %vm642, %v671, 0
      %vm680 = vcmask 1043456
      %v682 = vsel %vm680, %v676, 0
      %684 = vmatpush.bf16.msra.mxu0 0
      %685 = vmatpush.bf16.msra.mxu0 0
      %686 = vmatpush.bf16.msra.mxu0 0
      %687 = vmatpush.bf16.msra.mxu0 0
      %688 = vmatpush.bf16.msra.mxu0 0
      %689 = vmatpush.bf16.msra.mxu0 0
      %690 = vmatpush.bf16.msra.mxu0 0
      %691 = vmatpush.bf16.msra.mxu0 %v682
      %692 = vmatmul.bf16.gmra.mxu0 %v678
      %v693 = vpop.f32.mrf.mxu0
      %v694 = vadd.f32 0.0, %v693
      %v695 = vpop.f32.mrf.mxu0
      %696 = vdwg.mxu0
      %v697 = vrcp.pop %v670
      %v698 = vmul.f32 %v670, %v697
      %v699 = vsub.f32 1.0, %v698
      %v700 = vmul.f32 %v697, %v699
      %v701 = vadd.f32 %v697, %v700
      %vm702 = vweird.f32 %v670
      %vm703 = vweird.f32 %v697
      %vm704 = vmor %vm702, %vm703
      %v705 = vsel %vm704, %v697, %v701
      %v706 = vand.u32 2147483647, %v670
      %vm707 = vcmp.eq.f32.partialorder %v706, 8.507059e+37
      %v708 = vand.u32 %v670, 2147483648
      %v709 = vor.u32 1.1754944e-38, %v708
      %v710 = vsel %vm707, %v709, %v705
      %v711 = vmul.f32 %v694, %v710
      %v712 = vpack.c.bf16 %v711, %v711
      %vm713 = vcmask 60416
      %714 = vst.msk [vmem:[#allocation2] sm:$0xf] %vm713, %v712
      %v716 = vunpack.c.l.b16 %v639
      %v717 = vpack.c.b16 %v716, %v716
      %718 = vrot.lane.b32.xlu0 %v717, 120
      %v719 = vpop.permute.xlu0 %718
      %720 = vrot.lane.b32.xlu0 %v674, 120
      %v721 = vpop.permute.xlu0 %720
      %v723 = vsel %vm642, %v719, 0
      %v726 = vsel %vm642, %v721, 0
      %728 = vmatpush.bf16.xpose.msra.mxu0 0
      %729 = vmatpush.bf16.xpose.msra.mxu0 0
      %730 = vmatpush.bf16.xpose.msra.mxu0 0
      %731 = vmatpush.bf16.xpose.msra.mxu0 0
      %732 = vmatpush.bf16.xpose.msra.mxu0 0
      %733 = vmatpush.bf16.xpose.msra.mxu0 0
      %734 = vmatpush.bf16.xpose.msra.mxu0 0
      %735 = vmatpush.bf16.xpose.msra.mxu0 %v726
      %736 = vmatmul.bf16.gmra.mxu0 %v723
      %v737 = vpop.f32.mrf.mxu0
      %v738 = vadd.f32 %v641, %v737
      %v739 = vpop.f32.mrf.mxu0
      %740 = vdwg.mxu0
      %v741 = vsel %vm642, %v738, -inf
      %742 = vmax.xlane.f32.xlu0 %v741
      %v743 = vpop.xlane.xlu0 %742
      %v744 = vsub.f32 %v738, %v743
      %v745 = vmul.f32 %v744, 1.442695
      %v746 = vpow.pop %v745
      %v747 = vsel %vm642, %v746, 0.0
      %748 = vadd.xlane.f32.xlu0 %v747
      %v749 = vpop.xlane.xlu0 %748
      %v750 = vpack.c.bf16 %v746, %v746
      %751 = vrot.lane.b32.xlu0 %v674, 88
      %v752 = vpop.permute.xlu0 %751
      %v754 = vsel %vm642, %v750, 0
      %v757 = vsel %vm680, %v752, 0
      %759 = vmatpush.bf16.msra.mxu0 0
      %760 = vmatpush.bf16.msra.mxu0 0
      %761 = vmatpush.bf16.msra.mxu0 0
      %762 = vmatpush.bf16.msra.mxu0 0
      %763 = vmatpush.bf16.msra.mxu0 0
      %764 = vmatpush.bf16.msra.mxu0 0
      %765 = vmatpush.bf16.msra.mxu0 0
      %766 = vmatpush.bf16.msra.mxu0 %v757
      %767 = vmatmul.bf16.gmra.mxu0 %v754
      %v768 = vpop.f32.mrf.mxu0
      %v769 = vadd.f32 0.0, %v768
      %v770 = vpop.f32.mrf.mxu0
      %771 = vdwg.mxu0
      %v772 = vrcp.pop %v749
      %v773 = vmul.f32 %v749, %v772
      %v774 = vsub.f32 1.0, %v773
      %v775 = vmul.f32 %v772, %v774
      %v776 = vadd.f32 %v772, %v775
      %vm777 = vweird.f32 %v749
      %vm778 = vweird.f32 %v772
      %vm779 = vmor %vm777, %vm778
      %v780 = vsel %vm779, %v772, %v776
      %v781 = vand.u32 2147483647, %v749
      %vm782 = vcmp.eq.f32.partialorder %v781, 8.507059e+37
      %v783 = vand.u32 %v749, 2147483648
      %v784 = vor.u32 1.1754944e-38, %v783
      %v785 = vsel %vm782, %v784, %v780
      %v786 = vmul.f32 %v769, %v785
      %v787 = vpack.c.bf16 %v786, %v786
      %789 = vrot.lane.b32.xlu0 %v787, 8
      %v790 = vpop.permute.xlu0 %789
      %vm792 = vcmask 126016
      %793 = vst.msk [vmem:[#allocation2] sm:$0xf] %vm792, %v790
      %794 = vrot.lane.b32.xlu0 %v717, 112
      %v795 = vpop.permute.xlu0 %794
      %796 = vrot.lane.b32.xlu0 %v674, 112
      %v797 = vpop.permute.xlu0 %796
      %v799 = vsel %vm642, %v795, 0
      %v802 = vsel %vm642, %v797, 0
      %804 = vmatpush.bf16.xpose.msra.mxu0 0
      %805 = vmatpush.bf16.xpose.msra.mxu0 0
      %806 = vmatpush.bf16.xpose.msra.mxu0 0
      %807 = vmatpush.bf16.xpose.msra.mxu0 0
      %808 = vmatpush.bf16.xpose.msra.mxu0 0
      %809 = vmatpush.bf16.xpose.msra.mxu0 0
      %810 = vmatpush.bf16.xpose.msra.mxu0 0
      %811 = vmatpush.bf16.xpose.msra.mxu0 %v802
      %812 = vmatmul.bf16.gmra.mxu0 %v799
      %v813 = vpop.f32.mrf.mxu0
      %v814 = vadd.f32 %v641, %v813
      %v815 = vpop.f32.mrf.mxu0
      %816 = vdwg.mxu0
      %v817 = vsel %vm642, %v814, -inf
      %818 = vmax.xlane.f32.xlu0 %v817
      %v819 = vpop.xlane.xlu0 %818
      %v820 = vsub.f32 %v814, %v819
      %v821 = vmul.f32 %v820, 1.442695
      %v822 = vpow.pop %v821
      %v823 = vsel %vm642, %v822, 0.0
      %824 = vadd.xlane.f32.xlu0 %v823
      %v825 = vpop.xlane.xlu0 %824
      %v826 = vpack.c.bf16 %v822, %v822
      %827 = vrot.lane.b32.xlu0 %v674, 80
      %v828 = vpop.permute.xlu0 %827
      %v830 = vsel %vm642, %v826, 0
      %v833 = vsel %vm680, %v828, 0
      %835 = vmatpush.bf16.msra.mxu0 0
      %836 = vmatpush.bf16.msra.mxu0 0
      %837 = vmatpush.bf16.msra.mxu0 0
      %838 = vmatpush.bf16.msra.mxu0 0
      %839 = vmatpush.bf16.msra.mxu0 0
      %840 = vmatpush.bf16.msra.mxu0 0
      %841 = vmatpush.bf16.msra.mxu0 0
      %842 = vmatpush.bf16.msra.mxu0 %v833
      %843 = vmatmul.bf16.gmra.mxu0 %v830
      %v844 = vpop.f32.mrf.mxu0
      %v845 = vadd.f32 0.0, %v844
      %v846 = vpop.f32.mrf.mxu0
      %847 = vdwg.mxu0
      %v848 = vrcp.pop %v825
      %v849 = vmul.f32 %v825, %v848
      %v850 = vsub.f32 1.0, %v849
      %v851 = vmul.f32 %v848, %v850
      %v852 = vadd.f32 %v848, %v851
      %vm853 = vweird.f32 %v825
      %vm854 = vweird.f32 %v848
      %vm855 = vmor %vm853, %vm854
      %v856 = vsel %vm855, %v848, %v852
      %v857 = vand.u32 2147483647, %v825
      %vm858 = vcmp.eq.f32.partialorder %v857, 8.507059e+37
      %v859 = vand.u32 %v825, 2147483648
      %v860 = vor.u32 1.1754944e-38, %v859
      %v861 = vsel %vm858, %v860, %v856
      %v862 = vmul.f32 %v845, %v861
      %v863 = vpack.c.bf16 %v862, %v862
      %865 = vrot.lane.b32.xlu0 %v863, 16
      %v866 = vpop.permute.xlu0 %865
      %vm868 = vcmask 191616
      %869 = vst.msk [vmem:[#allocation2] sm:$0xf] %vm868, %v866
      %870 = vrot.lane.b32.xlu0 %v717, 104
      %v871 = vpop.permute.xlu0 %870
      %872 = vrot.lane.b32.xlu0 %v674, 104
      %v873 = vpop.permute.xlu0 %872
      %v875 = vsel %vm642, %v871, 0
      %v878 = vsel %vm642, %v873, 0
      %880 = vmatpush.bf16.xpose.msra.mxu0 0
      %881 = vmatpush.bf16.xpose.msra.mxu0 0
      %882 = vmatpush.bf16.xpose.msra.mxu0 0
      %883 = vmatpush.bf16.xpose.msra.mxu0 0
      %884 = vmatpush.bf16.xpose.msra.mxu0 0
      %885 = vmatpush.bf16.xpose.msra.mxu0 0
      %886 = vmatpush.bf16.xpose.msra.mxu0 0
      %887 = vmatpush.bf16.xpose.msra.mxu0 %v878
      %888 = vmatmul.bf16.gmra.mxu0 %v875
      %v889 = vpop.f32.mrf.mxu0
      %v890 = vadd.f32 %v641, %v889
      %v891 = vpop.f32.mrf.mxu0
      %892 = vdwg.mxu0
      %v893 = vsel %vm642, %v890, -inf
      %894 = vmax.xlane.f32.xlu0 %v893
      %v895 = vpop.xlane.xlu0 %894
      %v896 = vsub.f32 %v890, %v895
      %v897 = vmul.f32 %v896, 1.442695
      %v898 = vpow.pop %v897
      %v899 = vsel %vm642, %v898, 0.0
      %900 = vadd.xlane.f32.xlu0 %v899
      %v901 = vpop.xlane.xlu0 %900
      %v902 = vpack.c.bf16 %v898, %v898
      %903 = vrot.lane.b32.xlu0 %v674, 72
      %v904 = vpop.permute.xlu0 %903
      %v906 = vsel %vm642, %v902, 0
      %v909 = vsel %vm680, %v904, 0
      %911 = vmatpush.bf16.msra.mxu0 0
      %912 = vmatpush.bf16.msra.mxu0 0
      %913 = vmatpush.bf16.msra.mxu0 0
      %914 = vmatpush.bf16.msra.mxu0 0
      %915 = vmatpush.bf16.msra.mxu0 0
      %916 = vmatpush.bf16.msra.mxu0 0
      %917 = vmatpush.bf16.msra.mxu0 0
      %918 = vmatpush.bf16.msra.mxu0 %v909
      %919 = vmatmul.bf16.gmra.mxu0 %v906
      %v920 = vpop.f32.mrf.mxu0
      %v921 = vadd.f32 0.0, %v920
      %v922 = vpop.f32.mrf.mxu0
      %923 = vdwg.mxu0
      %v924 = vrcp.pop %v901
      %v925 = vmul.f32 %v901, %v924
      %v926 = vsub.f32 1.0, %v925
      %v927 = vmul.f32 %v924, %v926
      %v928 = vadd.f32 %v924, %v927
      %vm929 = vweird.f32 %v901
      %vm930 = vweird.f32 %v924
      %vm931 = vmor %vm929, %vm930
      %v932 = vsel %vm931, %v924, %v928
      %v933 = vand.u32 2147483647, %v901
      %vm934 = vcmp.eq.f32.partialorder %v933, 8.507059e+37
      %v935 = vand.u32 %v901, 2147483648
      %v936 = vor.u32 1.1754944e-38, %v935
      %v937 = vsel %vm934, %v936, %v932
      %v938 = vmul.f32 %v921, %v937
      %v939 = vpack.c.bf16 %v938, %v938
      %941 = vrot.lane.b32.xlu0 %v939, 24
      %v942 = vpop.permute.xlu0 %941
      %vm944 = vcmask 257216
      %945 = vst.msk [vmem:[#allocation2] sm:$0xf] %vm944, %v942
      %v946 = vld [vmem:[#allocation2] sm:$0xf]
      %v947 = vld [vmem:[%s9] sm:$0xf]
      %v948 = vld [vmem:[%s9 + $0x4] sm:$0xf]
      %v949 = vld [vmem:[%s9 + $0x8] sm:$0xf]
      %v950 = vld [vmem:[%s9 + $0xc] sm:$0xf]
      %v951 = vld [vmem:[%s10] sm:$0x1]
      %v953 = vperm.slane %v951, 0
      %v959 = vunpack.c.l.b16 %v947
      %v960 = vunpack.c.l.b16 %v948
      %v961 = vunpack.c.l.b16 %v949
      %v962 = vunpack.c.l.b16 %v950
      %v963 = vpack.c.b16 %v960, %v959
      %v964 = vpack.c.b16 %v962, %v961
      %v968 = vsel %vm462, %v946, 0
      %970 = vmatpush.bf16.msra.mxu0 0
      %971 = vmatpush.bf16.msra.mxu0 0
      %972 = vmatpush.bf16.msra.mxu0 0
      %973 = vmatpush.bf16.msra.mxu0 0
      %974 = vmatpush.bf16.msra.mxu0 0
      %975 = vmatpush.bf16.msra.mxu0 0
      %976 = vmatpush.bf16.msra.mxu0 %v964
      %977 = vmatpush.bf16.msra.mxu0 %v963
      %978 = vmatmul.bf16.gmra.mxu0 %v968
      %v979 = vpop.f32.mrf.mxu0
      %v980 = vadd.f32 %v953, %v979
      %v981 = vpop.f32.mrf.mxu0
      %982 = vdwg.mxu0
      %v983 = vadd.f32 %v459, %v980
      %984 = vst.msk [vmem:[%s457] sm:$0xff] %vm462, %v983
      %p985 = scmp.lt.s32.totalorder %s26, 1
      %s986 = scalar_select %p985, %s26, 1
      %p987 = scmp.lt.s32.totalorder %s27, 0
      %s988 = scalar_select %p987, %s27, 0
      %s989 = sadd.s32 %s988, %s986
      %s990 = smul.addr %s989, 8
      %s991 = scalar_lea.vmem %s11, %s990
      // Predicated region
      $region65: #{decoder.10} parent=63 // pred_check
        %p992 = pneg %p304
      $region66: #{decoder.10} parent=63 // pred_check_branch
        %994 = sbr.rel (%p992) target = $region68
      $region67: #{decoder.10} parent=63 // pred_region
        _
      $region68: #{decoder.10} parent=63 // pred_fallthru
        _
    $region64: #{decoder.10} parent=5 // pred_fallthru
      _
    %p995 = scmp.le.s32.totalorder 2, %s17
    // Predicated region
    $region69: #{decoder.10} parent=5 // pred_check
      %p996 = pneg %p995
    $region70: #{decoder.10} parent=5 // pred_check_branch
      %998 = sbr.rel (%p996) target = $region72
    $region71: #{decoder.10} parent=5 // pred_region
      %s999 = ssub.s32 %s17, 2
      // Predicated region
      $region73: #{decoder.10} parent=71 // pred_check
        %p1000 = pneg %p310
      $region74: #{decoder.10} parent=71 // pred_check_branch
        %1002 = sbr.rel (%p1000) target = $region76
      $region75: #{decoder.10} parent=71 // pred_region
        %p1003 = scmp.lt.s32.totalorder %s28, 1
        %s1004 = scalar_select %p1003, %s28, 1
        %p1005 = scmp.lt.s32.totalorder %s29, 0
        %s1006 = scalar_select %p1005, %s29, 0
        %s1007 = sadd.s32 %s1006, %s1004
        %s1008 = smul.addr %s1007, 8
        %s1009 = scalar_lea.vmem %s11, %s1008
      $region76: #{decoder.10} parent=71 // pred_fallthru
        _
    $region72: #{decoder.10} parent=5 // pred_fallthru
      _
  $region6: #{decoder.10} parent=0 // loop_footer
    %s21 = sadd.s32 1, %s17
  $region7: #{decoder.10} parent=0 // loop_footer_branch
    %16 = sbr.rel target = $region3
  $region8: #{decoder.10} parent=0 // loop_exit
    _

// kernel: decoder.13
$region0: #{decoder.13}
  #allocation0 [shape = 'u32[]', space=smem, size = 0x4, offset = 0x4, fixed_abs, tag = 'smem constant byte address 0x4 - core index']
  #allocation1 [shape = 'u32[72,128]{1,0:T(1,128)}', space=vmem, size = 0x9000, scoped, tag = 'internal scratch']
  %s0 = inlined_call_operand.vmem [shape: f32[16,32], index: 0, kind: input, shape index: {}]
  %s1 = inlined_call_operand.vmem [shape: f32[1,32], index: 1, kind: input, shape index: {}]
  %s2 = inlined_call_operand.vmem [shape: f32[1,32], index: 2, kind: input, shape index: {}]
  %s3 = inlined_call_operand.hbm [shape: f32[16,32], index: 3, kind: output, shape index: {}]
  %s4 = sld [smem:[#allocation0]]
  $region22: #{decoder.13} parent=0
    _
  %s6 = ssub.s32 1, %s4
  %s7 = scalar_select 0, %s6, %s4
  $region1: #{decoder.13} parent=0
    #allocation2 [shape = 'u8[8192]{0}', space=vmem, size = 0x2000, scoped, tag = 'output window, operand 0, single buffered']
    #allocation3 [shape = 's32[1]{0}', space=sflag, size = 0x4, scoped, tag = 'scoped memory for decoder.13']
    %8 = vsyncpa [#allocation3], 0
    // Predicated region
    $region2: #{decoder.13} parent=1 // pred_check
      _
    $region3: #{decoder.13} parent=1 // pred_check_branch
      %10 = sbr.rel (0) target = $region5
    $region4: #{decoder.13} parent=1 // pred_region
      _
    $region5: #{decoder.13} parent=1 // pred_fallthru
      _
    // Predicated region
    $region6: #{decoder.13} parent=1 // pred_check
      _
    $region7: #{decoder.13} parent=1 // pred_check_branch
      %12 = sbr.rel (0) target = $region9
    $region8: #{decoder.13} parent=1 // pred_region
      _
    $region9: #{decoder.13} parent=1 // pred_fallthru
      _
    // Predicated region
    $region10: #{decoder.13} parent=1 // pred_check
      _
    $region11: #{decoder.13} parent=1 // pred_check_branch
      %14 = sbr.rel (0) target = $region13
    $region12: #{decoder.13} parent=1 // pred_region
      _
    $region13: #{decoder.13} parent=1 // pred_fallthru
      _
    %v15 = vld [vmem:[%s0] sm:$0xff]
    %v16 = vld [vmem:[%s0 + $0x8] sm:$0xff]
    %v17 = vld [vmem:[%s1] sm:$0x1]
    %v18 = vld [vmem:[%s2] sm:$0x1]
    %vm19 = vcmask 261120
    %v20 = vsel %vm19, %v15, 0.0
    %21 = vadd.xlane.f32.xlu0 %v20
    %v22 = vpop.xlane.xlu0 %21
    %v23 = vsel %vm19, %v16, 0.0
    %24 = vadd.xlane.f32.xlu0 %v23
    %v25 = vpop.xlane.xlu0 %24
    %v26 = vrcp.pop 32.0
    %v27 = vmul.f32 32.0, %v26
    %v28 = vsub.f32 1.0, %v27
    %v29 = vmul.f32 %v26, %v28
    %v30 = vadd.f32 %v26, %v29
    %vm31 = vweird.f32 %v26
    %v32 = vsel %vm31, %v26, %v30
    %v33 = vmul.f32 %v22, %v32
    %v34 = vmul.f32 %v25, %v32
    %v35 = vsub.f32 %v15, %v33
    %v36 = vsub.f32 %v16, %v34
    %v37 = vmul.f32 %v35, %v35
    %v38 = vmul.f32 %v36, %v36
    %v39 = vsel %vm19, %v37, 0.0
    %40 = vadd.xlane.f32.xlu0 %v39
    %v41 = vpop.xlane.xlu0 %40
    %v42 = vsel %vm19, %v38, 0.0
    %43 = vadd.xlane.f32.xlu0 %v42
    %v44 = vpop.xlane.xlu0 %43
    %v45 = vrcp.pop 31.0
    %v46 = vmul.f32 31.0, %v45
    %v47 = vsub.f32 1.0, %v46
    %v48 = vmul.f32 %v45, %v47
    %v49 = vadd.f32 %v45, %v48
    %vm50 = vweird.f32 %v45
    %v51 = vsel %vm50, %v45, %v49
    %v52 = vmul.f32 %v41, %v51
    %v53 = vmul.f32 %v44, %v51
    %v55 = vperm.slane %v17, 0
    %v57 = vmul.f32 %v55, %v35
    %v58 = vmul.f32 %v55, %v36
    %v59 = vrsqrt.pop %v52
    %v60 = vmul.f32 %v59, %v52
    %v61 = vmul.f32 %v60, %v59
    %v62 = vmul.f32 0.5, %v61
    %v63 = vsub.f32 1.5, %v62
    %v64 = vmul.f32 %v59, %v63
    %v65 = vmul.f32 %v52, %v64
    %vm66 = vcmp.eq.f32.partialorder %v52, inf
    %v67 = vsel %vm66, %v52, %v65
    %vm68 = vcmp.eq.f32.partialorder %v52, 0.0
    %v69 = vand.u32 %v52, 2147483648
    %v70 = vsel %vm68, %v69, %v67
    %v71 = vrsqrt.pop %v53
    %v72 = vmul.f32 %v71, %v53
    %v73 = vmul.f32 %v72, %v71
    %v74 = vmul.f32 0.5, %v73
    %v75 = vsub.f32 1.5, %v74
    %v76 = vmul.f32 %v71, %v75
    %v77 = vmul.f32 %v53, %v76
    %vm78 = vcmp.eq.f32.partialorder %v53, inf
    %v79 = vsel %vm78, %v53, %v77
    %vm80 = vcmp.eq.f32.partialorder %v53, 0.0
    %v81 = vand.u32 %v53, 2147483648
    %v82 = vsel %vm80, %v81, %v79
    %v83 = vadd.f32 %v70, 1e-06
    %v84 = vadd.f32 %v82, 1e-06
    %v85 = vrcp.pop %v83
    %v86 = vmul.f32 %v83, %v85
    %v87 = vsub.f32 1.0, %v86
    %v88 = vmul.f32 %v85, %v87
    %v89 = vadd.f32 %v85, %v88
    %vm90 = vweird.f32 %v83
    %vm91 = vweird.f32 %v85
    %vm92 = vmor %vm90, %vm91
    %v93 = vsel %vm92, %v85, %v89
    %v94 = vand.u32 2147483647, %v83
    %vm95 = vcmp.eq.f32.partialorder %v94, 8.507059e+37
    %v96 = vand.u32 %v83, 2147483648
    %v97 = vor.u32 1.1754944e-38, %v96
    %v98 = vsel %vm95, %v97, %v93
    %v99 = vmul.f32 %v57, %v98
    %v100 = vrcp.pop %v84
    %v101 = vmul.f32 %v84, %v100
    %v102 = vsub.f32 1.0, %v101
    %v103 = vmul.f32 %v100, %v102
    %v104 = vadd.f32 %v100, %v103
    %vm105 = vweird.f32 %v84
    %vm106 = vweird.f32 %v100
    %vm107 = vmor %vm105, %vm106
    %v108 = vsel %vm107, %v100, %v104
    %v109 = vand.u32 2147483647, %v84
    %vm110 = vcmp.eq.f32.partialorder %v109, 8.507059e+37
    %v111 = vand.u32 %v84, 2147483648
    %v112 = vor.u32 1.1754944e-38, %v111
    %v113 = vsel %vm110, %v112, %v108
    %v114 = vmul.f32 %v58, %v113
    %v116 = vperm.slane %v18, 0
    %v118 = vadd.f32 %v99, %v116
    %v119 = vadd.f32 %v114, %v116
    %120 = vst.msk [vmem:[#allocation2] sm:$0xff] %vm19, %v118
    %121 = vst.msk [vmem:[#allocation2 + $0x8] sm:$0xff] %vm19, %v119
    // Predicated region
    $region14: #{decoder.13} parent=1 // pred_check
      _
    $region15: #{decoder.13} parent=1 // pred_check_branch
      %123 = sbr.rel (0) target = $region17
    $region16: #{decoder.13} parent=1 // pred_region
      %125 = vsyncadd [#allocation3], 0
      %s126 = sshll.u32 [#allocation2], 4
      %s127 = int_to_ptr.vmem [resolvable:$true] %s126
      %s128 = sshll.u32 %s3, 4
      %s129 = int_to_ptr.hbm [resolvable:$true] %s128
      %134 = dma.vmem_to_hbm [thread:$0]  %s127, 256, %s129, [#allocation3], 128, 128, 8
    $region17: #{decoder.13} parent=1 // pred_fallthru
      _
    // Predicated region
    $region18: #{decoder.13} parent=1 // pred_check
      _
    $region19: #{decoder.13} parent=1 // pred_check_branch
      %136 = sbr.rel (0) target = $region21
    $region20: #{decoder.13} parent=1 // pred_region
      %138 = dma.done [#allocation3], 256
    $region21: #{decoder.13} parent=1 // pred_fallthru
      _
    %139 = vsyncpa [#allocation3], 1

// kernel: decoder.11
$region0: #{decoder.11}
  #allocation0 [shape = 'u32[]', space=smem, size = 0x4, offset = 0x4, fixed_abs, tag = 'smem constant byte address 0x4 - core index']
  #allocation1 [shape = 'u32[72,128]{1,0:T(1,128)}', space=vmem, size = 0x9000, scoped, tag = 'internal scratch']
  #allocation2 [shape = 'bf16[8,32]{1,0:T(8,128)(2,1)}', space=vmem, size = 0x800, scoped, tag = 'scratch operand']
  %s0 = inlined_call_operand.vmem [shape: f32[2,8,32], index: 0, kind: input, shape index: {}]
  %s1 = inlined_call_operand.vmem [shape: f32[2,8,32], index: 1, kind: input, shape index: {}]
  %s2 = inlined_call_operand.vmem [shape: f32[2,8,8], index: 2, kind: input, shape index: {}]
  %s3 = inlined_call_operand.vmem [shape: f32[1,32], index: 3, kind: input, shape index: {}]
  %s4 = inlined_call_operand.vmem [shape: f32[1,32], index: 4, kind: input, shape index: {}]
  %s5 = inlined_call_operand.vmem [shape: bf16[32,32], index: 5, kind: input, shape index: {}]
  %s6 = inlined_call_operand.vmem [shape: f32[1,32], index: 6, kind: input, shape index: {}]
  %s7 = inlined_call_operand.vmem [shape: bf16[32,64], index: 7, kind: input, shape index: {}]
  %s8 = inlined_call_operand.hbm [shape: f32[1,64], index: 8, kind: input, shape index: {}]
  %s9 = inlined_call_operand.vmem [shape: bf16[32,32], index: 9, kind: input, shape index: {}]
  %s10 = inlined_call_operand.hbm [shape: f32[1,32], index: 10, kind: input, shape index: {}]
  %s11 = inlined_call_operand.vmem [shape: f32[2,8,32], index: 11, kind: output, shape index: {}]
  %s12 = sld [smem:[#allocation0]]
  $region85: #{decoder.11} parent=0
    _
  %s14 = ssub.s32 1, %s12
  %s15 = scalar_select 0, %s14, %s12
  $region1: #{decoder.11} parent=0
    #allocation3 [shape = 'u8[512]{0}', space=vmem, size = 0x400, scoped, tag = 'input window, operand 8, single buffered']
    #allocation4 [shape = 's32[2]{0}', space=sflag, size = 0x8, scoped, tag = 'scoped memory for decoder.11']
    #allocation5 [shape = 'u8[512]{0}', space=vmem, size = 0x400, scoped, tag = 'input window, operand 10, single buffered']
    #allocation6 [shape = 's32[1]{0}', space=sflag, size = 0x4, scoped, tag = 'scoped memory for decoder.11']
    %16 = vsyncpa [#allocation4], 0
    %17 = vsyncpa [#allocation6], 0
    loop: start=0, step=1, limit=4
    $region2: #{decoder.11} parent=1 // loop_pre_header
      _
    $region3: #{decoder.11} parent=1 // loop_header
      %s19 = sphi 0, %s23
      %p20 = scmp.ge.s32.totalorder %s19, 4
      %s26 = sphi 0, %s38
      %s27 = sphi 0, %s34
      %s28 = sphi 0, %s26
      %s29 = sphi 0, %s27
      %s30 = sphi 0, %s28
      %s31 = sphi 0, %s29
      %s43 = sphi 0, %s45
      %s46 = sphi 0, %s43
      %s47 = sphi 0, %s46
      %s63 = sphi 0, %s47
      %s69 = sphi 0, %s71
      %s72 = sphi 0, %s69
      %s73 = sphi 0, %s72
      %s89 = sphi 0, %s73
      %s97 = sphi 0, %s99
      %s100 = sphi 0, %s97
      %s101 = sphi 0, %s100
      %s117 = sphi 0, %s101
      %s121 = sphi 0, %s121
      %s123 = sphi 0, %s121
      %s124 = sphi 0, %s123
      %s138 = sphi 0, %s124
      %s142 = sphi 0, %s142
      %s144 = sphi 0, %s142
      %s145 = sphi 0, %s144
      %s159 = sphi 0, %s145
      %s163 = sphi 0, %s163
      %s165 = sphi 0, %s163
      %s166 = sphi 0, %s165
      %s180 = sphi 0, %s166
      %s184 = sphi 0, %s184
      %s186 = sphi 0, %s184
      %s187 = sphi 0, %s186
      %s201 = sphi 0, %s187
      %s205 = sphi 0, %s205
      %s207 = sphi 0, %s205
      %s208 = sphi 0, %s207
      %s222 = sphi 0, %s208
      %s226 = sphi 0, %s226
      %s228 = sphi 0, %s226
      %s229 = sphi 0, %s228
      %s243 = sphi 0, %s229
      %s247 = sphi 0, %s247
      %s249 = sphi 0, %s247
      %s250 = sphi 0, %s249
      %s264 = sphi 0, %s250
      %s268 = sphi 0, %s268
      %s270 = sphi 0, %s268
      %s271 = sphi 0, %s270
      %s285 = sphi 0, %s271
      %s293 = sphi 0, %s295
      %s296 = sphi 0, %s293
      %s297 = sphi 0, %s296
      %s313 = sphi 0, %s297
    $region4: #{decoder.11} parent=1 // loop_header_branch
      %22 = sbr.rel (%p20) target = $region8
    $region5: #{decoder.11} parent=1 // loop_body
      %s24 = ssub.s32 %s19, 1
      %s25 = ssub.s32 %s19, 2
      %s32 = sadd.s32 1, %s27
      %p33 = scmp.ge.s32.totalorder %s32, 1
      %s34 = scalar_select %p33, 0, %s32
      %s35 = sadd.s32 1, %s26
      %s36 = scalar_select %p33, %s35, %s26
      %p37 = scmp.ge.s32.totalorder %s36, 2
      %s38 = scalar_select %p37, 0, %s36
      %s39 = ssub.s32 %s26, %s38
      %s40 = ssub.s32 %s27, %s34
      %s41 = sor.u32 %s39, %s40
      %p42 = scmp.eq.s32.totalorder %s41, 0
      %s44 = sadd.s32 %s43, 1
      %s45 = scalar_select %p42, %s43, %s44
      %p48 = pneg %p42
      %p49 = scmp.eq.s32.totalorder %s19, 1
      %p50 = por %p48, %p49
      %p51 = scmp.ne.s32.totalorder %s43, %s46
      %p52 = scmp.eq.s32.totalorder %s19, 0
      %p53 = por %p51, %p52
      %p54 = scmp.ne.s32.totalorder %s43, %s46
      %p55 = scmp.eq.s32.totalorder %s24, 1
      %p56 = por %p54, %p55
      %p57 = scmp.ne.s32.totalorder %s46, %s47
      %p58 = scmp.eq.s32.totalorder %s24, 0
      %p59 = por %p57, %p58
      %p60 = scmp.ne.s32.totalorder %s46, %s47
      %p61 = scmp.eq.s32.totalorder %s25, 1
      %p62 = por %p60, %p61
      %p64 = scmp.ne.s32.totalorder %s47, %s63
      %p65 = scmp.eq.s32.totalorder %s25, 0
      %p66 = por %p64, %p65
      %s67 = ssub.s32 %s26, %s38
      %p68 = scmp.eq.s32.totalorder %s67, 0
      %s70 = sadd.s32 %s69, 1
      %s71 = scalar_select %p68, %s69, %s70
      %p74 = pneg %p68
      %p75 = scmp.eq.s32.totalorder %s19, 1
      %p76 = por %p74, %p75
      %p77 = scmp.ne.s32.totalorder %s69, %s72
      %p78 = scmp.eq.s32.totalorder %s19, 0
      %p79 = por %p77, %p78
      %p80 = scmp.ne.s32.totalorder %s69, %s72
      %p81 = scmp.eq.s32.totalorder %s24, 1
      %p82 = por %p80, %p81
      %p83 = scmp.ne.s32.totalorder %s72, %s73
      %p84 = scmp.eq.s32.totalorder %s24, 0
      %p85 = por %p83, %p84
      %p86 = scmp.ne.s32.totalorder %s72, %s73
      %p87 = scmp.eq.s32.totalorder %s25, 1
      %p88 = por %p86, %p87
      %p90 = scmp.ne.s32.totalorder %s73, %s89
      %p91 = scmp.eq.s32.totalorder %s25, 0
      %p92 = por %p90, %p91
      %s93 = ssub.s32 %s26, %s38
      %s94 = ssub.s32 %s27, %s34
      %s95 = sor.u32 %s93, %s94
      %p96 = scmp.eq.s32.totalorder %s95, 0
      %s98 = sadd.s32 %s97, 1
      %s99 = scalar_select %p96, %s97, %s98
      %p102 = pneg %p96
      %p103 = scmp.eq.s32.totalorder %s19, 1
      %p104 = por %p102, %p103
      %p105 = scmp.ne.s32.totalorder %s97, %s100
      %p106 = scmp.eq.s32.totalorder %s19, 0
      %p107 = por %p105, %p106
      %p108 = scmp.ne.s32.totalorder %s97, %s100
      %p109 = scmp.eq.s32.totalorder %s24, 1
      %p110 = por %p108, %p109
      %p111 = scmp.ne.s32.totalorder %s100, %s101
      %p112 = scmp.eq.s32.totalorder %s24, 0
      %p113 = por %p111, %p112
      %p114 = scmp.ne.s32.totalorder %s100, %s101
      %p115 = scmp.eq.s32.totalorder %s25, 1
      %p116 = por %p114, %p115
      %p118 = scmp.ne.s32.totalorder %s101, %s117
      %p119 = scmp.eq.s32.totalorder %s25, 0
      %p120 = por %p118, %p119
      %s122 = sadd.s32 %s121, 1
      %p125 = scmp.eq.s32.totalorder %s19, 1
      %p126 = scmp.ne.s32.totalorder %s121, %s123
      %p127 = scmp.eq.s32.totalorder %s19, 0
      %p128 = por %p126, %p127
      %p129 = scmp.ne.s32.totalorder %s121, %s123
      %p130 = scmp.eq.s32.totalorder %s24, 1
      %p131 = por %p129, %p130
      %p132 = scmp.ne.s32.totalorder %s123, %s124
      %p133 = scmp.eq.s32.totalorder %s24, 0
      %p134 = por %p132, %p133
      %p135 = scmp.ne.s32.totalorder %s123, %s124
      %p136 = scmp.eq.s32.totalorder %s25, 1
      %p137 = por %p135, %p136
      %p139 = scmp.ne.s32.totalorder %s124, %s138
      %p140 = scmp.eq.s32.totalorder %s25, 0
      %p141 = por %p139, %p140
      %s143 = sadd.s32 %s142, 1
      %p146 = scmp.eq.s32.totalorder %s19, 1
      %p147 = scmp.ne.s32.totalorder %s142, %s144
      %p148 = scmp.eq.s32.totalorder %s19, 0
      %p149 = por %p147, %p148
      %p150 = scmp.ne.s32.totalorder %s142, %s144
      %p151 = scmp.eq.s32.totalorder %s24, 1
      %p152 = por %p150, %p151
      %p153 = scmp.ne.s32.totalorder %s144, %s145
      %p154 = scmp.eq.s32.totalorder %s24, 0
      %p155 = por %p153, %p154
      %p156 = scmp.ne.s32.totalorder %s144, %s145
      %p157 = scmp.eq.s32.totalorder %s25, 1
      %p158 = por %p156, %p157
      %p160 = scmp.ne.s32.totalorder %s145, %s159
      %p161 = scmp.eq.s32.totalorder %s25, 0
      %p162 = por %p160, %p161
      %s164 = sadd.s32 %s163, 1
      %p167 = scmp.eq.s32.totalorder %s19, 1
      %p168 = scmp.ne.s32.totalorder %s163, %s165
      %p169 = scmp.eq.s32.totalorder %s19, 0
      %p170 = por %p168, %p169
      %p171 = scmp.ne.s32.totalorder %s163, %s165
      %p172 = scmp.eq.s32.totalorder %s24, 1
      %p173 = por %p171, %p172
      %p174 = scmp.ne.s32.totalorder %s165, %s166
      %p175 = scmp.eq.s32.totalorder %s24, 0
      %p176 = por %p174, %p175
      %p177 = scmp.ne.s32.totalorder %s165, %s166
      %p178 = scmp.eq.s32.totalorder %s25, 1
      %p179 = por %p177, %p178
      %p181 = scmp.ne.s32.totalorder %s166, %s180
      %p182 = scmp.eq.s32.totalorder %s25, 0
      %p183 = por %p181, %p182
      %s185 = sadd.s32 %s184, 1
      %p188 = scmp.eq.s32.totalorder %s19, 1
      %p189 = scmp.ne.s32.totalorder %s184, %s186
      %p190 = scmp.eq.s32.totalorder %s19, 0
      %p191 = por %p189, %p190
      %p192 = scmp.ne.s32.totalorder %s184, %s186
      %p193 = scmp.eq.s32.totalorder %s24, 1
      %p194 = por %p192, %p193
      %p195 = scmp.ne.s32.totalorder %s186, %s187
      %p196 = scmp.eq.s32.totalorder %s24, 0
      %p197 = por %p195, %p196
      %p198 = scmp.ne.s32.totalorder %s186, %s187
      %p199 = scmp.eq.s32.totalorder %s25, 1
      %p200 = por %p198, %p199
      %p202 = scmp.ne.s32.totalorder %s187, %s201
      %p203 = scmp.eq.s32.totalorder %s25, 0
      %p204 = por %p202, %p203
      %s206 = sadd.s32 %s205, 1
      %p209 = scmp.eq.s32.totalorder %s19, 1
      %p210 = scmp.ne.s32.totalorder %s205, %s207
      %p211 = scmp.eq.s32.totalorder %s19, 0
      %p212 = por %p210, %p211
      %p213 = scmp.ne.s32.totalorder %s205, %s207
      %p214 = scmp.eq.s32.totalorder %s24, 1
      %p215 = por %p213, %p214
      %p216 = scmp.ne.s32.totalorder %s207, %s208
      %p217 = scmp.eq.s32.totalorder %s24, 0
      %p218 = por %p216, %p217
      %p219 = scmp.ne.s32.totalorder %s207, %s208
      %p220 = scmp.eq.s32.totalorder %s25, 1
      %p221 = por %p219, %p220
      %p223 = scmp.ne.s32.totalorder %s208, %s222
      %p224 = scmp.eq.s32.totalorder %s25, 0
      %p225 = por %p223, %p224
      %s227 = sadd.s32 %s226, 1
      %p230 = scmp.eq.s32.totalorder %s19, 1
      %p231 = scmp.ne.s32.totalorder %s226, %s228
      %p232 = scmp.eq.s32.totalorder %s19, 0
      %p233 = por %p231, %p232
      %p234 = scmp.ne.s32.totalorder %s226, %s228
      %p235 = scmp.eq.s32.totalorder %s24, 1
      %p236 = por %p234, %p235
      %p237 = scmp.ne.s32.totalorder %s228, %s229
      %p238 = scmp.eq.s32.totalorder %s24, 0
      %p239 = por %p237, %p238
      %p240 = scmp.ne.s32.totalorder %s228, %s229
      %p241 = scmp.eq.s32.totalorder %s25, 1
      %p242 = por %p240, %p241
      %p244 = scmp.ne.s32.totalorder %s229, %s243
      %p245 = scmp.eq.s32.totalorder %s25, 0
      %p246 = por %p244, %p245
      %s248 = sadd.s32 %s247, 1
      %p251 = scmp.eq.s32.totalorder %s19, 1
      %p252 = scmp.ne.s32.totalorder %s247, %s249
      %p253 = scmp.eq.s32.totalorder %s19, 0
      %p254 = por %p252, %p253
      %p255 = scmp.ne.s32.totalorder %s247, %s249
      %p256 = scmp.eq.s32.totalorder %s24, 1
      %p257 = por %p255, %p256
      %p258 = scmp.ne.s32.totalorder %s249, %s250
      %p259 = scmp.eq.s32.totalorder %s24, 0
      %p260 = por %p258, %p259
      %p261 = scmp.ne.s32.totalorder %s249, %s250
      %p262 = scmp.eq.s32.totalorder %s25, 1
      %p263 = por %p261, %p262
      %p265 = scmp.ne.s32.totalorder %s250, %s264
      %p266 = scmp.eq.s32.totalorder %s25, 0
      %p267 = por %p265, %p266
      %s269 = sadd.s32 %s268, 1
      %p272 = scmp.eq.s32.totalorder %s19, 1
      %p273 = scmp.ne.s32.totalorder %s268, %s270
      %p274 = scmp.eq.s32.totalorder %s19, 0
      %p275 = por %p273, %p274
      %p276 = scmp.ne.s32.totalorder %s268, %s270
      %p277 = scmp.eq.s32.totalorder %s24, 1
      %p278 = por %p276, %p277
      %p279 = scmp.ne.s32.totalorder %s270, %s271
      %p280 = scmp.eq.s32.totalorder %s24, 0
      %p281 = por %p279, %p280
      %p282 = scmp.ne.s32.totalorder %s270, %s271
      %p283 = scmp.eq.s32.totalorder %s25, 1
      %p284 = por %p282, %p283
      %p286 = scmp.ne.s32.totalorder %s271, %s285
      %p287 = scmp.eq.s32.totalorder %s25, 0
      %p288 = por %p286, %p287
      %s289 = ssub.s32 %s26, %s38
      %s290 = ssub.s32 %s27, %s34
      %s291 = sor.u32 %s289, %s290
      %p292 = scmp.eq.s32.totalorder %s291, 0
      %s294 = sadd.s32 %s293, 1
      %s295 = scalar_select %p292, %s293, %s294
      %p298 = pneg %p292
      %p299 = scmp.eq.s32.totalorder %s19, 1
      %p300 = por %p298, %p299
      %p301 = scmp.ne.s32.totalorder %s293, %s296
      %p302 = scmp.eq.s32.totalorder %s19, 0
      %p303 = por %p301, %p302
      %p304 = scmp.ne.s32.totalorder %s293, %s296
      %p305 = scmp.eq.s32.totalorder %s24, 1
      %p306 = por %p304, %p305
      %p307 = scmp.ne.s32.totalorder %s296, %s297
      %p308 = scmp.eq.s32.totalorder %s24, 0
      %p309 = por %p307, %p308
      %p310 = scmp.ne.s32.totalorder %s296, %s297
      %p311 = scmp.eq.s32.totalorder %s25, 1
      %p312 = por %p310, %p311
      %p314 = scmp.ne.s32.totalorder %s297, %s313
      %p315 = scmp.eq.s32.totalorder %s25, 0
      %p316 = por %p314, %p315
      %p317 = scmp.le.s32.totalorder 1, %s19
      %p318 = scmp.lt.s32.totalorder %s19, 3
      %p319 = pnand %p317, %p318
      %p320 = pneg %p319
      // Predicated region
      $region9: #{decoder.11} parent=5 // pred_check
        _
      $region10: #{decoder.11} parent=5 // pred_check_branch
        %322 = sbr.rel (%p319) target = $region12
      $region11: #{decoder.11} parent=5 // pred_region
        %s323 = ssub.s32 %s19, 1
        // Predicated region
        $region13: #{decoder.11} parent=11 // pred_check
          %p324 = pneg %p134
        $region14: #{decoder.11} parent=11 // pred_check_branch
          %326 = sbr.rel (%p324) target = $region16
        $region15: #{decoder.11} parent=11 // pred_region
          _
        $region16: #{decoder.11} parent=11 // pred_fallthru
          _
        // Predicated region
        $region17: #{decoder.11} parent=11 // pred_check
          %p327 = pneg %p155
        $region18: #{decoder.11} parent=11 // pred_check_branch
          %329 = sbr.rel (%p327) target = $region20
        $region19: #{decoder.11} parent=11 // pred_region
          _
        $region20: #{decoder.11} parent=11 // pred_fallthru
          _
        // Predicated region
        $region21: #{decoder.11} parent=11 // pred_check
          %p330 = pneg %p176
        $region22: #{decoder.11} parent=11 // pred_check_branch
          %332 = sbr.rel (%p330) target = $region24
        $region23: #{decoder.11} parent=11 // pred_region
          _
        $region24: #{decoder.11} parent=11 // pred_fallthru
          _
        // Predicated region
        $region25: #{decoder.11} parent=11 // pred_check
          %p333 = pneg %p197
        $region26: #{decoder.11} parent=11 // pred_check_branch
          %335 = sbr.rel (%p333) target = $region28
        $region27: #{decoder.11} parent=11 // pred_region
          _
        $region28: #{decoder.11} parent=11 // pred_fallthru
          _
        // Predicated region
        $region29: #{decoder.11} parent=11 // pred_check
          %p336 = pneg %p218
        $region30: #{decoder.11} parent=11 // pred_check_branch
          %338 = sbr.rel (%p336) target = $region32
        $region31: #{decoder.11} parent=11 // pred_region
          _
        $region32: #{decoder.11} parent=11 // pred_fallthru
          _
        // Predicated region
        $region33: #{decoder.11} parent=11 // pred_check
          %p339 = pneg %p239
        $region34: #{decoder.11} parent=11 // pred_check_branch
          %341 = sbr.rel (%p339) target = $region36
        $region35: #{decoder.11} parent=11 // pred_region
          %343 = vsyncadd [#allocation4], 0
          %s345 = sshll.u32 %s8, 4
          %s346 = int_to_ptr.hbm [resolvable:$true] %s345
          %s347 = sshll.u32 [#allocation3], 4
          %s348 = int_to_ptr.vmem [resolvable:$true] %s347
          %350 = dma.hbm_to_vmem [thread:$0]  %s346, 16, %s348, [#allocation4]
        $region36: #{decoder.11} parent=11 // pred_fallthru
          _
        // Predicated region
        $region37: #{decoder.11} parent=11 // pred_check
          %p351 = pneg %p260
        $region38: #{decoder.11} parent=11 // pred_check_branch
          %353 = sbr.rel (%p351) target = $region40
        $region39: #{decoder.11} parent=11 // pred_region
          _
        $region40: #{decoder.11} parent=11 // pred_fallthru
          _
        // Predicated region
        $region41: #{decoder.11} parent=11 // pred_check
          %p354 = pneg %p281
        $region42: #{decoder.11} parent=11 // pred_check_branch
          %356 = sbr.rel (%p354) target = $region44
        $region43: #{decoder.11} parent=11 // pred_region
          %358 = vsyncadd [#allocation6], 0
          %s360 = sshll.u32 %s10, 4
          %s361 = int_to_ptr.hbm [resolvable:$true] %s360
          %s362 = sshll.u32 [#allocation5], 4
          %s363 = int_to_ptr.vmem [resolvable:$true] %s362
          %365 = dma.hbm_to_vmem [thread:$0]  %s361, 16, %s363, [#allocation6]
        $region44: #{decoder.11} parent=11 // pred_fallthru
          _
      $region12: #{decoder.11} parent=5 // pred_fallthru
        _
      %p366 = scmp.lt.s32.totalorder %s19, 2
      // Predicated region
      $region45: #{decoder.11} parent=5 // pred_check
        %p367 = pneg %p366
      $region46: #{decoder.11} parent=5 // pred_check_branch
        %369 = sbr.rel (%p367) target = $region48
      $region47: #{decoder.11} parent=5 // pred_region
        // Predicated region
        $region49: #{decoder.11} parent=47 // pred_check
          %p370 = pneg %p53
        $region50: #{decoder.11} parent=47 // pred_check_branch
          %372 = sbr.rel (%p370) target = $region52
        $region51: #{decoder.11} parent=47 // pred_region
          %p373 = scmp.lt.s32.totalorder %s26, 1
          %s374 = scalar_select %p373, %s26, 1
          %p375 = scmp.lt.s32.totalorder %s27, 0
          %s376 = scalar_select %p375, %s27, 0
          %s377 = sadd.s32 %s376, %s374
          %s378 = smul.addr %s377, 8
          %s379 = scalar_lea.vmem %s0, %s378
        $region52: #{decoder.11} parent=47 // pred_fallthru
          _
        // Predicated region
        $region53: #{decoder.11} parent=47 // pred_check
          %p380 = pneg %p79
        $region54: #{decoder.11} parent=47 // pred_check_branch
          %382 = sbr.rel (%p380) target = $region56
        $region55: #{decoder.11} parent=47 // pred_region
          %p383 = scmp.lt.s32.totalorder %s26, 1
          %s384 = scalar_select %p383, %s26, 1
          %s385 = smul.addr %s384, 8
          %s386 = scalar_lea.vmem %s1, %s385
        $region56: #{decoder.11} parent=47 // pred_fallthru
          _
        // Predicated region
        $region57: #{decoder.11} parent=47 // pred_check
          %p387 = pneg %p107
        $region58: #{decoder.11} parent=47 // pred_check_branch
          %389 = sbr.rel (%p387) target = $region60
        $region59: #{decoder.11} parent=47 // pred_region
          %p390 = scmp.lt.s32.totalorder %s26, 1
          %s391 = scalar_select %p390, %s26, 1
          %p392 = scmp.lt.s32.totalorder %s27, 0
          %s393 = scalar_select %p392, %s27, 0
          %s394 = sadd.s32 %s393, %s391
          %s395 = smul.addr %s394, 8
          %s396 = scalar_lea.vmem %s2, %s395
        $region60: #{decoder.11} parent=47 // pred_fallthru
          _
      $region48: #{decoder.11} parent=5 // pred_fallthru
        _
      %p397 = scmp.le.s32.totalorder 1, %s19
      %p398 = scmp.lt.s32.totalorder %s19, 3
      %p399 = pnand %p397, %p398
      %p400 = pneg %p399
      // Predicated region
      $region61: #{decoder.11} parent=5 // pred_check
        _
      $region62: #{decoder.11} parent=5 // pred_check_branch
        %402 = sbr.rel (%p399) target = $region64
      $region63: #{decoder.11} parent=5 // pred_region
        %s403 = ssub.s32 %s19, 1
        // Predicated region
        $region65: #{decoder.11} parent=63 // pred_check
          %p404 = pneg %p239
        $region66: #{decoder.11} parent=63 // pred_check_branch
          %406 = sbr.rel (%p404) target = $region68
        $region67: #{decoder.11} parent=63 // pred_region
          %408 = dma.done [#allocation4], 16
        $region68: #{decoder.11} parent=63 // pred_fallthru
          _
        // Predicated region
        $region69: #{decoder.11} parent=63 // pred_check
          %p409 = pneg %p281
        $region70: #{decoder.11} parent=63 // pred_check_branch
          %411 = sbr.rel (%p409) target = $region72
        $region71: #{decoder.11} parent=63 // pred_region
          %413 = dma.done [#allocation6], 16
        $region72: #{decoder.11} parent=63 // pred_fallthru
          _
        %p414 = scmp.lt.s32.totalorder %s28, 1
        %s415 = scalar_select %p414, %s28, 1
        %p416 = scmp.lt.s32.totalorder %s29, 0
        %s417 = scalar_select %p416, %s29, 0
        %s418 = sadd.s32 %s417, %s415
        %s419 = smul.addr %s418, 8
        %s420 = scalar_lea.vmem %s0, %s419
        %p421 = pneg %p59
        %p422 = pneg %p56
        %p423 = scmp.lt.s32.totalorder %s28, 1
        %s424 = scalar_select %p423, %s28, 1
        %s425 = smul.addr %s424, 8
        %s426 = scalar_lea.vmem %s1, %s425
        %p427 = pneg %p85
        %p428 = pneg %p82
        %p429 = scmp.lt.s32.totalorder %s28, 1
        %s430 = scalar_select %p429, %s28, 1
        %p431 = scmp.lt.s32.totalorder %s29, 0
        %s432 = scalar_select %p431, %s29, 0
        %s433 = sadd.s32 %s432, %s430
        %s434 = smul.addr %s433, 8
        %s435 = scalar_lea.vmem %s2, %s434
        %p436 = pneg %p113
        %p437 = pneg %p110
        %p438 = pneg %p134
        %p439 = pneg %p131
        %p440 = pneg %p155
        %p441 = pneg %p152
        %p442 = pneg %p176
        %p443 = pneg %p173
        %p444 = pneg %p197
        %p445 = pneg %p194
        %p446 = pneg %p218
        %p447 = pneg %p215
        %p448 = pneg %p239
        %p449 = pneg %p236
        %p450 = pneg %p260
        %p451 = pneg %p257
        %p452 = pneg %p281
        %p453 = pneg %p278
        %p454 = pneg %p309
        %p455 = pneg %p306
        %p456 = scmp.lt.s32.totalorder %s28, 1
        %s457 = scalar_select %p456, %s28, 1
        %p458 = scmp.lt.s32.totalorder %s29, 0
        %s459 = scalar_select %p458, %s29, 0
        %s460 = sadd.s32 %s459, %s457
        %s461 = smul.addr %s460, 8
        %s462 = scalar_lea.vmem %s11, %s461
        %p463 = scmp.lt.s32.totalorder %s28, 1
        %s464 = scalar_select %p463, %s28, 1
        %p465 = scmp.lt.s32.totalorder %s29, 0
        %s466 = scalar_select %p465, %s29, 0
        %s467 = sadd.s32 %s466, %s464
        %s468 = smul.addr %s467, 8
        %s469 = scalar_lea.vmem %s0, %s468
        %p470 = scmp.lt.s32.totalorder %s28, 1
        %s471 = scalar_select %p470, %s28, 1
        %s472 = smul.addr %s471, 8
        %s473 = scalar_lea.vmem %s1, %s472
        %p474 = scmp.lt.s32.totalorder %s28, 1
        %s475 = scalar_select %p474, %s28, 1
        %p476 = scmp.lt.s32.totalorder %s29, 0
        %s477 = scalar_select %p476, %s29, 0
        %s478 = sadd.s32 %s477, %s475
        %s479 = smul.addr %s478, 8
        %s480 = scalar_lea.vmem %s2, %s479
        %p481 = scmp.lt.s32.totalorder %s28, 1
        %s482 = scalar_select %p481, %s28, 1
        %p483 = scmp.lt.s32.totalorder %s29, 0
        %s484 = scalar_select %p483, %s29, 0
        %s485 = sadd.s32 %s484, %s482
        %s486 = smul.addr %s485, 8
        %s487 = scalar_lea.vmem %s11, %s486
        %v489 = vld [vmem:[%s469] sm:$0xff]
        %v490 = vld [vmem:[%s3] sm:$0x1]
        %v491 = vld [vmem:[%s4] sm:$0x1]
        %vm492 = vcmask 261120
        %v493 = vsel %vm492, %v489, 0.0
        %494 = vadd.xlane.f32.xlu0 %v493
        %v495 = vpop.xlane.xlu0 %494
        %v496 = vrcp.pop 32.0
        %v497 = vmul.f32 32.0, %v496
        %v498 = vsub.f32 1.0, %v497
        %v499 = vmul.f32 %v496, %v498
        %v500 = vadd.f32 %v496, %v499
        %vm501 = vweird.f32 %v496
        %v502 = vsel %vm501, %v496, %v500
        %v503 = vmul.f32 %v495, %v502
        %v504 = vsub.f32 %v489, %v503
        %v505 = vmul.f32 %v504, %v504
        %v506 = vsel %vm492, %v505, 0.0
        %507 = vadd.xlane.f32.xlu0 %v506
        %v508 = vpop.xlane.xlu0 %507
        %v509 = vrcp.pop 31.0
        %v510 = vmul.f32 31.0, %v509
        %v511 = vsub.f32 1.0, %v510
        %v512 = vmul.f32 %v509, %v511
        %v513 = vadd.f32 %v509, %v512
        %vm514 = vweird.f32 %v509
        %v515 = vsel %vm514, %v509, %v513
        %v516 = vmul.f32 %v508, %v515
        %v518 = vperm.slane %v490, 0
        %v520 = vmul.f32 %v518, %v504
        %v521 = vrsqrt.pop %v516
        %v522 = vmul.f32 %v521, %v516
        %v523 = vmul.f32 %v522, %v521
        %v524 = vmul.f32 0.5, %v523
        %v525 = vsub.f32 1.5, %v524
        %v526 = vmul.f32 %v521, %v525
        %v527 = vmul.f32 %v516, %v526
        %vm528 = vcmp.eq.f32.partialorder %v516, inf
        %v529 = vsel %vm528, %v516, %v527
        %vm530 = vcmp.eq.f32.partialorder %v516, 0.0
        %v531 = vand.u32 %v516, 2147483648
        %v532 = vsel %vm530, %v531, %v529
        %v533 = vadd.f32 %v532, 1e-06
        %v534 = vrcp.pop %v533
        %v535 = vmul.f32 %v533, %v534
        %v536 = vsub.f32 1.0, %v535
        %v537 = vmul.f32 %v534, %v536
        %v538 = vadd.f32 %v534, %v537
        %vm539 = vweird.f32 %v533
        %vm540 = vweird.f32 %v534
        %vm541 = vmor %vm539, %vm540
        %v542 = vsel %vm541, %v534, %v538
        %v543 = vand.u32 2147483647, %v533
        %vm544 = vcmp.eq.f32.partialorder %v543, 8.507059e+37
        %v545 = vand.u32 %v533, 2147483648
        %v546 = vor.u32 1.1754944e-38, %v545
        %v547 = vsel %vm544, %v546, %v542
        %v548 = vmul.f32 %v520, %v547
        %v550 = vperm.slane %v491, 0
        %v552 = vadd.f32 %v548, %v550
        %v553 = vld [vmem:[%s473] sm:$0xff]
        %v554 = vpack.c.bf16 %v552, %v552
        %v555 = vld [vmem:[%s5] sm:$0xf]
        %v556 = vld [vmem:[%s5 + $0x4] sm:$0xf]
        %v557 = vld [vmem:[%s5 + $0x8] sm:$0xf]
        %v558 = vld [vmem:[%s5 + $0xc] sm:$0xf]
        %v559 = vld [vmem:[%s6] sm:$0x1]
        %v561 = vperm.slane %v559, 0
        %v567 = vunpack.c.l.b16 %v555
        %v568 = vunpack.c.l.b16 %v556
        %v569 = vunpack.c.l.b16 %v557
        %v570 = vunpack.c.l.b16 %v558
        %v571 = vpack.c.b16 %v568, %v567
        %v572 = vpack.c.b16 %v570, %v569
        %v576 = vsel %vm492, %v554, 0
        %578 = vmatpush.bf16.msra.mxu0 0
        %579 = vmatpush.bf16.msra.mxu0 0
        %580 = vmatpush.bf16.msra.mxu0 0
        %581 = vmatpush.bf16.msra.mxu0 0
        %582 = vmatpush.bf16.msra.mxu0 0
        %583 = vmatpush.bf16.msra.mxu0 0
        %584 = vmatpush.bf16.msra.mxu0 %v572
        %585 = vmatpush.bf16.msra.mxu0 %v571
        %586 = vmatmul.bf16.gmra.mxu0 %v576
        %v587 = vpop.f32.mrf.mxu0
        %v588 = vadd.f32 %v561, %v587
        %v589 = vpop.f32.mrf.mxu0
        %590 = vdwg.mxu0
        %v591 = vmul.f32 %v588, 0.35355338
        %v592 = vpack.c.bf16 %v553, %v553
        %v593 = vld [vmem:[%s7] sm:$0xf]
        %v594 = vld [vmem:[%s7 + $0x4] sm:$0xf]
        %v595 = vld [vmem:[%s7 + $0x8] sm:$0xf]
        %v596 = vld [vmem:[%s7 + $0xc] sm:$0xf]
        %v597 = vld [vmem:[#allocation3] sm:$0x1]
        %v599 = vperm.slane %v597, 0
        %v605 = vunpack.c.l.b16 %v593
        %v606 = vunpack.c.l.b16 %v594
        %v607 = vunpack.c.l.b16 %v595
        %v608 = vunpack.c.l.b16 %v596
        %v609 = vpack.c.b16 %v606, %v605
        %v610 = vpack.c.b16 %v608, %v607
        %v614 = vsel %vm492, %v592, 0
        %616 = vmatpush.bf16.msra.mxu0 0
        %617 = vmatpush.bf16.msra.mxu0 0
        %618 = vmatpush.bf16.msra.mxu0 0
        %619 = vmatpush.bf16.msra.mxu0 0
        %620 = vmatpush.bf16.msra.mxu0 0
        %621 = vmatpush.bf16.msra.mxu0 0
        %622 = vmatpush.bf16.msra.mxu0 %v610
        %623 = vmatpush.bf16.msra.mxu0 %v609
        %624 = vmatmul.bf16.gmra.mxu0 %v614
        %v625 = vpop.f32.mrf.mxu0
        %v626 = vadd.f32 %v599, %v625
        %v627 = vpop.f32.mrf.mxu0
        %628 = vdwg.mxu0
        %v629 = vpack.c.bf16 %v591, %v591
        %v630 = vpack.c.bf16 %v626, %v626
        %v631 = vld [vmem:[%s480] sm:$0xff]
        %vm632 = vcmask 64512
        %v634 = vsel %vm632, %v629, 0
        %v637 = vsel %vm632, %v630, 0
        %639 = vmatpush.bf16.xpose.msra.mxu0 0
        %640 = vmatpush.bf16.xpose.msra.mxu0 0
        %641 = vmatpush.bf16.xpose.msra.mxu0 0
        %642 = vmatpush.bf16.xpose.msra.mxu0 0
        %643 = vmatpush.bf16.xpose.msra.mxu0 0
        %644 = vmatpush.bf16.xpose.msra.mxu0 0
        %645 = vmatpush.bf16.xpose.msra.mxu0 0
        %646 = vmatpush.bf16.xpose.msra.mxu0 %v637
        %647 = vmatmul.bf16.gmra.mxu0 %v634
        %v648 = vpop.f32.mrf.mxu0
        %v649 = vadd.f32 %v631, %v648
        %v650 = vpop.f32.mrf.mxu0
        %651 = vdwg.mxu0
        %v652 = vsel %vm632, %v649, -inf
        %653 = vmax.xlane.f32.xlu0 %v652
        %v654 = vpop.xlane.xlu0 %653
        %v655 = vsub.f32 %v649, %v654
        %v656 = vmul.f32 %v655, 1.442695
        %v657 = vpow.pop %v656
        %v658 = vsel %vm632, %v657, 0.0
        %659 = vadd.xlane.f32.xlu0 %v658
        %v660 = vpop.xlane.xlu0 %659
        %v661 = vpack.c.bf16 %v657, %v657
        %v663 = vunpack.c.l.b16 %v630
        %v664 = vpack.c.b16 %v663, %v663
        %665 = vrot.lane.b32.xlu0 %v664, 96
        %v666 = vpop.permute.xlu0 %665
        %v668 = vsel %vm632, %v661, 0
        %vm670 = vcmask 1043456
        %v672 = vsel %vm670, %v666, 0
        %674 = vmatpush.bf16.msra.mxu0 0
        %675 = vmatpush.bf16.msra.mxu0 0
        %676 = vmatpush.bf16.msra.mxu0 0
        %677 = vmatpush.bf16.msra.mxu0 0
        %678 = vmatpush.bf16.msra.mxu0 0
        %679 = vmatpush.bf16.msra.mxu0 0
        %680 = vmatpush.bf16.msra.mxu0 0
        %681 = vmatpush.bf16.msra.mxu0 %v672
        %682 = vmatmul.bf16.gmra.mxu0 %v668
        %v683 = vpop.f32.mrf.mxu0
        %v684 = vadd.f32 0.0, %v683
        %v685 = vpop.f32.mrf.mxu0
        %686 = vdwg.mxu0
        %v687 = vrcp.pop %v660
        %v688 = vmul.f32 %v660, %v687
        %v689 = vsub.f32 1.0, %v688
        %v690 = vmul.f32 %v687, %v689
        %v691 = vadd.f32 %v687, %v690
        %vm692 = vweird.f32 %v660
        %vm693 = vweird.f32 %v687
        %vm694 = vmor %vm692, %vm693
        %v695 = vsel %vm694, %v687, %v691
        %v696 = vand.u32 2147483647, %v660
        %vm697 = vcmp.eq.f32.partialorder %v696, 8.507059e+37
        %v698 = vand.u32 %v660, 2147483648
        %v699 = vor.u32 1.1754944e-38, %v698
        %v700 = vsel %vm697, %v699, %v695
        %v701 = vmul.f32 %v684, %v700
        %v702 = vpack.c.bf16 %v701, %v701
        %vm703 = vcmask 60416
        %704 = vst.msk [vmem:[#allocation2] sm:$0xf] %vm703, %v702
        %v706 = vunpack.c.l.b16 %v629
        %v707 = vpack.c.b16 %v706, %v706
        %708 = vrot.lane.b32.xlu0 %v707, 120
        %v709 = vpop.permute.xlu0 %708
        %710 = vrot.lane.b32.xlu0 %v664, 120
        %v711 = vpop.permute.xlu0 %710
        %v713 = vsel %vm632, %v709, 0
        %v716 = vsel %vm632, %v711, 0
        %718 = vmatpush.bf16.xpose.msra.mxu0 0
        %719 = vmatpush.bf16.xpose.msra.mxu0 0
        %720 = vmatpush.bf16.xpose.msra.mxu0 0
        %721 = vmatpush.bf16.xpose.msra.mxu0 0
        %722 = vmatpush.bf16.xpose.msra.mxu0 0
        %723 = vmatpush.bf16.xpose.msra.mxu0 0
        %724 = vmatpush.bf16.xpose.msra.mxu0 0
        %725 = vmatpush.bf16.xpose.msra.mxu0 %v716
        %726 = vmatmul.bf16.gmra.mxu0 %v713
        %v727 = vpop.f32.mrf.mxu0
        %v728 = vadd.f32 %v631, %v727
        %v729 = vpop.f32.mrf.mxu0
        %730 = vdwg.mxu0
        %v731 = vsel %vm632, %v728, -inf
        %732 = vmax.xlane.f32.xlu0 %v731
        %v733 = vpop.xlane.xlu0 %732
        %v734 = vsub.f32 %v728, %v733
        %v735 = vmul.f32 %v734, 1.442695
        %v736 = vpow.pop %v735
        %v737 = vsel %vm632, %v736, 0.0
        %738 = vadd.xlane.f32.xlu0 %v737
        %v739 = vpop.xlane.xlu0 %738
        %v740 = vpack.c.bf16 %v736, %v736
        %741 = vrot.lane.b32.xlu0 %v664, 88
        %v742 = vpop.permute.xlu0 %741
        %v744 = vsel %vm632, %v740, 0
        %v747 = vsel %vm670, %v742, 0
        %749 = vmatpush.bf16.msra.mxu0 0
        %750 = vmatpush.bf16.msra.mxu0 0
        %751 = vmatpush.bf16.msra.mxu0 0
        %752 = vmatpush.bf16.msra.mxu0 0
        %753 = vmatpush.bf16.msra.mxu0 0
        %754 = vmatpush.bf16.msra.mxu0 0
        %755 = vmatpush.bf16.msra.mxu0 0
        %756 = vmatpush.bf16.msra.mxu0 %v747
        %757 = vmatmul.bf16.gmra.mxu0 %v744
        %v758 = vpop.f32.mrf.mxu0
        %v759 = vadd.f32 0.0, %v758
        %v760 = vpop.f32.mrf.mxu0
        %761 = vdwg.mxu0
        %v762 = vrcp.pop %v739
        %v763 = vmul.f32 %v739, %v762
        %v764 = vsub.f32 1.0, %v763
        %v765 = vmul.f32 %v762, %v764
        %v766 = vadd.f32 %v762, %v765
        %vm767 = vweird.f32 %v739
        %vm768 = vweird.f32 %v762
        %vm769 = vmor %vm767, %vm768
        %v770 = vsel %vm769, %v762, %v766
        %v771 = vand.u32 2147483647, %v739
        %vm772 = vcmp.eq.f32.partialorder %v771, 8.507059e+37
        %v773 = vand.u32 %v739, 2147483648
        %v774 = vor.u32 1.1754944e-38, %v773
        %v775 = vsel %vm772, %v774, %v770
        %v776 = vmul.f32 %v759, %v775
        %v777 = vpack.c.bf16 %v776, %v776
        %779 = vrot.lane.b32.xlu0 %v777, 8
        %v780 = vpop.permute.xlu0 %779
        %vm782 = vcmask 126016
        %783 = vst.msk [vmem:[#allocation2] sm:$0xf] %vm782, %v780
        %784 = vrot.lane.b32.xlu0 %v707, 112
        %v785 = vpop.permute.xlu0 %784
        %786 = vrot.lane.b32.xlu0 %v664, 112
        %v787 = vpop.permute.xlu0 %786
        %v789 = vsel %vm632, %v785, 0
        %v792 = vsel %vm632, %v787, 0
        %794 = vmatpush.bf16.xpose.msra.mxu0 0
        %795 = vmatpush.bf16.xpose.msra.mxu0 0
        %796 = vmatpush.bf16.xpose.msra.mxu0 0
        %797 = vmatpush.bf16.xpose.msra.mxu0 0
        %798 = vmatpush.bf16.xpose.msra.mxu0 0
        %799 = vmatpush.bf16.xpose.msra.mxu0 0
        %800 = vmatpush.bf16.xpose.msra.mxu0 0
        %801 = vmatpush.bf16.xpose.msra.mxu0 %v792
        %802 = vmatmul.bf16.gmra.mxu0 %v789
        %v803 = vpop.f32.mrf.mxu0
        %v804 = vadd.f32 %v631, %v803
        %v805 = vpop.f32.mrf.mxu0
        %806 = vdwg.mxu0
        %v807 = vsel %vm632, %v804, -inf
        %808 = vmax.xlane.f32.xlu0 %v807
        %v809 = vpop.xlane.xlu0 %808
        %v810 = vsub.f32 %v804, %v809
        %v811 = vmul.f32 %v810, 1.442695
        %v812 = vpow.pop %v811
        %v813 = vsel %vm632, %v812, 0.0
        %814 = vadd.xlane.f32.xlu0 %v813
        %v815 = vpop.xlane.xlu0 %814
        %v816 = vpack.c.bf16 %v812, %v812
        %817 = vrot.lane.b32.xlu0 %v664, 80
        %v818 = vpop.permute.xlu0 %817
        %v820 = vsel %vm632, %v816, 0
        %v823 = vsel %vm670, %v818, 0
        %825 = vmatpush.bf16.msra.mxu0 0
        %826 = vmatpush.bf16.msra.mxu0 0
        %827 = vmatpush.bf16.msra.mxu0 0
        %828 = vmatpush.bf16.msra.mxu0 0
        %829 = vmatpush.bf16.msra.mxu0 0
        %830 = vmatpush.bf16.msra.mxu0 0
        %831 = vmatpush.bf16.msra.mxu0 0
        %832 = vmatpush.bf16.msra.mxu0 %v823
        %833 = vmatmul.bf16.gmra.mxu0 %v820
        %v834 = vpop.f32.mrf.mxu0
        %v835 = vadd.f32 0.0, %v834
        %v836 = vpop.f32.mrf.mxu0
        %837 = vdwg.mxu0
        %v838 = vrcp.pop %v815
        %v839 = vmul.f32 %v815, %v838
        %v840 = vsub.f32 1.0, %v839
        %v841 = vmul.f32 %v838, %v840
        %v842 = vadd.f32 %v838, %v841
        %vm843 = vweird.f32 %v815
        %vm844 = vweird.f32 %v838
        %vm845 = vmor %vm843, %vm844
        %v846 = vsel %vm845, %v838, %v842
        %v847 = vand.u32 2147483647, %v815
        %vm848 = vcmp.eq.f32.partialorder %v847, 8.507059e+37
        %v849 = vand.u32 %v815, 2147483648
        %v850 = vor.u32 1.1754944e-38, %v849
        %v851 = vsel %vm848, %v850, %v846
        %v852 = vmul.f32 %v835, %v851
        %v853 = vpack.c.bf16 %v852, %v852
        %855 = vrot.lane.b32.xlu0 %v853, 16
        %v856 = vpop.permute.xlu0 %855
        %vm858 = vcmask 191616
        %859 = vst.msk [vmem:[#allocation2] sm:$0xf] %vm858, %v856
        %860 = vrot.lane.b32.xlu0 %v707, 104
        %v861 = vpop.permute.xlu0 %860
        %862 = vrot.lane.b32.xlu0 %v664, 104
        %v863 = vpop.permute.xlu0 %862
        %v865 = vsel %vm632, %v861, 0
        %v868 = vsel %vm632, %v863, 0
        %870 = vmatpush.bf16.xpose.msra.mxu0 0
        %871 = vmatpush.bf16.xpose.msra.mxu0 0
        %872 = vmatpush.bf16.xpose.msra.mxu0 0
        %873 = vmatpush.bf16.xpose.msra.mxu0 0
        %874 = vmatpush.bf16.xpose.msra.mxu0 0
        %875 = vmatpush.bf16.xpose.msra.mxu0 0
        %876 = vmatpush.bf16.xpose.msra.mxu0 0
        %877 = vmatpush.bf16.xpose.msra.mxu0 %v868
        %878 = vmatmul.bf16.gmra.mxu0 %v865
        %v879 = vpop.f32.mrf.mxu0
        %v880 = vadd.f32 %v631, %v879
        %v881 = vpop.f32.mrf.mxu0
        %882 = vdwg.mxu0
        %v883 = vsel %vm632, %v880, -inf
        %884 = vmax.xlane.f32.xlu0 %v883
        %v885 = vpop.xlane.xlu0 %884
        %v886 = vsub.f32 %v880, %v885
        %v887 = vmul.f32 %v886, 1.442695
        %v888 = vpow.pop %v887
        %v889 = vsel %vm632, %v888, 0.0
        %890 = vadd.xlane.f32.xlu0 %v889
        %v891 = vpop.xlane.xlu0 %890
        %v892 = vpack.c.bf16 %v888, %v888
        %893 = vrot.lane.b32.xlu0 %v664, 72
        %v894 = vpop.permute.xlu0 %893
        %v896 = vsel %vm632, %v892, 0
        %v899 = vsel %vm670, %v894, 0
        %901 = vmatpush.bf16.msra.mxu0 0
        %902 = vmatpush.bf16.msra.mxu0 0
        %903 = vmatpush.bf16.msra.mxu0 0
        %904 = vmatpush.bf16.msra.mxu0 0
        %905 = vmatpush.bf16.msra.mxu0 0
        %906 = vmatpush.bf16.msra.mxu0 0
        %907 = vmatpush.bf16.msra.mxu0 0
        %908 = vmatpush.bf16.msra.mxu0 %v899
        %909 = vmatmul.bf16.gmra.mxu0 %v896
        %v910 = vpop.f32.mrf.mxu0
        %v911 = vadd.f32 0.0, %v910
        %v912 = vpop.f32.mrf.mxu0
        %913 = vdwg.mxu0
        %v914 = vrcp.pop %v891
        %v915 = vmul.f32 %v891, %v914
        %v916 = vsub.f32 1.0, %v915
        %v917 = vmul.f32 %v914, %v916
        %v918 = vadd.f32 %v914, %v917
        %vm919 = vweird.f32 %v891
        %vm920 = vweird.f32 %v914
        %vm921 = vmor %vm919, %vm920
        %v922 = vsel %vm921, %v914, %v918
        %v923 = vand.u32 2147483647, %v891
        %vm924 = vcmp.eq.f32.partialorder %v923, 8.507059e+37
        %v925 = vand.u32 %v891, 2147483648
        %v926 = vor.u32 1.1754944e-38, %v925
        %v927 = vsel %vm924, %v926, %v922
        %v928 = vmul.f32 %v911, %v927
        %v929 = vpack.c.bf16 %v928, %v928
        %931 = vrot.lane.b32.xlu0 %v929, 24
        %v932 = vpop.permute.xlu0 %931
        %vm934 = vcmask 257216
        %935 = vst.msk [vmem:[#allocation2] sm:$0xf] %vm934, %v932
        %v936 = vld [vmem:[#allocation2] sm:$0xf]
        %v937 = vld [vmem:[%s9] sm:$0xf]
        %v938 = vld [vmem:[%s9 + $0x4] sm:$0xf]
        %v939 = vld [vmem:[%s9 + $0x8] sm:$0xf]
        %v940 = vld [vmem:[%s9 + $0xc] sm:$0xf]
        %v941 = vld [vmem:[#allocation5] sm:$0x1]
        %v943 = vperm.slane %v941, 0
        %v949 = vunpack.c.l.b16 %v937
        %v950 = vunpack.c.l.b16 %v938
        %v951 = vunpack.c.l.b16 %v939
        %v952 = vunpack.c.l.b16 %v940
        %v953 = vpack.c.b16 %v950, %v949
        %v954 = vpack.c.b16 %v952, %v951
        %v958 = vsel %vm492, %v936, 0
        %960 = vmatpush.bf16.msra.mxu0 0
        %961 = vmatpush.bf16.msra.mxu0 0
        %962 = vmatpush.bf16.msra.mxu0 0
        %963 = vmatpush.bf16.msra.mxu0 0
        %964 = vmatpush.bf16.msra.mxu0 0
        %965 = vmatpush.bf16.msra.mxu0 0
        %966 = vmatpush.bf16.msra.mxu0 %v954
        %967 = vmatpush.bf16.msra.mxu0 %v953
        %968 = vmatmul.bf16.gmra.mxu0 %v958
        %v969 = vpop.f32.mrf.mxu0
        %v970 = vadd.f32 %v943, %v969
        %v971 = vpop.f32.mrf.mxu0
        %972 = vdwg.mxu0
        %v973 = vadd.f32 %v489, %v970
        %974 = vst.msk [vmem:[%s487] sm:$0xff] %vm492, %v973
        %p975 = scmp.lt.s32.totalorder %s28, 1
        %s976 = scalar_select %p975, %s28, 1
        %p977 = scmp.lt.s32.totalorder %s29, 0
        %s978 = scalar_select %p977, %s29, 0
        %s979 = sadd.s32 %s978, %s976
        %s980 = smul.addr %s979, 8
        %s981 = scalar_lea.vmem %s11, %s980
        // Predicated region
        $region73: #{decoder.11} parent=63 // pred_check
          %p982 = pneg %p306
        $region74: #{decoder.11} parent=63 // pred_check_branch
          %984 = sbr.rel (%p982) target = $region76
        $region75: #{decoder.11} parent=63 // pred_region
          _
        $region76: #{decoder.11} parent=63 // pred_fallthru
          _
      $region64: #{decoder.11} parent=5 // pred_fallthru
        _
      %p985 = scmp.le.s32.totalorder 2, %s19
      // Predicated region
      $region77: #{decoder.11} parent=5 // pred_check
        %p986 = pneg %p985
      $region78: #{decoder.11} parent=5 // pred_check_branch
        %988 = sbr.rel (%p986) target = $region80
      $region79: #{decoder.11} parent=5 // pred_region
        %s989 = ssub.s32 %s19, 2
        // Predicated region
        $region81: #{decoder.11} parent=79 // pred_check
          %p990 = pneg %p312
        $region82: #{decoder.11} parent=79 // pred_check_branch
          %992 = sbr.rel (%p990) target = $region84
        $region83: #{decoder.11} parent=79 // pred_region
          %p993 = scmp.lt.s32.totalorder %s30, 1
          %s994 = scalar_select %p993, %s30, 1
          %p995 = scmp.lt.s32.totalorder %s31, 0
          %s996 = scalar_select %p995, %s31, 0
          %s997 = sadd.s32 %s996, %s994
          %s998 = smul.addr %s997, 8
          %s999 = scalar_lea.vmem %s11, %s998
        $region84: #{decoder.11} parent=79 // pred_fallthru
          _
      $region80: #{decoder.11} parent=5 // pred_fallthru
        _
    $region6: #{decoder.11} parent=1 // loop_footer
      %s23 = sadd.s32 1, %s19
    $region7: #{decoder.11} parent=1 // loop_footer_branch
      %18 = sbr.rel target = $region3
    $region8: #{decoder.11} parent=1 // loop_exit
      _
    %1000 = vsyncpa [#allocation4], 1
    %s1001 = scalar_lea.sflag [#allocation4], 1
    %1002 = vsyncpa %s1001, 1
    %1003 = vsyncpa [#allocation6], 1

</llo_original>
